<compile_context>
chip_gen: v7x
topology: tpu7x:2x2x1
jax: 0.10.0
libtpu: 0.0.40
codegen_flags: <defaults>
</compile_context>

<pallas_src>
import functools
import math

import jax
import jax.numpy as jnp
from jax.experimental import pallas as pl
from jax.experimental.pallas import tpu as pltpu


# ----------------------------------------------------------------------------
# Pallas kernel: full Transformer-encoder stack (grid = (nlayers,), sequential).
# ----------------------------------------------------------------------------
def _encoder_stack_kernel(
    emb_ref, pe_ref,
    wqkv_ref, bqkv_ref, wo_ref, bo_ref, ln1_g_ref, ln1_b_ref,
    w1_ref, b1_ref, w2_ref, b2_ref, ln2_g_ref, ln2_b_ref,
    out_ref,
    *, num_heads,
):
    B, S, D = out_ref.shape
    N = B * S
    DH = D // num_heads
    eps = 1e-5

    def layer_norm(v, g, b):
        mu = jnp.mean(v, axis=-1, keepdims=True)
        vc = v - mu
        var = jnp.mean(vc * vc, axis=-1, keepdims=True)
        return vc * jax.lax.rsqrt(var + eps) * g + b

    # Layer-0 prologue: embedding scale + positional encoding.
    # (SpatialDropout / PE dropout are identity in eval mode.)
    @pl.when(pl.program_id(0) == 0)
    def _():
        out_ref[...] = emb_ref[...] * jnp.float32(math.sqrt(D)) + pe_ref[...]

    x = out_ref[...].reshape(N, D)                                  # (N, D)

    # ---- self-attention block (PyTorch MultiheadAttention, post-LN) --------
    qkv = (jnp.dot(x, wqkv_ref[...], preferred_element_type=jnp.float32)
           + bqkv_ref[...])                                         # (N, 3D)

    scale = 1.0 / math.sqrt(DH)
    ctx_rows = []
    for b in range(B):                                              # static unroll
        r = b * S
        heads = []
        for h in range(num_heads):                                  # static unroll
            c = h * DH
            qh = qkv[r:r + S, c:c + DH] * scale                     # (S, DH)
            kh = qkv[r:r + S, D + c:D + c + DH]                     # (S, DH)
            vh = qkv[r:r + S, 2 * D + c:2 * D + c + DH]             # (S, DH)
            s = jax.lax.dot_general(                                # q @ k^T
                qh, kh, (((1,), (1,)), ((), ())),
                preferred_element_type=jnp.float32)                 # (S, S)
            s = s - jnp.max(s, axis=-1, keepdims=True)
            e = jnp.exp(s)
            p = e / jnp.sum(e, axis=-1, keepdims=True)
            heads.append(jnp.dot(p, vh, preferred_element_type=jnp.float32))
        ctx_rows.append(jnp.concatenate(heads, axis=-1))            # (S, D)
    ctx = jnp.concatenate(ctx_rows, axis=0)                         # (N, D)

    attn = (jnp.dot(ctx, wo_ref[...], preferred_element_type=jnp.float32)
            + bo_ref[...])
    x = layer_norm(x + attn, ln1_g_ref[...], ln1_b_ref[...])

    # ---- feed-forward block (ReLU) ------------------------------------------
    h1 = jnp.maximum(
        jnp.dot(x, w1_ref[...], preferred_element_type=jnp.float32)
        + b1_ref[...], 0.0)
    ff = jnp.dot(h1, w2_ref[...], preferred_element_type=jnp.float32) + b2_ref[...]
    x = layer_norm(x + ff, ln2_g_ref[...], ln2_b_ref[...])

    out_ref[...] = x.reshape(B, S, D)


def transformer_encoder_stack(emb_bsd, pe_1sd, stacked_params, *, num_heads):
    """emb_bsd: (B, S, D) embeddings (unscaled); returns (B, S, D)."""
    B, S, D = emb_bsd.shape
    L = stacked_params[0].shape[0]
    D_hid = stacked_params[6].shape[-1]          # w1 stacked: (L, D, D_hid)

    def wspec(per_layer_shape):
        nd = len(per_layer_shape)
        return pl.BlockSpec((None,) + tuple(per_layer_shape),
                            lambda l, _nd=nd: (l,) + (0,) * _nd)

    full3 = lambda l: (0, 0, 0)

    kernel = functools.partial(_encoder_stack_kernel, num_heads=num_heads)
    return pl.pallas_call(
        kernel,
        out_shape=jax.ShapeDtypeStruct((B, S, D), jnp.float32),
        grid_spec=pltpu.PrefetchScalarGridSpec(
            num_scalar_prefetch=0,
            grid=(L,),
            in_specs=[
                pl.BlockSpec((B, S, D), full3),          # embeddings
                pl.BlockSpec((1, S, D), full3),          # positional encoding
                wspec((D, 3 * D)), wspec((1, 3 * D)),    # attn in_proj (W, b)
                wspec((D, D)), wspec((1, D)),            # attn out_proj (W, b)
                wspec((1, D)), wspec((1, D)),            # layer-norm 1 (g, b)
                wspec((D, D_hid)), wspec((1, D_hid)),    # linear1 (W, b)
                wspec((D_hid, D)), wspec((1, D)),        # linear2 (W, b)
                wspec((1, D)), wspec((1, D)),            # layer-norm 2 (g, b)
            ],
            out_specs=pl.BlockSpec((B, S, D), full3),    # VMEM-resident carry
        ),
        compiler_params=pltpu.CompilerParams(
            dimension_semantics=("arbitrary",)),
    )(emb_bsd, pe_1sd, *stacked_params)


@functools.partial(jax.jit, static_argnames=("num_heads",))
def trans_encoder_forward(src_ids, embedding_matrix, pe, stacked_params, *, num_heads):
    """src_ids: (S, B) int32 token ids -> (S, B, d_model), like the PyTorch module."""
    # Embedding gather stays in XLA; scale + PE add are fused into the kernel.
    emb = jnp.take(embedding_matrix, jnp.transpose(src_ids), axis=0)   # (B, S, D)
    out_bsd = transformer_encoder_stack(emb, pe, stacked_params, num_heads=num_heads)
    return jnp.transpose(out_bsd, (1, 0, 2))                            # (S, B, D)


# ----------------------------------------------------------------------------
# Parameter / positional-encoding construction (deterministic, PyTorch-shaped,
# stored kernel-ready: weights pre-transposed, vectors as (1, n)).
# ----------------------------------------------------------------------------
def make_positional_encoding(seq_len, d_model):
    pos = jnp.arange(seq_len, dtype=jnp.float32)[:, None]
    div = jnp.exp(jnp.arange(0, d_model, 2, dtype=jnp.float32)
                  * (-math.log(10000.0) / d_model))
    ang = pos * div                                     # (S, D//2)
    pe = jnp.zeros((seq_len, d_model), jnp.float32)
    pe = pe.at[:, 0::2].set(jnp.sin(ang))
    pe = pe.at[:, 1::2].set(jnp.cos(ang))
    return pe[None]                                     # (1, S, D)


def make_layer_params(key, d_model, d_hid):
    ks = jax.random.split(key, 8)
    lim = 1.0 / math.sqrt(d_model)
    wqkv = jax.random.uniform(ks[0], (3 * d_model, d_model), jnp.float32, -lim, lim)
    bqkv = jax.random.uniform(ks[1], (3 * d_model,), jnp.float32, -lim, lim)
    wo = jax.random.uniform(ks[2], (d_model, d_model), jnp.float32, -lim, lim)
    bo = jax.random.uniform(ks[3], (d_model,), jnp.float32, -lim, lim)
    w1 = jax.random.uniform(ks[4], (d_hid, d_model), jnp.float32, -lim, lim)
    b1 = jax.random.uniform(ks[5], (d_hid,), jnp.float32, -lim, lim)
    lim2 = 1.0 / math.sqrt(d_hid)
    w2 = jax.random.uniform(ks[6], (d_model, d_hid), jnp.float32, -lim2, lim2)
    b2 = jax.random.uniform(ks[7], (d_model,), jnp.float32, -lim2, lim2)
    ln1_g = jnp.ones((d_model,), jnp.float32)
    ln1_b = jnp.zeros((d_model,), jnp.float32)
    ln2_g = jnp.ones((d_model,), jnp.float32)
    ln2_b = jnp.zeros((d_model,), jnp.float32)
    # TODO(synk): weights could be stored bf16 on v6e/v7x (keep f32 on v5e).
    return (wqkv.T, bqkv[None, :], wo.T, bo[None, :],
            ln1_g[None, :], ln1_b[None, :],
            w1.T, b1[None, :], w2.T, b2[None, :],
            ln2_g[None, :], ln2_b[None, :])


def stack_layer_params(per_layer):
    return tuple(jnp.stack(ps, axis=0) for ps in zip(*per_layer))


# ----------------------------------------------------------------------------
# Pure-JAX reference (sanity check of the kernel).
# ----------------------------------------------------------------------------
def _layer_norm_ref(x, g, b, eps=1e-5):
    mu = jnp.mean(x, axis=-1, keepdims=True)
    var = jnp.mean((x - mu) ** 2, axis=-1, keepdims=True)
    return (x - mu) / jnp.sqrt(var + eps) * g + b


def _encoder_layer_ref(x_bsd, p, num_heads):
    (wqkv, bqkv, wo, bo, g1, be1, w1, b1, w2, b2, g2, be2) = p
    B, S, D = x_bsd.shape
    DH = D // num_heads
    x = x_bsd.reshape(B * S, D)
    qkv = x @ wqkv + bqkv
    q, k, v = qkv[:, :D], qkv[:, D:2 * D], qkv[:, 2 * D:]

    def split(t):
        return t.reshape(B, S, num_heads, DH).transpose(0, 2, 1, 3)   # (B,H,S,DH)

    q, k, v = split(q), split(k), split(v)
    s = jnp.einsum("bhsd,bhtd->bhst", q, k) / math.sqrt(DH)
    pa = jax.nn.softmax(s, axis=-1)
    ctx = jnp.einsum("bhst,bhtd->bhsd", pa, v)
    ctx = ctx.transpose(0, 2, 1, 3).reshape(B * S, D)
    x = _layer_norm_ref(x + ctx @ wo + bo, g1, be1)
    ff = jnp.maximum(x @ w1 + b1, 0.0) @ w2 + b2
    x = _layer_norm_ref(x + ff, g2, be2)
    return x.reshape(B, S, D)


def _forward_ref(src_ids, embedding_matrix, pe, stacked_params, num_heads):
    d_model = embedding_matrix.shape[1]
    x = jnp.take(embedding_matrix, jnp.transpose(src_ids), axis=0)
    x = x * math.sqrt(d_model) + pe
    L = stacked_params[0].shape[0]
    for l in range(L):
        x = _encoder_layer_ref(x, tuple(w[l] for w in stacked_params), num_heads)
    return jnp.transpose(x, (1, 0, 2))


if __name__ == "__main__":
    # Small, module-consistent, TPU-lane-friendly shapes.
    VOCAB, D_MODEL = 50, 128          # embedding_matrix: (50, 128) -> d_model=128
    NHEAD, D_HID, NLAYERS = 4, 256, 2  # small encoder stack (head_dim = 32)
    S, B = 8, 2                        # src: (seq_len=8, batch=2) token ids

    key = jax.random.PRNGKey(0)
    k_emb, k_ids, k_layers = jax.random.split(key, 3)
    # init_weights(): frozen embedding, uniform(-0.1, 0.1).
    embedding_matrix = jax.random.uniform(
        k_emb, (VOCAB, D_MODEL), jnp.float32, -0.1, 0.1)
    src = jax.random.randint(k_ids, (S, B), 0, VOCAB, jnp.int32)

    layer_keys = jax.random.split(k_layers, NLAYERS)
    stacked_params = stack_layer_params(
        [make_layer_params(k, D_MODEL, D_HID) for k in layer_keys])
    pe = make_positional_encoding(S, D_MODEL)

    out = trans_encoder_forward(src, embedding_matrix, pe, stacked_params,
                                num_heads=NHEAD)
    out = jax.block_until_ready(out)
    assert out.shape == (S, B, D_MODEL), out.shape

    ref = _forward_ref(src, embedding_matrix, pe, stacked_params, NHEAD)
    max_err = float(jnp.max(jnp.abs(out - ref)))
    assert jnp.allclose(out, ref, atol=2e-3, rtol=2e-3), max_err

    print("KERNEL_OK")
</pallas_src>

<mosaic_0001>
module attributes {stable_mosaic.version = 11 : i64} {
  func.func @_encoder_stack_kernel(%arg0: i32, %arg1: memref<2x8x128xf32, #tpu.memory_space<vmem>>, %arg2: memref<1x8x128xf32, #tpu.memory_space<vmem>>, %arg3: memref<1x128x384xf32, #tpu.memory_space<vmem>>, %arg4: memref<1x1x384xf32, #tpu.memory_space<vmem>>, %arg5: memref<1x128x128xf32, #tpu.memory_space<vmem>>, %arg6: memref<1x1x128xf32, #tpu.memory_space<vmem>>, %arg7: memref<1x1x128xf32, #tpu.memory_space<vmem>>, %arg8: memref<1x1x128xf32, #tpu.memory_space<vmem>>, %arg9: memref<1x128x256xf32, #tpu.memory_space<vmem>>, %arg10: memref<1x1x256xf32, #tpu.memory_space<vmem>>, %arg11: memref<1x256x128xf32, #tpu.memory_space<vmem>>, %arg12: memref<1x1x128xf32, #tpu.memory_space<vmem>>, %arg13: memref<1x1x128xf32, #tpu.memory_space<vmem>>, %arg14: memref<1x1x128xf32, #tpu.memory_space<vmem>>, %arg15: memref<2x8x128xf32, #tpu.memory_space<vmem>>) attributes {dimension_semantics = [#tpu.dimension_semantics<arbitrary>], iteration_bounds = array<i64: 2>, scalar_prefetch = 0 : i64, scratch_operands = 0 : i64, tpu.core_type = #tpu.core_type<tc>, window_params = [{pipeline_mode = #tpu.pipeline_mode<synchronous>, transform_indices = @transform_0, window_bounds = array<i64: 2, 8, 128>}, {pipeline_mode = #tpu.pipeline_mode<synchronous>, transform_indices = @transform_1, window_bounds = array<i64: 1, 8, 128>}, {transform_indices = @transform_2, window_bounds = array<i64: 1, 128, 384>}, {transform_indices = @transform_3, window_bounds = array<i64: 1, 1, 384>}, {transform_indices = @transform_4, window_bounds = array<i64: 1, 128, 128>}, {transform_indices = @transform_5, window_bounds = array<i64: 1, 1, 128>}, {transform_indices = @transform_6, window_bounds = array<i64: 1, 1, 128>}, {transform_indices = @transform_7, window_bounds = array<i64: 1, 1, 128>}, {transform_indices = @transform_8, window_bounds = array<i64: 1, 128, 256>}, {transform_indices = @transform_9, window_bounds = array<i64: 1, 1, 256>}, {transform_indices = @transform_10, window_bounds = array<i64: 1, 256, 128>}, {transform_indices = @transform_11, window_bounds = array<i64: 1, 1, 128>}, {transform_indices = @transform_12, window_bounds = array<i64: 1, 1, 128>}, {transform_indices = @transform_13, window_bounds = array<i64: 1, 1, 128>}, {pipeline_mode = #tpu.pipeline_mode<synchronous>, transform_indices = @transform_14, window_bounds = array<i64: 2, 8, 128>}]} {
    %c0_i32 = arith.constant 0 : i32
    %0 = arith.cmpi eq, %arg0, %c0_i32 : i32
    %1 = arith.extui %0 : i1 to i32
    %c0_i32_0 = arith.constant 0 : i32
    %2 = arith.cmpi ne, %1, %c0_i32_0 : i32
    scf.if %2 {
      %c0_96 = arith.constant 0 : index
      %c0_97 = arith.constant 0 : index
      %c0_98 = arith.constant 0 : index
      %218 = vector.load %arg1[%c0_96, %c0_97, %c0_98] : memref<2x8x128xf32, #tpu.memory_space<vmem>>, vector<2x8x128xf32>
      %cst_99 = arith.constant 11.3137083 : f32
      %219 = vector.broadcast %cst_99 : f32 to vector<2x8x128xf32>
      %220 = arith.mulf %218, %219 : vector<2x8x128xf32>
      %c0_100 = arith.constant 0 : index
      %c0_101 = arith.constant 0 : index
      %c0_102 = arith.constant 0 : index
      %221 = vector.load %arg2[%c0_100, %c0_101, %c0_102] : memref<1x8x128xf32, #tpu.memory_space<vmem>>, vector<1x8x128xf32>
      %222 = vector.broadcast %221 : vector<1x8x128xf32> to vector<2x8x128xf32>
      %223 = arith.addf %220, %222 : vector<2x8x128xf32>
      %c0_103 = arith.constant 0 : index
      %c0_104 = arith.constant 0 : index
      %c0_105 = arith.constant 0 : index
      %224 = vector.load %arg15[%c0_103, %c0_104, %c0_105] : memref<2x8x128xf32, #tpu.memory_space<vmem>>, vector<2x8x128xf32>
      tpu.vector_store %arg15[%c0_103, %c0_104, %c0_105], %223 {strides = array<i32>} : memref<2x8x128xf32, #tpu.memory_space<vmem>>, vector<2x8x128xf32>,
    } else {
    }
    %c0 = arith.constant 0 : index
    %c0_1 = arith.constant 0 : index
    %c0_2 = arith.constant 0 : index
    %3 = vector.load %arg15[%c0, %c0_1, %c0_2] : memref<2x8x128xf32, #tpu.memory_space<vmem>>, vector<2x8x128xf32>
    %4 = vector.shape_cast %3 : vector<2x8x128xf32> to vector<16x128xf32>
    %c0_3 = arith.constant 0 : index
    %c0_4 = arith.constant 0 : index
    %c0_5 = arith.constant 0 : index
    %5 = vector.load %arg3[%c0_3, %c0_4, %c0_5] : memref<1x128x384xf32, #tpu.memory_space<vmem>>, vector<1x128x384xf32>
    %6 = vector.shape_cast %5 : vector<1x128x384xf32> to vector<128x384xf32>
    %cst = arith.constant dense<0.000000e+00> : vector<16x384xf32>
    %7 = tpu.matmul %4, %6, %cst {dimension_numbers = #tpu.dot_dimension_numbers<[1], [0], [0], [1], [0, 0, 1, 1], [], []>} : vector<16x128xf32>, vector<128x384xf32>, vector<16x384xf32> -> vector<16x384xf32>
    %c0_6 = arith.constant 0 : index
    %c0_7 = arith.constant 0 : index
    %c0_8 = arith.constant 0 : index
    %8 = vector.load %arg4[%c0_6, %c0_7, %c0_8] : memref<1x1x384xf32, #tpu.memory_space<vmem>>, vector<1x1x384xf32>
    %9 = vector.shape_cast %8 : vector<1x1x384xf32> to vector<1x384xf32>
    %10 = vector.broadcast %9 : vector<1x384xf32> to vector<16x384xf32>
    %11 = arith.addf %7, %10 : vector<16x384xf32>
    %12 = vector.extract_strided_slice %11 {offsets = [0, 0], sizes = [8, 32], strides = [1, 1]} : vector<16x384xf32> to vector<8x32xf32>
    %cst_9 = arith.constant 0.176776692 : f32
    %13 = vector.broadcast %cst_9 : f32 to vector<8x32xf32>
    %14 = arith.mulf %12, %13 : vector<8x32xf32>
    %15 = vector.extract_strided_slice %11 {offsets = [0, 128], sizes = [8, 32], strides = [1, 1]} : vector<16x384xf32> to vector<8x32xf32>
    %16 = vector.extract_strided_slice %11 {offsets = [0, 256], sizes = [8, 32], strides = [1, 1]} : vector<16x384xf32> to vector<8x32xf32>
    %cst_10 = arith.constant dense<0.000000e+00> : vector<8x8xf32>
    %17 = tpu.matmul %14, %15, %cst_10 {dimension_numbers = #tpu.dot_dimension_numbers<[1], [1], [0], [0], [0, 0, 1, 0], [], []>} : vector<8x32xf32>, vector<8x32xf32>, vector<8x8xf32> -> vector<8x8xf32>
    %cst_11 = arith.constant dense<0xFF800000> : vector<8xf32>
    %18 = vector.multi_reduction <maximumf>, %17, %cst_11 [1] : vector<8x8xf32> to vector<8xf32>
    %19 = vector.shape_cast %18 : vector<8xf32> to vector<8x1xf32>
    %20 = vector.broadcast %19 : vector<8x1xf32> to vector<8x8xf32>
    %21 = arith.subf %17, %20 : vector<8x8xf32>
    %22 = math.exp %21 : vector<8x8xf32>
    %cst_12 = arith.constant dense<0.000000e+00> : vector<8xf32>
    %23 = vector.multi_reduction <add>, %22, %cst_12 [1] : vector<8x8xf32> to vector<8xf32>
    %24 = vector.shape_cast %23 : vector<8xf32> to vector<8x1xf32>
    %25 = vector.broadcast %24 : vector<8x1xf32> to vector<8x8xf32>
    %26 = arith.divf %22, %25 : vector<8x8xf32>
    %cst_13 = arith.constant dense<0.000000e+00> : vector<8x32xf32>
    %27 = tpu.matmul %26, %16, %cst_13 {dimension_numbers = #tpu.dot_dimension_numbers<[1], [0], [0], [1], [0, 0, 1, 1], [], []>} : vector<8x8xf32>, vector<8x32xf32>, vector<8x32xf32> -> vector<8x32xf32>
    %28 = vector.extract_strided_slice %11 {offsets = [0, 32], sizes = [8, 32], strides = [1, 1]} : vector<16x384xf32> to vector<8x32xf32>
    %cst_14 = arith.constant 0.176776692 : f32
    %29 = vector.broadcast %cst_14 : f32 to vector<8x32xf32>
    %30 = arith.mulf %28, %29 : vector<8x32xf32>
    %31 = vector.extract_strided_slice %11 {offsets = [0, 160], sizes = [8, 32], strides = [1, 1]} : vector<16x384xf32> to vector<8x32xf32>
    %32 = vector.extract_strided_slice %11 {offsets = [0, 288], sizes = [8, 32], strides = [1, 1]} : vector<16x384xf32> to vector<8x32xf32>
    %cst_15 = arith.constant dense<0.000000e+00> : vector<8x8xf32>
    %33 = tpu.matmul %30, %31, %cst_15 {dimension_numbers = #tpu.dot_dimension_numbers<[1], [1], [0], [0], [0, 0, 1, 0], [], []>} : vector<8x32xf32>, vector<8x32xf32>, vector<8x8xf32> -> vector<8x8xf32>
    %cst_16 = arith.constant dense<0xFF800000> : vector<8xf32>
    %34 = vector.multi_reduction <maximumf>, %33, %cst_16 [1] : vector<8x8xf32> to vector<8xf32>
    %35 = vector.shape_cast %34 : vector<8xf32> to vector<8x1xf32>
    %36 = vector.broadcast %35 : vector<8x1xf32> to vector<8x8xf32>
    %37 = arith.subf %33, %36 : vector<8x8xf32>
    %38 = math.exp %37 : vector<8x8xf32>
    %cst_17 = arith.constant dense<0.000000e+00> : vector<8xf32>
    %39 = vector.multi_reduction <add>, %38, %cst_17 [1] : vector<8x8xf32> to vector<8xf32>
    %40 = vector.shape_cast %39 : vector<8xf32> to vector<8x1xf32>
    %41 = vector.broadcast %40 : vector<8x1xf32> to vector<8x8xf32>
    %42 = arith.divf %38, %41 : vector<8x8xf32>
    %cst_18 = arith.constant dense<0.000000e+00> : vector<8x32xf32>
    %43 = tpu.matmul %42, %32, %cst_18 {dimension_numbers = #tpu.dot_dimension_numbers<[1], [0], [0], [1], [0, 0, 1, 1], [], []>} : vector<8x8xf32>, vector<8x32xf32>, vector<8x32xf32> -> vector<8x32xf32>
    %44 = vector.extract_strided_slice %11 {offsets = [0, 64], sizes = [8, 32], strides = [1, 1]} : vector<16x384xf32> to vector<8x32xf32>
    %cst_19 = arith.constant 0.176776692 : f32
    %45 = vector.broadcast %cst_19 : f32 to vector<8x32xf32>
    %46 = arith.mulf %44, %45 : vector<8x32xf32>
    %47 = vector.extract_strided_slice %11 {offsets = [0, 192], sizes = [8, 32], strides = [1, 1]} : vector<16x384xf32> to vector<8x32xf32>
    %48 = vector.extract_strided_slice %11 {offsets = [0, 320], sizes = [8, 32], strides = [1, 1]} : vector<16x384xf32> to vector<8x32xf32>
    %cst_20 = arith.constant dense<0.000000e+00> : vector<8x8xf32>
    %49 = tpu.matmul %46, %47, %cst_20 {dimension_numbers = #tpu.dot_dimension_numbers<[1], [1], [0], [0], [0, 0, 1, 0], [], []>} : vector<8x32xf32>, vector<8x32xf32>, vector<8x8xf32> -> vector<8x8xf32>
    %cst_21 = arith.constant dense<0xFF800000> : vector<8xf32>
    %50 = vector.multi_reduction <maximumf>, %49, %cst_21 [1] : vector<8x8xf32> to vector<8xf32>
    %51 = vector.shape_cast %50 : vector<8xf32> to vector<8x1xf32>
    %52 = vector.broadcast %51 : vector<8x1xf32> to vector<8x8xf32>
    %53 = arith.subf %49, %52 : vector<8x8xf32>
    %54 = math.exp %53 : vector<8x8xf32>
    %cst_22 = arith.constant dense<0.000000e+00> : vector<8xf32>
    %55 = vector.multi_reduction <add>, %54, %cst_22 [1] : vector<8x8xf32> to vector<8xf32>
    %56 = vector.shape_cast %55 : vector<8xf32> to vector<8x1xf32>
    %57 = vector.broadcast %56 : vector<8x1xf32> to vector<8x8xf32>
    %58 = arith.divf %54, %57 : vector<8x8xf32>
    %cst_23 = arith.constant dense<0.000000e+00> : vector<8x32xf32>
    %59 = tpu.matmul %58, %48, %cst_23 {dimension_numbers = #tpu.dot_dimension_numbers<[1], [0], [0], [1], [0, 0, 1, 1], [], []>} : vector<8x8xf32>, vector<8x32xf32>, vector<8x32xf32> -> vector<8x32xf32>
    %60 = vector.extract_strided_slice %11 {offsets = [0, 96], sizes = [8, 32], strides = [1, 1]} : vector<16x384xf32> to vector<8x32xf32>
    %cst_24 = arith.constant 0.176776692 : f32
    %61 = vector.broadcast %cst_24 : f32 to vector<8x32xf32>
    %62 = arith.mulf %60, %61 : vector<8x32xf32>
    %63 = vector.extract_strided_slice %11 {offsets = [0, 224], sizes = [8, 32], strides = [1, 1]} : vector<16x384xf32> to vector<8x32xf32>
    %64 = vector.extract_strided_slice %11 {offsets = [0, 352], sizes = [8, 32], strides = [1, 1]} : vector<16x384xf32> to vector<8x32xf32>
    %cst_25 = arith.constant dense<0.000000e+00> : vector<8x8xf32>
    %65 = tpu.matmul %62, %63, %cst_25 {dimension_numbers = #tpu.dot_dimension_numbers<[1], [1], [0], [0], [0, 0, 1, 0], [], []>} : vector<8x32xf32>, vector<8x32xf32>, vector<8x8xf32> -> vector<8x8xf32>
    %cst_26 = arith.constant dense<0xFF800000> : vector<8xf32>
    %66 = vector.multi_reduction <maximumf>, %65, %cst_26 [1] : vector<8x8xf32> to vector<8xf32>
    %67 = vector.shape_cast %66 : vector<8xf32> to vector<8x1xf32>
    %68 = vector.broadcast %67 : vector<8x1xf32> to vector<8x8xf32>
    %69 = arith.subf %65, %68 : vector<8x8xf32>
    %70 = math.exp %69 : vector<8x8xf32>
    %cst_27 = arith.constant dense<0.000000e+00> : vector<8xf32>
    %71 = vector.multi_reduction <add>, %70, %cst_27 [1] : vector<8x8xf32> to vector<8xf32>
    %72 = vector.shape_cast %71 : vector<8xf32> to vector<8x1xf32>
    %73 = vector.broadcast %72 : vector<8x1xf32> to vector<8x8xf32>
    %74 = arith.divf %70, %73 : vector<8x8xf32>
    %cst_28 = arith.constant dense<0.000000e+00> : vector<8x32xf32>
    %75 = tpu.matmul %74, %64, %cst_28 {dimension_numbers = #tpu.dot_dimension_numbers<[1], [0], [0], [1], [0, 0, 1, 1], [], []>} : vector<8x8xf32>, vector<8x32xf32>, vector<8x32xf32> -> vector<8x32xf32>
    %76 = tpu.concatenate %27, %43, %59, %75 in 1 : vector<8x32xf32>, vector<8x32xf32>, vector<8x32xf32>, vector<8x32xf32> -> vector<8x128xf32>
    %77 = vector.extract_strided_slice %11 {offsets = [8, 0], sizes = [8, 32], strides = [1, 1]} : vector<16x384xf32> to vector<8x32xf32>
    %cst_29 = arith.constant 0.176776692 : f32
    %78 = vector.broadcast %cst_29 : f32 to vector<8x32xf32>
    %79 = arith.mulf %77, %78 : vector<8x32xf32>
    %80 = vector.extract_strided_slice %11 {offsets = [8, 128], sizes = [8, 32], strides = [1, 1]} : vector<16x384xf32> to vector<8x32xf32>
    %81 = vector.extract_strided_slice %11 {offsets = [8, 256], sizes = [8, 32], strides = [1, 1]} : vector<16x384xf32> to vector<8x32xf32>
    %cst_30 = arith.constant dense<0.000000e+00> : vector<8x8xf32>
    %82 = tpu.matmul %79, %80, %cst_30 {dimension_numbers = #tpu.dot_dimension_numbers<[1], [1], [0], [0], [0, 0, 1, 0], [], []>} : vector<8x32xf32>, vector<8x32xf32>, vector<8x8xf32> -> vector<8x8xf32>
    %cst_31 = arith.constant dense<0xFF800000> : vector<8xf32>
    %83 = vector.multi_reduction <maximumf>, %82, %cst_31 [1] : vector<8x8xf32> to vector<8xf32>
    %84 = vector.shape_cast %83 : vector<8xf32> to vector<8x1xf32>
    %85 = vector.broadcast %84 : vector<8x1xf32> to vector<8x8xf32>
    %86 = arith.subf %82, %85 : vector<8x8xf32>
    %87 = math.exp %86 : vector<8x8xf32>
    %cst_32 = arith.constant dense<0.000000e+00> : vector<8xf32>
    %88 = vector.multi_reduction <add>, %87, %cst_32 [1] : vector<8x8xf32> to vector<8xf32>
    %89 = vector.shape_cast %88 : vector<8xf32> to vector<8x1xf32>
    %90 = vector.broadcast %89 : vector<8x1xf32> to vector<8x8xf32>
    %91 = arith.divf %87, %90 : vector<8x8xf32>
    %cst_33 = arith.constant dense<0.000000e+00> : vector<8x32xf32>
    %92 = tpu.matmul %91, %81, %cst_33 {dimension_numbers = #tpu.dot_dimension_numbers<[1], [0], [0], [1], [0, 0, 1, 1], [], []>} : vector<8x8xf32>, vector<8x32xf32>, vector<8x32xf32> -> vector<8x32xf32>
    %93 = vector.extract_strided_slice %11 {offsets = [8, 32], sizes = [8, 32], strides = [1, 1]} : vector<16x384xf32> to vector<8x32xf32>
    %cst_34 = arith.constant 0.176776692 : f32
    %94 = vector.broadcast %cst_34 : f32 to vector<8x32xf32>
    %95 = arith.mulf %93, %94 : vector<8x32xf32>
    %96 = vector.extract_strided_slice %11 {offsets = [8, 160], sizes = [8, 32], strides = [1, 1]} : vector<16x384xf32> to vector<8x32xf32>
    %97 = vector.extract_strided_slice %11 {offsets = [8, 288], sizes = [8, 32], strides = [1, 1]} : vector<16x384xf32> to vector<8x32xf32>
    %cst_35 = arith.constant dense<0.000000e+00> : vector<8x8xf32>
    %98 = tpu.matmul %95, %96, %cst_35 {dimension_numbers = #tpu.dot_dimension_numbers<[1], [1], [0], [0], [0, 0, 1, 0], [], []>} : vector<8x32xf32>, vector<8x32xf32>, vector<8x8xf32> -> vector<8x8xf32>
    %cst_36 = arith.constant dense<0xFF800000> : vector<8xf32>
    %99 = vector.multi_reduction <maximumf>, %98, %cst_36 [1] : vector<8x8xf32> to vector<8xf32>
    %100 = vector.shape_cast %99 : vector<8xf32> to vector<8x1xf32>
    %101 = vector.broadcast %100 : vector<8x1xf32> to vector<8x8xf32>
    %102 = arith.subf %98, %101 : vector<8x8xf32>
    %103 = math.exp %102 : vector<8x8xf32>
    %cst_37 = arith.constant dense<0.000000e+00> : vector<8xf32>
    %104 = vector.multi_reduction <add>, %103, %cst_37 [1] : vector<8x8xf32> to vector<8xf32>
    %105 = vector.shape_cast %104 : vector<8xf32> to vector<8x1xf32>
    %106 = vector.broadcast %105 : vector<8x1xf32> to vector<8x8xf32>
    %107 = arith.divf %103, %106 : vector<8x8xf32>
    %cst_38 = arith.constant dense<0.000000e+00> : vector<8x32xf32>
    %108 = tpu.matmul %107, %97, %cst_38 {dimension_numbers = #tpu.dot_dimension_numbers<[1], [0], [0], [1], [0, 0, 1, 1], [], []>} : vector<8x8xf32>, vector<8x32xf32>, vector<8x32xf32> -> vector<8x32xf32>
    %109 = vector.extract_strided_slice %11 {offsets = [8, 64], sizes = [8, 32], strides = [1, 1]} : vector<16x384xf32> to vector<8x32xf32>
    %cst_39 = arith.constant 0.176776692 : f32
    %110 = vector.broadcast %cst_39 : f32 to vector<8x32xf32>
    %111 = arith.mulf %109, %110 : vector<8x32xf32>
    %112 = vector.extract_strided_slice %11 {offsets = [8, 192], sizes = [8, 32], strides = [1, 1]} : vector<16x384xf32> to vector<8x32xf32>
    %113 = vector.extract_strided_slice %11 {offsets = [8, 320], sizes = [8, 32], strides = [1, 1]} : vector<16x384xf32> to vector<8x32xf32>
    %cst_40 = arith.constant dense<0.000000e+00> : vector<8x8xf32>
    %114 = tpu.matmul %111, %112, %cst_40 {dimension_numbers = #tpu.dot_dimension_numbers<[1], [1], [0], [0], [0, 0, 1, 0], [], []>} : vector<8x32xf32>, vector<8x32xf32>, vector<8x8xf32> -> vector<8x8xf32>
    %cst_41 = arith.constant dense<0xFF800000> : vector<8xf32>
    %115 = vector.multi_reduction <maximumf>, %114, %cst_41 [1] : vector<8x8xf32> to vector<8xf32>
    %116 = vector.shape_cast %115 : vector<8xf32> to vector<8x1xf32>
    %117 = vector.broadcast %116 : vector<8x1xf32> to vector<8x8xf32>
    %118 = arith.subf %114, %117 : vector<8x8xf32>
    %119 = math.exp %118 : vector<8x8xf32>
    %cst_42 = arith.constant dense<0.000000e+00> : vector<8xf32>
    %120 = vector.multi_reduction <add>, %119, %cst_42 [1] : vector<8x8xf32> to vector<8xf32>
    %121 = vector.shape_cast %120 : vector<8xf32> to vector<8x1xf32>
    %122 = vector.broadcast %121 : vector<8x1xf32> to vector<8x8xf32>
    %123 = arith.divf %119, %122 : vector<8x8xf32>
    %cst_43 = arith.constant dense<0.000000e+00> : vector<8x32xf32>
    %124 = tpu.matmul %123, %113, %cst_43 {dimension_numbers = #tpu.dot_dimension_numbers<[1], [0], [0], [1], [0, 0, 1, 1], [], []>} : vector<8x8xf32>, vector<8x32xf32>, vector<8x32xf32> -> vector<8x32xf32>
    %125 = vector.extract_strided_slice %11 {offsets = [8, 96], sizes = [8, 32], strides = [1, 1]} : vector<16x384xf32> to vector<8x32xf32>
    %cst_44 = arith.constant 0.176776692 : f32
    %126 = vector.broadcast %cst_44 : f32 to vector<8x32xf32>
    %127 = arith.mulf %125, %126 : vector<8x32xf32>
    %128 = vector.extract_strided_slice %11 {offsets = [8, 224], sizes = [8, 32], strides = [1, 1]} : vector<16x384xf32> to vector<8x32xf32>
    %129 = vector.extract_strided_slice %11 {offsets = [8, 352], sizes = [8, 32], strides = [1, 1]} : vector<16x384xf32> to vector<8x32xf32>
    %cst_45 = arith.constant dense<0.000000e+00> : vector<8x8xf32>
    %130 = tpu.matmul %127, %128, %cst_45 {dimension_numbers = #tpu.dot_dimension_numbers<[1], [1], [0], [0], [0, 0, 1, 0], [], []>} : vector<8x32xf32>, vector<8x32xf32>, vector<8x8xf32> -> vector<8x8xf32>
    %cst_46 = arith.constant dense<0xFF800000> : vector<8xf32>
    %131 = vector.multi_reduction <maximumf>, %130, %cst_46 [1] : vector<8x8xf32> to vector<8xf32>
    %132 = vector.shape_cast %131 : vector<8xf32> to vector<8x1xf32>
    %133 = vector.broadcast %132 : vector<8x1xf32> to vector<8x8xf32>
    %134 = arith.subf %130, %133 : vector<8x8xf32>
    %135 = math.exp %134 : vector<8x8xf32>
    %cst_47 = arith.constant dense<0.000000e+00> : vector<8xf32>
    %136 = vector.multi_reduction <add>, %135, %cst_47 [1] : vector<8x8xf32> to vector<8xf32>
    %137 = vector.shape_cast %136 : vector<8xf32> to vector<8x1xf32>
    %138 = vector.broadcast %137 : vector<8x1xf32> to vector<8x8xf32>
    %139 = arith.divf %135, %138 : vector<8x8xf32>
    %cst_48 = arith.constant dense<0.000000e+00> : vector<8x32xf32>
    %140 = tpu.matmul %139, %129, %cst_48 {dimension_numbers = #tpu.dot_dimension_numbers<[1], [0], [0], [1], [0, 0, 1, 1], [], []>} : vector<8x8xf32>, vector<8x32xf32>, vector<8x32xf32> -> vector<8x32xf32>
    %141 = tpu.concatenate %92, %108, %124, %140 in 1 : vector<8x32xf32>, vector<8x32xf32>, vector<8x32xf32>, vector<8x32xf32> -> vector<8x128xf32>
    %142 = tpu.concatenate %76, %141 in 0 : vector<8x128xf32>, vector<8x128xf32> -> vector<16x128xf32>
    %c0_49 = arith.constant 0 : index
    %c0_50 = arith.constant 0 : index
    %c0_51 = arith.constant 0 : index
    %143 = vector.load %arg5[%c0_49, %c0_50, %c0_51] : memref<1x128x128xf32, #tpu.memory_space<vmem>>, vector<1x128x128xf32>
    %144 = vector.shape_cast %143 : vector<1x128x128xf32> to vector<128x128xf32>
    %cst_52 = arith.constant dense<0.000000e+00> : vector<16x128xf32>
    %145 = tpu.matmul %142, %144, %cst_52 {dimension_numbers = #tpu.dot_dimension_numbers<[1], [0], [0], [1], [0, 0, 1, 1], [], []>} : vector<16x128xf32>, vector<128x128xf32>, vector<16x128xf32> -> vector<16x128xf32>
    %c0_53 = arith.constant 0 : index
    %c0_54 = arith.constant 0 : index
    %c0_55 = arith.constant 0 : index
    %146 = vector.load %arg6[%c0_53, %c0_54, %c0_55] : memref<1x1x128xf32, #tpu.memory_space<vmem>>, vector<1x1x128xf32>
    %147 = vector.shape_cast %146 : vector<1x1x128xf32> to vector<1x128xf32>
    %148 = vector.broadcast %147 : vector<1x128xf32> to vector<16x128xf32>
    %149 = arith.addf %145, %148 : vector<16x128xf32>
    %150 = arith.addf %4, %149 : vector<16x128xf32>
    %c0_56 = arith.constant 0 : index
    %c0_57 = arith.constant 0 : index
    %c0_58 = arith.constant 0 : index
    %151 = vector.load %arg7[%c0_56, %c0_57, %c0_58] : memref<1x1x128xf32, #tpu.memory_space<vmem>>, vector<1x1x128xf32>
    %152 = vector.shape_cast %151 : vector<1x1x128xf32> to vector<1x128xf32>
    %c0_59 = arith.constant 0 : index
    %c0_60 = arith.constant 0 : index
    %c0_61 = arith.constant 0 : index
    %153 = vector.load %arg8[%c0_59, %c0_60, %c0_61] : memref<1x1x128xf32, #tpu.memory_space<vmem>>, vector<1x1x128xf32>
    %154 = vector.shape_cast %153 : vector<1x1x128xf32> to vector<1x128xf32>
    %cst_62 = arith.constant dense<0.000000e+00> : vector<16xf32>
    %155 = vector.multi_reduction <add>, %150, %cst_62 [1] : vector<16x128xf32> to vector<16xf32>
    %156 = vector.shape_cast %155 : vector<16xf32> to vector<16x1xf32>
    %cst_63 = arith.constant 1.280000e+02 : f32
    %157 = vector.broadcast %cst_63 : f32 to vector<16x1xf32>
    %158 = arith.divf %156, %157 : vector<16x1xf32>
    %159 = vector.broadcast %158 : vector<16x1xf32> to vector<16x128xf32>
    %160 = arith.subf %150, %159 : vector<16x128xf32>
    %161 = arith.mulf %160, %160 : vector<16x128xf32>
    %cst_64 = arith.constant dense<0.000000e+00> : vector<16xf32>
    %162 = vector.multi_reduction <add>, %161, %cst_64 [1] : vector<16x128xf32> to vector<16xf32>
    %163 = vector.shape_cast %162 : vector<16xf32> to vector<16x1xf32>
    %cst_65 = arith.constant 1.280000e+02 : f32
    %164 = vector.broadcast %cst_65 : f32 to vector<16x1xf32>
    %165 = arith.divf %163, %164 : vector<16x1xf32>
    %cst_66 = arith.constant 9.99999974E-6 : f32
    %166 = vector.broadcast %cst_66 : f32 to vector<16x1xf32>
    %167 = arith.addf %165, %166 : vector<16x1xf32>
    %168 = math.rsqrt %167 : vector<16x1xf32>
    %169 = vector.broadcast %168 : vector<16x1xf32> to vector<16x128xf32>
    %170 = arith.mulf %160, %169 : vector<16x128xf32>
    %171 = vector.broadcast %152 : vector<1x128xf32> to vector<16x128xf32>
    %172 = arith.mulf %170, %171 : vector<16x128xf32>
    %173 = vector.broadcast %154 : vector<1x128xf32> to vector<16x128xf32>
    %174 = arith.addf %172, %173 : vector<16x128xf32>
    %c0_67 = arith.constant 0 : index
    %c0_68 = arith.constant 0 : index
    %c0_69 = arith.constant 0 : index
    %175 = vector.load %arg9[%c0_67, %c0_68, %c0_69] : memref<1x128x256xf32, #tpu.memory_space<vmem>>, vector<1x128x256xf32>
    %176 = vector.shape_cast %175 : vector<1x128x256xf32> to vector<128x256xf32>
    %cst_70 = arith.constant dense<0.000000e+00> : vector<16x256xf32>
    %177 = tpu.matmul %174, %176, %cst_70 {dimension_numbers = #tpu.dot_dimension_numbers<[1], [0], [0], [1], [0, 0, 1, 1], [], []>} : vector<16x128xf32>, vector<128x256xf32>, vector<16x256xf32> -> vector<16x256xf32>
    %c0_71 = arith.constant 0 : index
    %c0_72 = arith.constant 0 : index
    %c0_73 = arith.constant 0 : index
    %178 = vector.load %arg10[%c0_71, %c0_72, %c0_73] : memref<1x1x256xf32, #tpu.memory_space<vmem>>, vector<1x1x256xf32>
    %179 = vector.shape_cast %178 : vector<1x1x256xf32> to vector<1x256xf32>
    %180 = vector.broadcast %179 : vector<1x256xf32> to vector<16x256xf32>
    %181 = arith.addf %177, %180 : vector<16x256xf32>
    %cst_74 = arith.constant 0.000000e+00 : f32
    %182 = vector.broadcast %cst_74 : f32 to vector<16x256xf32>
    %183 = arith.maximumf %181, %182 : vector<16x256xf32>
    %c0_75 = arith.constant 0 : index
    %c0_76 = arith.constant 0 : index
    %c0_77 = arith.constant 0 : index
    %184 = vector.load %arg11[%c0_75, %c0_76, %c0_77] : memref<1x256x128xf32, #tpu.memory_space<vmem>>, vector<1x256x128xf32>
    %185 = vector.shape_cast %184 : vector<1x256x128xf32> to vector<256x128xf32>
    %cst_78 = arith.constant dense<0.000000e+00> : vector<16x128xf32>
    %186 = tpu.matmul %183, %185, %cst_78 {dimension_numbers = #tpu.dot_dimension_numbers<[1], [0], [0], [1], [0, 0, 1, 1], [], []>} : vector<16x256xf32>, vector<256x128xf32>, vector<16x128xf32> -> vector<16x128xf32>
    %c0_79 = arith.constant 0 : index
    %c0_80 = arith.constant 0 : index
    %c0_81 = arith.constant 0 : index
    %187 = vector.load %arg12[%c0_79, %c0_80, %c0_81] : memref<1x1x128xf32, #tpu.memory_space<vmem>>, vector<1x1x128xf32>
    %188 = vector.shape_cast %187 : vector<1x1x128xf32> to vector<1x128xf32>
    %189 = vector.broadcast %188 : vector<1x128xf32> to vector<16x128xf32>
    %190 = arith.addf %186, %189 : vector<16x128xf32>
    %191 = arith.addf %174, %190 : vector<16x128xf32>
    %c0_82 = arith.constant 0 : index
    %c0_83 = arith.constant 0 : index
    %c0_84 = arith.constant 0 : index
    %192 = vector.load %arg13[%c0_82, %c0_83, %c0_84] : memref<1x1x128xf32, #tpu.memory_space<vmem>>, vector<1x1x128xf32>
    %193 = vector.shape_cast %192 : vector<1x1x128xf32> to vector<1x128xf32>
    %c0_85 = arith.constant 0 : index
    %c0_86 = arith.constant 0 : index
    %c0_87 = arith.constant 0 : index
    %194 = vector.load %arg14[%c0_85, %c0_86, %c0_87] : memref<1x1x128xf32, #tpu.memory_space<vmem>>, vector<1x1x128xf32>
    %195 = vector.shape_cast %194 : vector<1x1x128xf32> to vector<1x128xf32>
    %cst_88 = arith.constant dense<0.000000e+00> : vector<16xf32>
    %196 = vector.multi_reduction <add>, %191, %cst_88 [1] : vector<16x128xf32> to vector<16xf32>
    %197 = vector.shape_cast %196 : vector<16xf32> to vector<16x1xf32>
    %cst_89 = arith.constant 1.280000e+02 : f32
    %198 = vector.broadcast %cst_89 : f32 to vector<16x1xf32>
    %199 = arith.divf %197, %198 : vector<16x1xf32>
    %200 = vector.broadcast %199 : vector<16x1xf32> to vector<16x128xf32>
    %201 = arith.subf %191, %200 : vector<16x128xf32>
    %202 = arith.mulf %201, %201 : vector<16x128xf32>
    %cst_90 = arith.constant dense<0.000000e+00> : vector<16xf32>
    %203 = vector.multi_reduction <add>, %202, %cst_90 [1] : vector<16x128xf32> to vector<16xf32>
    %204 = vector.shape_cast %203 : vector<16xf32> to vector<16x1xf32>
    %cst_91 = arith.constant 1.280000e+02 : f32
    %205 = vector.broadcast %cst_91 : f32 to vector<16x1xf32>
    %206 = arith.divf %204, %205 : vector<16x1xf32>
    %cst_92 = arith.constant 9.99999974E-6 : f32
    %207 = vector.broadcast %cst_92 : f32 to vector<16x1xf32>
    %208 = arith.addf %206, %207 : vector<16x1xf32>
    %209 = math.rsqrt %208 : vector<16x1xf32>
    %210 = vector.broadcast %209 : vector<16x1xf32> to vector<16x128xf32>
    %211 = arith.mulf %201, %210 : vector<16x128xf32>
    %212 = vector.broadcast %193 : vector<1x128xf32> to vector<16x128xf32>
    %213 = arith.mulf %211, %212 : vector<16x128xf32>
    %214 = vector.broadcast %195 : vector<1x128xf32> to vector<16x128xf32>
    %215 = arith.addf %213, %214 : vector<16x128xf32>
    %216 = vector.shape_cast %215 : vector<16x128xf32> to vector<2x8x128xf32>
    %c0_93 = arith.constant 0 : index
    %c0_94 = arith.constant 0 : index
    %c0_95 = arith.constant 0 : index
    %217 = vector.load %arg15[%c0_93, %c0_94, %c0_95] : memref<2x8x128xf32, #tpu.memory_space<vmem>>, vector<2x8x128xf32>
    tpu.vector_store %arg15[%c0_93, %c0_94, %c0_95], %216 {strides = array<i32>} : memref<2x8x128xf32, #tpu.memory_space<vmem>>, vector<2x8x128xf32>,
    return
  }
  func.func @transform_0(%arg0: i32) -> (i32, i32, i32) {
    %c0_i32 = arith.constant 0 : i32
    %c0_i32_0 = arith.constant 0 : i32
    %c0_i32_1 = arith.constant 0 : i32
    %c0_i32_2 = arith.constant 0 : i32
    return %c0_i32, %c0_i32_0, %c0_i32_1 : i32, i32, i32
  }
  func.func @transform_1(%arg0: i32) -> (i32, i32, i32) {
    %c0_i32 = arith.constant 0 : i32
    %c0_i32_0 = arith.constant 0 : i32
    %c0_i32_1 = arith.constant 0 : i32
    %c0_i32_2 = arith.constant 0 : i32
    return %c0_i32, %c0_i32_0, %c0_i32_1 : i32, i32, i32
  }
  func.func @transform_2(%arg0: i32) -> (i32, i32, i32) {
    %c0_i32 = arith.constant 0 : i32
    %c0_i32_0 = arith.constant 0 : i32
    %c0_i32_1 = arith.constant 0 : i32
    return %arg0, %c0_i32, %c0_i32_0 : i32, i32, i32
  }
  func.func @transform_3(%arg0: i32) -> (i32, i32, i32) {
    %c0_i32 = arith.constant 0 : i32
    %c0_i32_0 = arith.constant 0 : i32
    %c0_i32_1 = arith.constant 0 : i32
    return %arg0, %c0_i32, %c0_i32_0 : i32, i32, i32
  }
  func.func @transform_4(%arg0: i32) -> (i32, i32, i32) {
    %c0_i32 = arith.constant 0 : i32
    %c0_i32_0 = arith.constant 0 : i32
    %c0_i32_1 = arith.constant 0 : i32
    return %arg0, %c0_i32, %c0_i32_0 : i32, i32, i32
  }
  func.func @transform_5(%arg0: i32) -> (i32, i32, i32) {
    %c0_i32 = arith.constant 0 : i32
    %c0_i32_0 = arith.constant 0 : i32
    %c0_i32_1 = arith.constant 0 : i32
    return %arg0, %c0_i32, %c0_i32_0 : i32, i32, i32
  }
  func.func @transform_6(%arg0: i32) -> (i32, i32, i32) {
    %c0_i32 = arith.constant 0 : i32
    %c0_i32_0 = arith.constant 0 : i32
    %c0_i32_1 = arith.constant 0 : i32
    return %arg0, %c0_i32, %c0_i32_0 : i32, i32, i32
  }
  func.func @transform_7(%arg0: i32) -> (i32, i32, i32) {
    %c0_i32 = arith.constant 0 : i32
    %c0_i32_0 = arith.constant 0 : i32
    %c0_i32_1 = arith.constant 0 : i32
    return %arg0, %c0_i32, %c0_i32_0 : i32, i32, i32
  }
  func.func @transform_8(%arg0: i32) -> (i32, i32, i32) {
    %c0_i32 = arith.constant 0 : i32
    %c0_i32_0 = arith.constant 0 : i32
    %c0_i32_1 = arith.constant 0 : i32
    return %arg0, %c0_i32, %c0_i32_0 : i32, i32, i32
  }
  func.func @transform_9(%arg0: i32) -> (i32, i32, i32) {
    %c0_i32 = arith.constant 0 : i32
    %c0_i32_0 = arith.constant 0 : i32
    %c0_i32_1 = arith.constant 0 : i32
    return %arg0, %c0_i32, %c0_i32_0 : i32, i32, i32
  }
  func.func @transform_10(%arg0: i32) -> (i32, i32, i32) {
    %c0_i32 = arith.constant 0 : i32
    %c0_i32_0 = arith.constant 0 : i32
    %c0_i32_1 = arith.constant 0 : i32
    return %arg0, %c0_i32, %c0_i32_0 : i32, i32, i32
  }
  func.func @transform_11(%arg0: i32) -> (i32, i32, i32) {
    %c0_i32 = arith.constant 0 : i32
    %c0_i32_0 = arith.constant 0 : i32
    %c0_i32_1 = arith.constant 0 : i32
    return %arg0, %c0_i32, %c0_i32_0 : i32, i32, i32
  }
  func.func @transform_12(%arg0: i32) -> (i32, i32, i32) {
    %c0_i32 = arith.constant 0 : i32
    %c0_i32_0 = arith.constant 0 : i32
    %c0_i32_1 = arith.constant 0 : i32
    return %arg0, %c0_i32, %c0_i32_0 : i32, i32, i32
  }
  func.func @transform_13(%arg0: i32) -> (i32, i32, i32) {
    %c0_i32 = arith.constant 0 : i32
    %c0_i32_0 = arith.constant 0 : i32
    %c0_i32_1 = arith.constant 0 : i32
    return %arg0, %c0_i32, %c0_i32_0 : i32, i32, i32
  }
  func.func @transform_14(%arg0: i32) -> (i32, i32, i32) {
    %c0_i32 = arith.constant 0 : i32
    %c0_i32_0 = arith.constant 0 : i32
    %c0_i32_1 = arith.constant 0 : i32
    %c0_i32_2 = arith.constant 0 : i32
    return %c0_i32, %c0_i32_0, %c0_i32_1 : i32, i32, i32
  }
}

</mosaic_0001>

<llo_original>
// kernel: trans_encoder_forward.1
$region0: #{trans_encoder_forward.1}
  #allocation0 [shape = 'u32[]', space=smem, size = 0x4, offset = 0x4, fixed_abs, tag = 'smem constant byte address 0x4 - core index']
  #allocation1 [shape = 'u32[144,128]{1,0:T(1,128)}', space=vmem, size = 0x12000, scoped, tag = 'internal scratch']
  %s0 = inlined_call_operand.vmem [shape: f32[2,8,128], index: 0, kind: input, shape index: {}]
  %s1 = inlined_call_operand.vmem [shape: f32[1,8,128], index: 1, kind: input, shape index: {}]
  %s2 = inlined_call_operand.hbm [shape: f32[2,128,384], index: 2, kind: input, shape index: {}]
  %s3 = inlined_call_operand.vmem [shape: f32[2,1,384], index: 3, kind: input, shape index: {}]
  %s4 = inlined_call_operand.hbm [shape: f32[2,128,128], index: 4, kind: input, shape index: {}]
  %s5 = inlined_call_operand.vmem [shape: f32[2,1,128], index: 5, kind: input, shape index: {}]
  %s6 = inlined_call_operand.vmem [shape: f32[2,1,128], index: 6, kind: input, shape index: {}]
  %s7 = inlined_call_operand.vmem [shape: f32[2,1,128], index: 7, kind: input, shape index: {}]
  %s8 = inlined_call_operand.hbm [shape: f32[2,128,256], index: 8, kind: input, shape index: {}]
  %s9 = inlined_call_operand.vmem [shape: f32[2,1,256], index: 9, kind: input, shape index: {}]
  %s10 = inlined_call_operand.hbm [shape: f32[2,256,128], index: 10, kind: input, shape index: {}]
  %s11 = inlined_call_operand.vmem [shape: f32[2,1,128], index: 11, kind: input, shape index: {}]
  %s12 = inlined_call_operand.vmem [shape: f32[2,1,128], index: 12, kind: input, shape index: {}]
  %s13 = inlined_call_operand.vmem [shape: f32[2,1,128], index: 13, kind: input, shape index: {}]
  %s14 = inlined_call_operand.vmem [shape: f32[2,8,128], index: 14, kind: output, shape index: {}]
  %s15 = sld [smem:[#allocation0]]
  $region109: #{trans_encoder_forward.1} parent=0
    _
  %s17 = ssub.s32 1, %s15
  %s18 = scalar_select 0, %s17, %s15
  $region1: #{trans_encoder_forward.1} parent=0
    #allocation2 [shape = 'u8[393216]{0}', space=vmem, size = 0x60000, scoped, tag = 'input window, operand 2']
    #allocation3 [shape = 's32[2]{0}', space=sflag, size = 0x8, scoped, tag = 'scoped memory for trans_encoder_forward.1']
    #allocation4 [shape = 'u8[131072]{0}', space=vmem, size = 0x20000, scoped, tag = 'input window, operand 4']
    #allocation5 [shape = 's32[2]{0}', space=sflag, size = 0x8, scoped, tag = 'scoped memory for trans_encoder_forward.1']
    #allocation6 [shape = 'u8[262144]{0}', space=vmem, size = 0x40000, scoped, tag = 'input window, operand 8']
    #allocation7 [shape = 'u8[262144]{0}', space=vmem, size = 0x40000, scoped, tag = 'input window, operand 10']
    #allocation8 [shape = 's32[2]{0}', space=sflag, size = 0x8, scoped, tag = 'scoped memory for trans_encoder_forward.1']
    %19 = vsyncpa [#allocation3], 0
    %s20 = scalar_lea.sflag [#allocation3], 1
    %21 = vsyncpa %s20, 0
    %22 = vsyncpa [#allocation5], 0
    %s23 = scalar_lea.sflag [#allocation5], 1
    %24 = vsyncpa %s23, 0
    %25 = vsyncpa [#allocation8], 0
    %s26 = scalar_lea.sflag [#allocation8], 1
    %27 = vsyncpa %s26, 0
    loop: start=0, step=1, limit=4
    $region2: #{trans_encoder_forward.1} parent=1 // loop_pre_header
      _
    $region3: #{trans_encoder_forward.1} parent=1 // loop_header
      %s29 = sphi 0, %s33
      %p30 = scmp.ge.s32.totalorder %s29, 4
      %s37 = sphi 0, %s37
      %s39 = sphi 0, %s37
      %s40 = sphi 0, %s39
      %s54 = sphi 0, %s40
      %s58 = sphi 0, %s58
      %s60 = sphi 0, %s58
      %s61 = sphi 0, %s60
      %s75 = sphi 0, %s61
      %s81 = sphi 0, %s83
      %s84 = sphi 0, %s81
      %s85 = sphi 0, %s84
      %s101 = sphi 0, %s85
      %s107 = sphi 0, %s109
      %s110 = sphi 0, %s107
      %s111 = sphi 0, %s110
      %s127 = sphi 0, %s111
      %s133 = sphi 0, %s135
      %s136 = sphi 0, %s133
      %s137 = sphi 0, %s136
      %s153 = sphi 0, %s137
      %s159 = sphi 0, %s161
      %s162 = sphi 0, %s159
      %s163 = sphi 0, %s162
      %s179 = sphi 0, %s163
      %s185 = sphi 0, %s187
      %s188 = sphi 0, %s185
      %s189 = sphi 0, %s188
      %s205 = sphi 0, %s189
      %s211 = sphi 0, %s213
      %s214 = sphi 0, %s211
      %s215 = sphi 0, %s214
      %s231 = sphi 0, %s215
      %s237 = sphi 0, %s239
      %s240 = sphi 0, %s237
      %s241 = sphi 0, %s240
      %s257 = sphi 0, %s241
      %s263 = sphi 0, %s265
      %s266 = sphi 0, %s263
      %s267 = sphi 0, %s266
      %s283 = sphi 0, %s267
      %s289 = sphi 0, %s291
      %s292 = sphi 0, %s289
      %s293 = sphi 0, %s292
      %s309 = sphi 0, %s293
      %s315 = sphi 0, %s317
      %s318 = sphi 0, %s315
      %s319 = sphi 0, %s318
      %s335 = sphi 0, %s319
      %s341 = sphi 0, %s343
      %s344 = sphi 0, %s341
      %s345 = sphi 0, %s344
      %s361 = sphi 0, %s345
      %s367 = sphi 0, %s369
      %s370 = sphi 0, %s367
      %s371 = sphi 0, %s370
      %s387 = sphi 0, %s371
      %s391 = sphi 0, %s391
      %s393 = sphi 0, %s391
      %s394 = sphi 0, %s393
      %s408 = sphi 0, %s394
    $region4: #{trans_encoder_forward.1} parent=1 // loop_header_branch
      %32 = sbr.rel (%p30) target = $region8
    $region5: #{trans_encoder_forward.1} parent=1 // loop_body
      %s34 = ssub.s32 %s29, 1
      %s35 = ssub.s32 %s29, 2
      %s36 = sadd.s32 %s29, 1
      %s38 = sadd.s32 %s37, 1
      %p41 = scmp.eq.s32.totalorder %s29, 1
      %p42 = scmp.ne.s32.totalorder %s37, %s39
      %p43 = scmp.eq.s32.totalorder %s29, 0
      %p44 = por %p42, %p43
      %p45 = scmp.ne.s32.totalorder %s37, %s39
      %p46 = scmp.eq.s32.totalorder %s34, 1
      %p47 = por %p45, %p46
      %p48 = scmp.ne.s32.totalorder %s39, %s40
      %p49 = scmp.eq.s32.totalorder %s34, 0
      %p50 = por %p48, %p49
      %p51 = scmp.ne.s32.totalorder %s39, %s40
      %p52 = scmp.eq.s32.totalorder %s35, 1
      %p53 = por %p51, %p52
      %p55 = scmp.ne.s32.totalorder %s40, %s54
      %p56 = scmp.eq.s32.totalorder %s35, 0
      %p57 = por %p55, %p56
      %s59 = sadd.s32 %s58, 1
      %p62 = scmp.eq.s32.totalorder %s29, 1
      %p63 = scmp.ne.s32.totalorder %s58, %s60
      %p64 = scmp.eq.s32.totalorder %s29, 0
      %p65 = por %p63, %p64
      %p66 = scmp.ne.s32.totalorder %s58, %s60
      %p67 = scmp.eq.s32.totalorder %s34, 1
      %p68 = por %p66, %p67
      %p69 = scmp.ne.s32.totalorder %s60, %s61
      %p70 = scmp.eq.s32.totalorder %s34, 0
      %p71 = por %p69, %p70
      %p72 = scmp.ne.s32.totalorder %s60, %s61
      %p73 = scmp.eq.s32.totalorder %s35, 1
      %p74 = por %p72, %p73
      %p76 = scmp.ne.s32.totalorder %s61, %s75
      %p77 = scmp.eq.s32.totalorder %s35, 0
      %p78 = por %p76, %p77
      %s79 = ssub.s32 %s29, %s36
      %p80 = scmp.eq.s32.totalorder %s79, 0
      %s82 = sadd.s32 %s81, 1
      %s83 = scalar_select %p80, %s81, %s82
      %p86 = pneg %p80
      %p87 = scmp.eq.s32.totalorder %s29, 1
      %p88 = por %p86, %p87
      %p89 = scmp.ne.s32.totalorder %s81, %s84
      %p90 = scmp.eq.s32.totalorder %s29, 0
      %p91 = por %p89, %p90
      %p92 = scmp.ne.s32.totalorder %s81, %s84
      %p93 = scmp.eq.s32.totalorder %s34, 1
      %p94 = por %p92, %p93
      %p95 = scmp.ne.s32.totalorder %s84, %s85
      %p96 = scmp.eq.s32.totalorder %s34, 0
      %p97 = por %p95, %p96
      %p98 = scmp.ne.s32.totalorder %s84, %s85
      %p99 = scmp.eq.s32.totalorder %s35, 1
      %p100 = por %p98, %p99
      %p102 = scmp.ne.s32.totalorder %s85, %s101
      %p103 = scmp.eq.s32.totalorder %s35, 0
      %p104 = por %p102, %p103
      %s105 = ssub.s32 %s29, %s36
      %p106 = scmp.eq.s32.totalorder %s105, 0
      %s108 = sadd.s32 %s107, 1
      %s109 = scalar_select %p106, %s107, %s108
      %p112 = pneg %p106
      %p113 = scmp.eq.s32.totalorder %s29, 1
      %p114 = por %p112, %p113
      %p115 = scmp.ne.s32.totalorder %s107, %s110
      %p116 = scmp.eq.s32.totalorder %s29, 0
      %p117 = por %p115, %p116
      %p118 = scmp.ne.s32.totalorder %s107, %s110
      %p119 = scmp.eq.s32.totalorder %s34, 1
      %p120 = por %p118, %p119
      %p121 = scmp.ne.s32.totalorder %s110, %s111
      %p122 = scmp.eq.s32.totalorder %s34, 0
      %p123 = por %p121, %p122
      %p124 = scmp.ne.s32.totalorder %s110, %s111
      %p125 = scmp.eq.s32.totalorder %s35, 1
      %p126 = por %p124, %p125
      %p128 = scmp.ne.s32.totalorder %s111, %s127
      %p129 = scmp.eq.s32.totalorder %s35, 0
      %p130 = por %p128, %p129
      %s131 = ssub.s32 %s29, %s36
      %p132 = scmp.eq.s32.totalorder %s131, 0
      %s134 = sadd.s32 %s133, 1
      %s135 = scalar_select %p132, %s133, %s134
      %p138 = pneg %p132
      %p139 = scmp.eq.s32.totalorder %s29, 1
      %p140 = por %p138, %p139
      %p141 = scmp.ne.s32.totalorder %s133, %s136
      %p142 = scmp.eq.s32.totalorder %s29, 0
      %p143 = por %p141, %p142
      %p144 = scmp.ne.s32.totalorder %s133, %s136
      %p145 = scmp.eq.s32.totalorder %s34, 1
      %p146 = por %p144, %p145
      %p147 = scmp.ne.s32.totalorder %s136, %s137
      %p148 = scmp.eq.s32.totalorder %s34, 0
      %p149 = por %p147, %p148
      %p150 = scmp.ne.s32.totalorder %s136, %s137
      %p151 = scmp.eq.s32.totalorder %s35, 1
      %p152 = por %p150, %p151
      %p154 = scmp.ne.s32.totalorder %s137, %s153
      %p155 = scmp.eq.s32.totalorder %s35, 0
      %p156 = por %p154, %p155
      %s157 = ssub.s32 %s29, %s36
      %p158 = scmp.eq.s32.totalorder %s157, 0
      %s160 = sadd.s32 %s159, 1
      %s161 = scalar_select %p158, %s159, %s160
      %p164 = pneg %p158
      %p165 = scmp.eq.s32.totalorder %s29, 1
      %p166 = por %p164, %p165
      %p167 = scmp.ne.s32.totalorder %s159, %s162
      %p168 = scmp.eq.s32.totalorder %s29, 0
      %p169 = por %p167, %p168
      %p170 = scmp.ne.s32.totalorder %s159, %s162
      %p171 = scmp.eq.s32.totalorder %s34, 1
      %p172 = por %p170, %p171
      %p173 = scmp.ne.s32.totalorder %s162, %s163
      %p174 = scmp.eq.s32.totalorder %s34, 0
      %p175 = por %p173, %p174
      %p176 = scmp.ne.s32.totalorder %s162, %s163
      %p177 = scmp.eq.s32.totalorder %s35, 1
      %p178 = por %p176, %p177
      %p180 = scmp.ne.s32.totalorder %s163, %s179
      %p181 = scmp.eq.s32.totalorder %s35, 0
      %p182 = por %p180, %p181
      %s183 = ssub.s32 %s29, %s36
      %p184 = scmp.eq.s32.totalorder %s183, 0
      %s186 = sadd.s32 %s185, 1
      %s187 = scalar_select %p184, %s185, %s186
      %p190 = pneg %p184
      %p191 = scmp.eq.s32.totalorder %s29, 1
      %p192 = por %p190, %p191
      %p193 = scmp.ne.s32.totalorder %s185, %s188
      %p194 = scmp.eq.s32.totalorder %s29, 0
      %p195 = por %p193, %p194
      %p196 = scmp.ne.s32.totalorder %s185, %s188
      %p197 = scmp.eq.s32.totalorder %s34, 1
      %p198 = por %p196, %p197
      %p199 = scmp.ne.s32.totalorder %s188, %s189
      %p200 = scmp.eq.s32.totalorder %s34, 0
      %p201 = por %p199, %p200
      %p202 = scmp.ne.s32.totalorder %s188, %s189
      %p203 = scmp.eq.s32.totalorder %s35, 1
      %p204 = por %p202, %p203
      %p206 = scmp.ne.s32.totalorder %s189, %s205
      %p207 = scmp.eq.s32.totalorder %s35, 0
      %p208 = por %p206, %p207
      %s209 = ssub.s32 %s29, %s36
      %p210 = scmp.eq.s32.totalorder %s209, 0
      %s212 = sadd.s32 %s211, 1
      %s213 = scalar_select %p210, %s211, %s212
      %p216 = pneg %p210
      %p217 = scmp.eq.s32.totalorder %s29, 1
      %p218 = por %p216, %p217
      %p219 = scmp.ne.s32.totalorder %s211, %s214
      %p220 = scmp.eq.s32.totalorder %s29, 0
      %p221 = por %p219, %p220
      %p222 = scmp.ne.s32.totalorder %s211, %s214
      %p223 = scmp.eq.s32.totalorder %s34, 1
      %p224 = por %p222, %p223
      %p225 = scmp.ne.s32.totalorder %s214, %s215
      %p226 = scmp.eq.s32.totalorder %s34, 0
      %p227 = por %p225, %p226
      %p228 = scmp.ne.s32.totalorder %s214, %s215
      %p229 = scmp.eq.s32.totalorder %s35, 1
      %p230 = por %p228, %p229
      %p232 = scmp.ne.s32.totalorder %s215, %s231
      %p233 = scmp.eq.s32.totalorder %s35, 0
      %p234 = por %p232, %p233
      %s235 = ssub.s32 %s29, %s36
      %p236 = scmp.eq.s32.totalorder %s235, 0
      %s238 = sadd.s32 %s237, 1
      %s239 = scalar_select %p236, %s237, %s238
      %p242 = pneg %p236
      %p243 = scmp.eq.s32.totalorder %s29, 1
      %p244 = por %p242, %p243
      %p245 = scmp.ne.s32.totalorder %s237, %s240
      %p246 = scmp.eq.s32.totalorder %s29, 0
      %p247 = por %p245, %p246
      %p248 = scmp.ne.s32.totalorder %s237, %s240
      %p249 = scmp.eq.s32.totalorder %s34, 1
      %p250 = por %p248, %p249
      %p251 = scmp.ne.s32.totalorder %s240, %s241
      %p252 = scmp.eq.s32.totalorder %s34, 0
      %p253 = por %p251, %p252
      %p254 = scmp.ne.s32.totalorder %s240, %s241
      %p255 = scmp.eq.s32.totalorder %s35, 1
      %p256 = por %p254, %p255
      %p258 = scmp.ne.s32.totalorder %s241, %s257
      %p259 = scmp.eq.s32.totalorder %s35, 0
      %p260 = por %p258, %p259
      %s261 = ssub.s32 %s29, %s36
      %p262 = scmp.eq.s32.totalorder %s261, 0
      %s264 = sadd.s32 %s263, 1
      %s265 = scalar_select %p262, %s263, %s264
      %p268 = pneg %p262
      %p269 = scmp.eq.s32.totalorder %s29, 1
      %p270 = por %p268, %p269
      %p271 = scmp.ne.s32.totalorder %s263, %s266
      %p272 = scmp.eq.s32.totalorder %s29, 0
      %p273 = por %p271, %p272
      %p274 = scmp.ne.s32.totalorder %s263, %s266
      %p275 = scmp.eq.s32.totalorder %s34, 1
      %p276 = por %p274, %p275
      %p277 = scmp.ne.s32.totalorder %s266, %s267
      %p278 = scmp.eq.s32.totalorder %s34, 0
      %p279 = por %p277, %p278
      %p280 = scmp.ne.s32.totalorder %s266, %s267
      %p281 = scmp.eq.s32.totalorder %s35, 1
      %p282 = por %p280, %p281
      %p284 = scmp.ne.s32.totalorder %s267, %s283
      %p285 = scmp.eq.s32.totalorder %s35, 0
      %p286 = por %p284, %p285
      %s287 = ssub.s32 %s29, %s36
      %p288 = scmp.eq.s32.totalorder %s287, 0
      %s290 = sadd.s32 %s289, 1
      %s291 = scalar_select %p288, %s289, %s290
      %p294 = pneg %p288
      %p295 = scmp.eq.s32.totalorder %s29, 1
      %p296 = por %p294, %p295
      %p297 = scmp.ne.s32.totalorder %s289, %s292
      %p298 = scmp.eq.s32.totalorder %s29, 0
      %p299 = por %p297, %p298
      %p300 = scmp.ne.s32.totalorder %s289, %s292
      %p301 = scmp.eq.s32.totalorder %s34, 1
      %p302 = por %p300, %p301
      %p303 = scmp.ne.s32.totalorder %s292, %s293
      %p304 = scmp.eq.s32.totalorder %s34, 0
      %p305 = por %p303, %p304
      %p306 = scmp.ne.s32.totalorder %s292, %s293
      %p307 = scmp.eq.s32.totalorder %s35, 1
      %p308 = por %p306, %p307
      %p310 = scmp.ne.s32.totalorder %s293, %s309
      %p311 = scmp.eq.s32.totalorder %s35, 0
      %p312 = por %p310, %p311
      %s313 = ssub.s32 %s29, %s36
      %p314 = scmp.eq.s32.totalorder %s313, 0
      %s316 = sadd.s32 %s315, 1
      %s317 = scalar_select %p314, %s315, %s316
      %p320 = pneg %p314
      %p321 = scmp.eq.s32.totalorder %s29, 1
      %p322 = por %p320, %p321
      %p323 = scmp.ne.s32.totalorder %s315, %s318
      %p324 = scmp.eq.s32.totalorder %s29, 0
      %p325 = por %p323, %p324
      %p326 = scmp.ne.s32.totalorder %s315, %s318
      %p327 = scmp.eq.s32.totalorder %s34, 1
      %p328 = por %p326, %p327
      %p329 = scmp.ne.s32.totalorder %s318, %s319
      %p330 = scmp.eq.s32.totalorder %s34, 0
      %p331 = por %p329, %p330
      %p332 = scmp.ne.s32.totalorder %s318, %s319
      %p333 = scmp.eq.s32.totalorder %s35, 1
      %p334 = por %p332, %p333
      %p336 = scmp.ne.s32.totalorder %s319, %s335
      %p337 = scmp.eq.s32.totalorder %s35, 0
      %p338 = por %p336, %p337
      %s339 = ssub.s32 %s29, %s36
      %p340 = scmp.eq.s32.totalorder %s339, 0
      %s342 = sadd.s32 %s341, 1
      %s343 = scalar_select %p340, %s341, %s342
      %p346 = pneg %p340
      %p347 = scmp.eq.s32.totalorder %s29, 1
      %p348 = por %p346, %p347
      %p349 = scmp.ne.s32.totalorder %s341, %s344
      %p350 = scmp.eq.s32.totalorder %s29, 0
      %p351 = por %p349, %p350
      %p352 = scmp.ne.s32.totalorder %s341, %s344
      %p353 = scmp.eq.s32.totalorder %s34, 1
      %p354 = por %p352, %p353
      %p355 = scmp.ne.s32.totalorder %s344, %s345
      %p356 = scmp.eq.s32.totalorder %s34, 0
      %p357 = por %p355, %p356
      %p358 = scmp.ne.s32.totalorder %s344, %s345
      %p359 = scmp.eq.s32.totalorder %s35, 1
      %p360 = por %p358, %p359
      %p362 = scmp.ne.s32.totalorder %s345, %s361
      %p363 = scmp.eq.s32.totalorder %s35, 0
      %p364 = por %p362, %p363
      %s365 = ssub.s32 %s29, %s36
      %p366 = scmp.eq.s32.totalorder %s365, 0
      %s368 = sadd.s32 %s367, 1
      %s369 = scalar_select %p366, %s367, %s368
      %p372 = pneg %p366
      %p373 = scmp.eq.s32.totalorder %s29, 1
      %p374 = por %p372, %p373
      %p375 = scmp.ne.s32.totalorder %s367, %s370
      %p376 = scmp.eq.s32.totalorder %s29, 0
      %p377 = por %p375, %p376
      %p378 = scmp.ne.s32.totalorder %s367, %s370
      %p379 = scmp.eq.s32.totalorder %s34, 1
      %p380 = por %p378, %p379
      %p381 = scmp.ne.s32.totalorder %s370, %s371
      %p382 = scmp.eq.s32.totalorder %s34, 0
      %p383 = por %p381, %p382
      %p384 = scmp.ne.s32.totalorder %s370, %s371
      %p385 = scmp.eq.s32.totalorder %s35, 1
      %p386 = por %p384, %p385
      %p388 = scmp.ne.s32.totalorder %s371, %s387
      %p389 = scmp.eq.s32.totalorder %s35, 0
      %p390 = por %p388, %p389
      %s392 = sadd.s32 %s391, 1
      %p395 = scmp.eq.s32.totalorder %s29, 1
      %p396 = scmp.ne.s32.totalorder %s391, %s393
      %p397 = scmp.eq.s32.totalorder %s29, 0
      %p398 = por %p396, %p397
      %p399 = scmp.ne.s32.totalorder %s391, %s393
      %p400 = scmp.eq.s32.totalorder %s34, 1
      %p401 = por %p399, %p400
      %p402 = scmp.ne.s32.totalorder %s393, %s394
      %p403 = scmp.eq.s32.totalorder %s34, 0
      %p404 = por %p402, %p403
      %p405 = scmp.ne.s32.totalorder %s393, %s394
      %p406 = scmp.eq.s32.totalorder %s35, 1
      %p407 = por %p405, %p406
      %p409 = scmp.ne.s32.totalorder %s394, %s408
      %p410 = scmp.eq.s32.totalorder %s35, 0
      %p411 = por %p409, %p410
      %p412 = scmp.le.s32.totalorder 1, %s29
      %p413 = scmp.lt.s32.totalorder %s29, 3
      %p414 = pnand %p412, %p413
      %p415 = pneg %p414
      // Predicated region
      $region9: #{trans_encoder_forward.1} parent=5 // pred_check
        _
      $region10: #{trans_encoder_forward.1} parent=5 // pred_check_branch
        %417 = sbr.rel (%p414) target = $region12
      $region11: #{trans_encoder_forward.1} parent=5 // pred_region
        %s418 = ssub.s32 %s29, 1
        // Predicated region
        $region13: #{trans_encoder_forward.1} parent=11 // pred_check
          %p419 = pneg %p50
        $region14: #{trans_encoder_forward.1} parent=11 // pred_check_branch
          %421 = sbr.rel (%p419) target = $region16
        $region15: #{trans_encoder_forward.1} parent=11 // pred_region
          _
        $region16: #{trans_encoder_forward.1} parent=11 // pred_fallthru
          _
        // Predicated region
        $region17: #{trans_encoder_forward.1} parent=11 // pred_check
          %p422 = pneg %p71
        $region18: #{trans_encoder_forward.1} parent=11 // pred_check_branch
          %424 = sbr.rel (%p422) target = $region20
        $region19: #{trans_encoder_forward.1} parent=11 // pred_region
          _
        $region20: #{trans_encoder_forward.1} parent=11 // pred_fallthru
          _
      $region12: #{trans_encoder_forward.1} parent=5 // pred_fallthru
        _
      %p425 = scmp.lt.s32.totalorder %s29, 2
      // Predicated region
      $region21: #{trans_encoder_forward.1} parent=5 // pred_check
        %p426 = pneg %p425
      $region22: #{trans_encoder_forward.1} parent=5 // pred_check_branch
        %428 = sbr.rel (%p426) target = $region24
      $region23: #{trans_encoder_forward.1} parent=5 // pred_region
        // Predicated region
        $region25: #{trans_encoder_forward.1} parent=23 // pred_check
          %p429 = pneg %p91
        $region26: #{trans_encoder_forward.1} parent=23 // pred_check_branch
          %431 = sbr.rel (%p429) target = $region28
        $region27: #{trans_encoder_forward.1} parent=23 // pred_region
          %s432 = sand.u32 %s81, 1
          %s433 = scalar_lea.sflag [#allocation3], %s432
          %s434 = sand.u32 %s81, 1
          %s435 = smul.addr %s434, 384
          %s436 = scalar_lea.vmem [#allocation2], %s435
          %s438 = ssub.s32 6144, 6144
          %439 = vsyncadd %s433, %s438
          %s440 = smul.addr %s29, 48
          %s441 = smul.addr %s440, 128
          %s442 = scalar_lea.hbm %s2, %s441
          %s443 = sshll.u32 %s436, 4
          %s444 = int_to_ptr.vmem [resolvable:$true] %s443
          %449 = dma.hbm_to_vmem [thread:$0]  %s442, 6144, %s444, %s433, 384, 384, 24
        $region28: #{trans_encoder_forward.1} parent=23 // pred_fallthru
          _
        // Predicated region
        $region29: #{trans_encoder_forward.1} parent=23 // pred_check
          %p450 = pneg %p117
        $region30: #{trans_encoder_forward.1} parent=23 // pred_check_branch
          %452 = sbr.rel (%p450) target = $region32
        $region31: #{trans_encoder_forward.1} parent=23 // pred_region
          %p453 = scmp.lt.s32.totalorder %s29, 1
          %s454 = scalar_select %p453, %s29, 1
          %s455 = smul.addr %s454, 3
          %s456 = scalar_lea.vmem %s3, %s455
        $region32: #{trans_encoder_forward.1} parent=23 // pred_fallthru
          _
        // Predicated region
        $region33: #{trans_encoder_forward.1} parent=23 // pred_check
          %p457 = pneg %p143
        $region34: #{trans_encoder_forward.1} parent=23 // pred_check_branch
          %459 = sbr.rel (%p457) target = $region36
        $region35: #{trans_encoder_forward.1} parent=23 // pred_region
          %s460 = sand.u32 %s29, 1
          %s461 = scalar_lea.sflag [#allocation5], %s460
          %s462 = sand.u32 %s133, 1
          %s463 = smul.addr %s462, 128
          %s464 = scalar_lea.vmem [#allocation4], %s463
          %s466 = ssub.s32 2048, 2048
          %467 = vsyncadd %s461, %s466
          %s468 = smul.addr %s29, 16
          %s469 = smul.addr %s468, 128
          %s470 = scalar_lea.hbm %s4, %s469
          %s471 = sshll.u32 %s464, 4
          %s472 = int_to_ptr.vmem [resolvable:$true] %s471
          %477 = dma.hbm_to_vmem [thread:$0]  %s470, 2048, %s472, %s461, 128, 128, 8
        $region36: #{trans_encoder_forward.1} parent=23 // pred_fallthru
          _
        // Predicated region
        $region37: #{trans_encoder_forward.1} parent=23 // pred_check
          %p478 = pneg %p169
        $region38: #{trans_encoder_forward.1} parent=23 // pred_check_branch
          %480 = sbr.rel (%p478) target = $region40
        $region39: #{trans_encoder_forward.1} parent=23 // pred_region
          %p481 = scmp.lt.s32.totalorder %s29, 1
          %s482 = scalar_select %p481, %s29, 1
          %s483 = scalar_lea.vmem %s5, %s482
        $region40: #{trans_encoder_forward.1} parent=23 // pred_fallthru
          _
        // Predicated region
        $region41: #{trans_encoder_forward.1} parent=23 // pred_check
          %p484 = pneg %p195
        $region42: #{trans_encoder_forward.1} parent=23 // pred_check_branch
          %486 = sbr.rel (%p484) target = $region44
        $region43: #{trans_encoder_forward.1} parent=23 // pred_region
          %p487 = scmp.lt.s32.totalorder %s29, 1
          %s488 = scalar_select %p487, %s29, 1
          %s489 = scalar_lea.vmem %s6, %s488
        $region44: #{trans_encoder_forward.1} parent=23 // pred_fallthru
          _
        // Predicated region
        $region45: #{trans_encoder_forward.1} parent=23 // pred_check
          %p490 = pneg %p221
        $region46: #{trans_encoder_forward.1} parent=23 // pred_check_branch
          %492 = sbr.rel (%p490) target = $region48
        $region47: #{trans_encoder_forward.1} parent=23 // pred_region
          %p493 = scmp.lt.s32.totalorder %s29, 1
          %s494 = scalar_select %p493, %s29, 1
          %s495 = scalar_lea.vmem %s7, %s494
        $region48: #{trans_encoder_forward.1} parent=23 // pred_fallthru
          _
        // Predicated region
        $region49: #{trans_encoder_forward.1} parent=23 // pred_check
          %p496 = pneg %p247
        $region50: #{trans_encoder_forward.1} parent=23 // pred_check_branch
          %498 = sbr.rel (%p496) target = $region52
        $region51: #{trans_encoder_forward.1} parent=23 // pred_region
          %s499 = sand.u32 %s29, 1
          %s500 = scalar_lea.sflag [#allocation5], %s499
          %s501 = sand.u32 %s237, 1
          %s502 = smul.addr %s501, 256
          %s503 = scalar_lea.vmem [#allocation6], %s502
          %s505 = ssub.s32 4096, 4096
          %506 = vsyncadd %s500, %s505
          %s507 = smul.addr %s29, 32
          %s508 = smul.addr %s507, 128
          %s509 = scalar_lea.hbm %s8, %s508
          %s510 = sshll.u32 %s503, 4
          %s511 = int_to_ptr.vmem [resolvable:$true] %s510
          %516 = dma.hbm_to_vmem [thread:$0]  %s509, 4096, %s511, %s500, 256, 256, 16
        $region52: #{trans_encoder_forward.1} parent=23 // pred_fallthru
          _
        // Predicated region
        $region53: #{trans_encoder_forward.1} parent=23 // pred_check
          %p517 = pneg %p273
        $region54: #{trans_encoder_forward.1} parent=23 // pred_check_branch
          %519 = sbr.rel (%p517) target = $region56
        $region55: #{trans_encoder_forward.1} parent=23 // pred_region
          %p520 = scmp.lt.s32.totalorder %s29, 1
          %s521 = scalar_select %p520, %s29, 1
          %s522 = smul.addr %s521, 2
          %s523 = scalar_lea.vmem %s9, %s522
        $region56: #{trans_encoder_forward.1} parent=23 // pred_fallthru
          _
        // Predicated region
        $region57: #{trans_encoder_forward.1} parent=23 // pred_check
          %p524 = pneg %p299
        $region58: #{trans_encoder_forward.1} parent=23 // pred_check_branch
          %526 = sbr.rel (%p524) target = $region60
        $region59: #{trans_encoder_forward.1} parent=23 // pred_region
          %s527 = sand.u32 %s289, 1
          %s528 = scalar_lea.sflag [#allocation8], %s527
          %s529 = sand.u32 %s289, 1
          %s530 = smul.addr %s529, 256
          %s531 = scalar_lea.vmem [#allocation7], %s530
          %s533 = ssub.s32 4096, 4096
          %534 = vsyncadd %s528, %s533
          %s535 = smul.addr %s29, 32
          %s536 = smul.addr %s535, 128
          %s537 = scalar_lea.hbm %s10, %s536
          %s538 = sshll.u32 %s531, 4
          %s539 = int_to_ptr.vmem [resolvable:$true] %s538
          %544 = dma.hbm_to_vmem [thread:$0]  %s537, 4096, %s539, %s528, 128, 128, 8
        $region60: #{trans_encoder_forward.1} parent=23 // pred_fallthru
          _
        // Predicated region
        $region61: #{trans_encoder_forward.1} parent=23 // pred_check
          %p545 = pneg %p325
        $region62: #{trans_encoder_forward.1} parent=23 // pred_check_branch
          %547 = sbr.rel (%p545) target = $region64
        $region63: #{trans_encoder_forward.1} parent=23 // pred_region
          %p548 = scmp.lt.s32.totalorder %s29, 1
          %s549 = scalar_select %p548, %s29, 1
          %s550 = scalar_lea.vmem %s11, %s549
        $region64: #{trans_encoder_forward.1} parent=23 // pred_fallthru
          _
        // Predicated region
        $region65: #{trans_encoder_forward.1} parent=23 // pred_check
          %p551 = pneg %p351
        $region66: #{trans_encoder_forward.1} parent=23 // pred_check_branch
          %553 = sbr.rel (%p551) target = $region68
        $region67: #{trans_encoder_forward.1} parent=23 // pred_region
          %p554 = scmp.lt.s32.totalorder %s29, 1
          %s555 = scalar_select %p554, %s29, 1
          %s556 = scalar_lea.vmem %s12, %s555
        $region68: #{trans_encoder_forward.1} parent=23 // pred_fallthru
          _
        // Predicated region
        $region69: #{trans_encoder_forward.1} parent=23 // pred_check
          %p557 = pneg %p377
        $region70: #{trans_encoder_forward.1} parent=23 // pred_check_branch
          %559 = sbr.rel (%p557) target = $region72
        $region71: #{trans_encoder_forward.1} parent=23 // pred_region
          %p560 = scmp.lt.s32.totalorder %s29, 1
          %s561 = scalar_select %p560, %s29, 1
          %s562 = scalar_lea.vmem %s13, %s561
        $region72: #{trans_encoder_forward.1} parent=23 // pred_fallthru
          _
      $region24: #{trans_encoder_forward.1} parent=5 // pred_fallthru
        _
      %p563 = scmp.le.s32.totalorder 1, %s29
      %p564 = scmp.lt.s32.totalorder %s29, 3
      %p565 = pnand %p563, %p564
      %p566 = pneg %p565
      // Predicated region
      $region73: #{trans_encoder_forward.1} parent=5 // pred_check
        _
      $region74: #{trans_encoder_forward.1} parent=5 // pred_check_branch
        %568 = sbr.rel (%p565) target = $region76
      $region75: #{trans_encoder_forward.1} parent=5 // pred_region
        %s569 = ssub.s32 %s29, 1
        %s570 = sand.u32 %s84, 1
        %s571 = scalar_lea.sflag [#allocation3], %s570
        %s572 = sand.u32 %s84, 1
        %s573 = smul.addr %s572, 384
        %s574 = scalar_lea.vmem [#allocation2], %s573
        // Predicated region
        $region77: #{trans_encoder_forward.1} parent=75 // pred_check
          %p575 = pneg %p97
        $region78: #{trans_encoder_forward.1} parent=75 // pred_check_branch
          %577 = sbr.rel (%p575) target = $region80
        $region79: #{trans_encoder_forward.1} parent=75 // pred_region
          %578 = dma.done %s571, 6144
        $region80: #{trans_encoder_forward.1} parent=75 // pred_fallthru
          _
        %s579 = sand.u32 %s34, 1
        %s580 = scalar_lea.sflag [#allocation5], %s579
        %s581 = sand.u32 %s136, 1
        %s582 = smul.addr %s581, 128
        %s583 = scalar_lea.vmem [#allocation4], %s582
        // Predicated region
        $region81: #{trans_encoder_forward.1} parent=75 // pred_check
          %p584 = pneg %p149
        $region82: #{trans_encoder_forward.1} parent=75 // pred_check_branch
          %586 = sbr.rel (%p584) target = $region84
        $region83: #{trans_encoder_forward.1} parent=75 // pred_region
          %587 = dma.done %s580, 2048
        $region84: #{trans_encoder_forward.1} parent=75 // pred_fallthru
          _
        %s588 = sand.u32 %s34, 1
        %s589 = scalar_lea.sflag [#allocation5], %s588
        %s590 = sand.u32 %s240, 1
        %s591 = smul.addr %s590, 256
        %s592 = scalar_lea.vmem [#allocation6], %s591
        // Predicated region
        $region85: #{trans_encoder_forward.1} parent=75 // pred_check
          %p593 = pneg %p253
        $region86: #{trans_encoder_forward.1} parent=75 // pred_check_branch
          %595 = sbr.rel (%p593) target = $region88
        $region87: #{trans_encoder_forward.1} parent=75 // pred_region
          %596 = dma.done %s589, 4096
        $region88: #{trans_encoder_forward.1} parent=75 // pred_fallthru
          _
        %s597 = sand.u32 %s292, 1
        %s598 = scalar_lea.sflag [#allocation8], %s597
        %s599 = sand.u32 %s292, 1
        %s600 = smul.addr %s599, 256
        %s601 = scalar_lea.vmem [#allocation7], %s600
        // Predicated region
        $region89: #{trans_encoder_forward.1} parent=75 // pred_check
          %p602 = pneg %p305
        $region90: #{trans_encoder_forward.1} parent=75 // pred_check_branch
          %604 = sbr.rel (%p602) target = $region92
        $region91: #{trans_encoder_forward.1} parent=75 // pred_region
          %605 = dma.done %s598, 4096
        $region92: #{trans_encoder_forward.1} parent=75 // pred_fallthru
          _
        %p606 = pneg %p50
        %p607 = pneg %p47
        %p608 = pneg %p71
        %p609 = pneg %p68
        %s610 = sand.u32 %s84, 1
        %s611 = scalar_lea.sflag [#allocation3], %s610
        %s612 = sand.u32 %s84, 1
        %s613 = smul.addr %s612, 384
        %s614 = scalar_lea.vmem [#allocation2], %s613
        %p615 = pneg %p97
        %p616 = pneg %p94
        %p617 = scmp.lt.s32.totalorder %s34, 1
        %s618 = scalar_select %p617, %s34, 1
        %s619 = smul.addr %s618, 3
        %s620 = scalar_lea.vmem %s3, %s619
        %p621 = pneg %p123
        %p622 = pneg %p120
        %s623 = sand.u32 %s34, 1
        %s624 = scalar_lea.sflag [#allocation5], %s623
        %s625 = sand.u32 %s136, 1
        %s626 = smul.addr %s625, 128
        %s627 = scalar_lea.vmem [#allocation4], %s626
        %p628 = pneg %p149
        %p629 = pneg %p146
        %p630 = scmp.lt.s32.totalorder %s34, 1
        %s631 = scalar_select %p630, %s34, 1
        %s632 = scalar_lea.vmem %s5, %s631
        %p633 = pneg %p175
        %p634 = pneg %p172
        %p635 = scmp.lt.s32.totalorder %s34, 1
        %s636 = scalar_select %p635, %s34, 1
        %s637 = scalar_lea.vmem %s6, %s636
        %p638 = pneg %p201
        %p639 = pneg %p198
        %p640 = scmp.lt.s32.totalorder %s34, 1
        %s641 = scalar_select %p640, %s34, 1
        %s642 = scalar_lea.vmem %s7, %s641
        %p643 = pneg %p227
        %p644 = pneg %p224
        %s645 = sand.u32 %s34, 1
        %s646 = scalar_lea.sflag [#allocation5], %s645
        %s647 = sand.u32 %s240, 1
        %s648 = smul.addr %s647, 256
        %s649 = scalar_lea.vmem [#allocation6], %s648
        %p650 = pneg %p253
        %p651 = pneg %p250
        %p652 = scmp.lt.s32.totalorder %s34, 1
        %s653 = scalar_select %p652, %s34, 1
        %s654 = smul.addr %s653, 2
        %s655 = scalar_lea.vmem %s9, %s654
        %p656 = pneg %p279
        %p657 = pneg %p276
        %s658 = sand.u32 %s292, 1
        %s659 = scalar_lea.sflag [#allocation8], %s658
        %s660 = sand.u32 %s292, 1
        %s661 = smul.addr %s660, 256
        %s662 = scalar_lea.vmem [#allocation7], %s661
        %p663 = pneg %p305
        %p664 = pneg %p302
        %p665 = scmp.lt.s32.totalorder %s34, 1
        %s666 = scalar_select %p665, %s34, 1
        %s667 = scalar_lea.vmem %s11, %s666
        %p668 = pneg %p331
        %p669 = pneg %p328
        %p670 = scmp.lt.s32.totalorder %s34, 1
        %s671 = scalar_select %p670, %s34, 1
        %s672 = scalar_lea.vmem %s12, %s671
        %p673 = pneg %p357
        %p674 = pneg %p354
        %p675 = scmp.lt.s32.totalorder %s34, 1
        %s676 = scalar_select %p675, %s34, 1
        %s677 = scalar_lea.vmem %s13, %s676
        %p678 = pneg %p383
        %p679 = pneg %p380
        %p680 = pneg %p404
        %p681 = pneg %p401
        %p682 = scmp.lt.s32.totalorder %s34, 1
        %s683 = scalar_select %p682, %s34, 1
        %s684 = smul.addr %s683, 3
        %s685 = scalar_lea.vmem %s3, %s684
        %p686 = scmp.lt.s32.totalorder %s34, 1
        %s687 = scalar_select %p686, %s34, 1
        %s688 = scalar_lea.vmem %s5, %s687
        %p689 = scmp.lt.s32.totalorder %s34, 1
        %s690 = scalar_select %p689, %s34, 1
        %s691 = scalar_lea.vmem %s6, %s690
        %p692 = scmp.lt.s32.totalorder %s34, 1
        %s693 = scalar_select %p692, %s34, 1
        %s694 = scalar_lea.vmem %s7, %s693
        %p695 = scmp.lt.s32.totalorder %s34, 1
        %s696 = scalar_select %p695, %s34, 1
        %s697 = smul.addr %s696, 2
        %s698 = scalar_lea.vmem %s9, %s697
        %p699 = scmp.lt.s32.totalorder %s34, 1
        %s700 = scalar_select %p699, %s34, 1
        %s701 = scalar_lea.vmem %s11, %s700
        %p702 = scmp.lt.s32.totalorder %s34, 1
        %s703 = scalar_select %p702, %s34, 1
        %s704 = scalar_lea.vmem %s12, %s703
        %p705 = scmp.lt.s32.totalorder %s34, 1
        %s706 = scalar_select %p705, %s34, 1
        %s707 = scalar_lea.vmem %s13, %s706
        %p708 = scmp.eq.s32.totalorder %s34, 0
        // Predicated region
        $region93: #{trans_encoder_forward.1} parent=75 // pred_check
          %p709 = pneg %p708
        $region94: #{trans_encoder_forward.1} parent=75 // pred_check_branch
          %711 = sbr.rel (%p709) target = $region96
        $region95: #{trans_encoder_forward.1} parent=75 // pred_region
          %v712 = vld [vmem:[%s0] sm:$0xff]
          %v713 = vld [vmem:[%s0 + $0x8] sm:$0xff]
          %v714 = vmul.f32 %v712, 11.313708
          %v715 = vmul.f32 %v713, 11.313708
          %v716 = vld [vmem:[%s1] sm:$0xff]
          %v717 = vadd.f32 %v714, %v716
          %v718 = vadd.f32 %v715, %v716
          %719 = vst [vmem:[%s14] sm:$0xff] %v717
          %720 = vst [vmem:[%s14 + $0x8] sm:$0xff] %v718
        $region96: #{trans_encoder_forward.1} parent=75 // pred_fallthru
          _
        %v721 = vld [vmem:[%s14] sm:$0xff]
        %v722 = vld [vmem:[%s14 + $0x8] sm:$0xff]
        %v723 = vld [vmem:[%s574] sm:$0xff]
        %v724 = vld [vmem:[%s574 + $0x8] sm:$0xff]
        %v725 = vld [vmem:[%s574 + $0x10] sm:$0xff]
        %v726 = vld [vmem:[%s574 + $0x18] sm:$0xff]
        %v727 = vld [vmem:[%s574 + $0x20] sm:$0xff]
        %v728 = vld [vmem:[%s574 + $0x28] sm:$0xff]
        %v729 = vld [vmem:[%s574 + $0x30] sm:$0xff]
        %v730 = vld [vmem:[%s574 + $0x38] sm:$0xff]
        %v731 = vld [vmem:[%s574 + $0x40] sm:$0xff]
        %v732 = vld [vmem:[%s574 + $0x48] sm:$0xff]
        %v733 = vld [vmem:[%s574 + $0x50] sm:$0xff]
        %v734 = vld [vmem:[%s574 + $0x58] sm:$0xff]
        %v735 = vld [vmem:[%s574 + $0x60] sm:$0xff]
        %v736 = vld [vmem:[%s574 + $0x68] sm:$0xff]
        %v737 = vld [vmem:[%s574 + $0x70] sm:$0xff]
        %v738 = vld [vmem:[%s574 + $0x78] sm:$0xff]
        %v739 = vld [vmem:[%s574 + $0x80] sm:$0xff]
        %v740 = vld [vmem:[%s574 + $0x88] sm:$0xff]
        %v741 = vld [vmem:[%s574 + $0x90] sm:$0xff]
        %v742 = vld [vmem:[%s574 + $0x98] sm:$0xff]
        %v743 = vld [vmem:[%s574 + $0xa0] sm:$0xff]
        %v744 = vld [vmem:[%s574 + $0xa8] sm:$0xff]
        %v745 = vld [vmem:[%s574 + $0xb0] sm:$0xff]
        %v746 = vld [vmem:[%s574 + $0xb8] sm:$0xff]
        %v747 = vld [vmem:[%s574 + $0xc0] sm:$0xff]
        %v748 = vld [vmem:[%s574 + $0xc8] sm:$0xff]
        %v749 = vld [vmem:[%s574 + $0xd0] sm:$0xff]
        %v750 = vld [vmem:[%s574 + $0xd8] sm:$0xff]
        %v751 = vld [vmem:[%s574 + $0xe0] sm:$0xff]
        %v752 = vld [vmem:[%s574 + $0xe8] sm:$0xff]
        %v753 = vld [vmem:[%s574 + $0xf0] sm:$0xff]
        %v754 = vld [vmem:[%s574 + $0xf8] sm:$0xff]
        %v755 = vld [vmem:[%s574 + $0x100] sm:$0xff]
        %v756 = vld [vmem:[%s574 + $0x108] sm:$0xff]
        %v757 = vld [vmem:[%s574 + $0x110] sm:$0xff]
        %v758 = vld [vmem:[%s574 + $0x118] sm:$0xff]
        %v759 = vld [vmem:[%s574 + $0x120] sm:$0xff]
        %v760 = vld [vmem:[%s574 + $0x128] sm:$0xff]
        %v761 = vld [vmem:[%s574 + $0x130] sm:$0xff]
        %v762 = vld [vmem:[%s574 + $0x138] sm:$0xff]
        %v763 = vld [vmem:[%s574 + $0x140] sm:$0xff]
        %v764 = vld [vmem:[%s574 + $0x148] sm:$0xff]
        %v765 = vld [vmem:[%s574 + $0x150] sm:$0xff]
        %v766 = vld [vmem:[%s574 + $0x158] sm:$0xff]
        %v767 = vld [vmem:[%s574 + $0x160] sm:$0xff]
        %v768 = vld [vmem:[%s574 + $0x168] sm:$0xff]
        %v769 = vld [vmem:[%s574 + $0x170] sm:$0xff]
        %v770 = vld [vmem:[%s574 + $0x178] sm:$0xff]
        %v771 = vld [vmem:[%s685] sm:$0x7]
        %v773 = vlaneseq
        %v774 = vshrl.u32 %v773, 7
        %v775 = vsub.s32 0, %v774
        %v776 = vrot.slane %v771, %v775
        %v777 = vlaneseq
        %v778 = vshrl.u32 %v777, 7
        %v779 = vsub.s32 1, %v778
        %v780 = vrot.slane %v771, %v779
        %v781 = vlaneseq
        %v782 = vshrl.u32 %v781, 7
        %v783 = vsub.s32 2, %v782
        %v784 = vrot.slane %v771, %v783
        %788 = vmatprep.subr.mxu0 %v724
        %789 = vmatpush1.msra.mxu0 %v723
        %790 = vmatprep.subr.mxu0 %v727
        %791 = vmatpush1.msra.mxu0 %v726
        %792 = vmatprep.subr.mxu0 %v730
        %793 = vmatpush1.msra.mxu0 %v729
        %794 = vmatprep.subr.mxu0 %v733
        %795 = vmatpush1.msra.mxu0 %v732
        %796 = vmatprep.subr.mxu0 %v736
        %797 = vmatpush1.msra.mxu0 %v735
        %798 = vmatprep.subr.mxu0 %v739
        %799 = vmatpush1.msra.mxu0 %v738
        %800 = vmatprep.subr.mxu0 %v742
        %801 = vmatpush1.msra.mxu0 %v741
        %802 = vmatprep.subr.mxu0 %v745
        %803 = vmatpush1.msra.mxu0 %v744
        %804 = vmatprep.subr.mxu0 %v748
        %805 = vmatpush1.msra.mxu0 %v747
        %806 = vmatprep.subr.mxu0 %v751
        %807 = vmatpush1.msra.mxu0 %v750
        %808 = vmatprep.subr.mxu0 %v754
        %809 = vmatpush1.msra.mxu0 %v753
        %810 = vmatprep.subr.mxu0 %v757
        %811 = vmatpush1.msra.mxu0 %v756
        %812 = vmatprep.subr.mxu0 %v760
        %813 = vmatpush1.msra.mxu0 %v759
        %814 = vmatprep.subr.mxu0 %v763
        %815 = vmatpush1.msra.mxu0 %v762
        %816 = vmatprep.subr.mxu0 %v766
        %817 = vmatpush1.msra.mxu0 %v765
        %818 = vmatprep.subr.mxu0 %v769
        %819 = vmatpush1.msra.mxu0 %v768
        %820 = vmatprep.subr.mxu0 0.0
        %821 = vmatpush1.msra.mxu0 0.0
        %822 = vmatprep.subr.mxu0 0.0
        %823 = vmatpush1.msra.mxu0 0.0
        %824 = vmatprep.subr.mxu0 0.0
        %825 = vmatpush1.msra.mxu0 0.0
        %826 = vmatprep.subr.mxu0 0.0
        %827 = vmatpush1.msra.mxu0 0.0
        %828 = vmatprep.subr.mxu0 0.0
        %829 = vmatpush1.msra.mxu0 0.0
        %830 = vmatprep.subr.mxu0 0.0
        %831 = vmatpush1.msra.mxu0 0.0
        %832 = vmatprep.subr.mxu0 0.0
        %833 = vmatpush1.msra.mxu0 0.0
        %834 = vmatprep.subr.mxu0 0.0
        %835 = vmatpush1.msra.mxu0 0.0
        %836 = vmatprep.subr.mxu0 0.0
        %837 = vmatpush1.msra.mxu0 0.0
        %838 = vmatprep.subr.mxu0 0.0
        %839 = vmatpush1.msra.mxu0 0.0
        %840 = vmatprep.subr.mxu0 0.0
        %841 = vmatpush1.msra.mxu0 0.0
        %842 = vmatprep.subr.mxu0 0.0
        %843 = vmatpush1.msra.mxu0 0.0
        %844 = vmatprep.subr.mxu0 0.0
        %845 = vmatpush1.msra.mxu0 0.0
        %846 = vmatprep.subr.mxu0 0.0
        %847 = vmatpush1.msra.mxu0 0.0
        %848 = vmatprep.subr.mxu0 0.0
        %849 = vmatpush1.msra.mxu0 0.0
        %850 = vmatprep.subr.mxu0 0.0
        %851 = vmatpush1.msra.mxu0 0.0
        %852 = vmatprep.mubr.f32.mxu0 0.0
        %853 = vmatmul.mubr.f32.gmra.mrb[0].mxu0 %v721
        %v854 = vpop.f32.mrb[0].mxu0
        %v855 = vadd.f32 %v776, %v854
        %v856 = vpop.f32.mrb[0].mxu0
        %v857 = vadd.f32 %v780, %v856
        %858 = vmatprep.mubr.f32.mxu0 0.0
        %859 = vmatmul.mubr.f32.gmra.mrb[0].mxu0 %v722
        %v860 = vpop.f32.mrb[0].mxu0
        %v861 = vadd.f32 %v776, %v860
        %v862 = vpop.f32.mrb[0].mxu0
        %v863 = vadd.f32 %v780, %v862
        %864 = vdwg.mxu0
        %865 = vmatprep.subr.mxu0 0.0
        %866 = vmatpush1.msra.mxu0 %v725
        %867 = vmatprep.subr.mxu0 0.0
        %868 = vmatpush1.msra.mxu0 %v728
        %869 = vmatprep.subr.mxu0 0.0
        %870 = vmatpush1.msra.mxu0 %v731
        %871 = vmatprep.subr.mxu0 0.0
        %872 = vmatpush1.msra.mxu0 %v734
        %873 = vmatprep.subr.mxu0 0.0
        %874 = vmatpush1.msra.mxu0 %v737
        %875 = vmatprep.subr.mxu0 0.0
        %876 = vmatpush1.msra.mxu0 %v740
        %877 = vmatprep.subr.mxu0 0.0
        %878 = vmatpush1.msra.mxu0 %v743
        %879 = vmatprep.subr.mxu0 0.0
        %880 = vmatpush1.msra.mxu0 %v746
        %881 = vmatprep.subr.mxu0 0.0
        %882 = vmatpush1.msra.mxu0 %v749
        %883 = vmatprep.subr.mxu0 0.0
        %884 = vmatpush1.msra.mxu0 %v752
        %885 = vmatprep.subr.mxu0 0.0
        %886 = vmatpush1.msra.mxu0 %v755
        %887 = vmatprep.subr.mxu0 0.0
        %888 = vmatpush1.msra.mxu0 %v758
        %889 = vmatprep.subr.mxu0 0.0
        %890 = vmatpush1.msra.mxu0 %v761
        %891 = vmatprep.subr.mxu0 0.0
        %892 = vmatpush1.msra.mxu0 %v764
        %893 = vmatprep.subr.mxu0 0.0
        %894 = vmatpush1.msra.mxu0 %v767
        %895 = vmatprep.subr.mxu0 0.0
        %896 = vmatpush1.msra.mxu0 %v770
        %897 = vmatprep.subr.mxu0 0.0
        %898 = vmatpush1.msra.mxu0 0.0
        %899 = vmatprep.subr.mxu0 0.0
        %900 = vmatpush1.msra.mxu0 0.0
        %901 = vmatprep.subr.mxu0 0.0
        %902 = vmatpush1.msra.mxu0 0.0
        %903 = vmatprep.subr.mxu0 0.0
        %904 = vmatpush1.msra.mxu0 0.0
        %905 = vmatprep.subr.mxu0 0.0
        %906 = vmatpush1.msra.mxu0 0.0
        %907 = vmatprep.subr.mxu0 0.0
        %908 = vmatpush1.msra.mxu0 0.0
        %909 = vmatprep.subr.mxu0 0.0
        %910 = vmatpush1.msra.mxu0 0.0
        %911 = vmatprep.subr.mxu0 0.0
        %912 = vmatpush1.msra.mxu0 0.0
        %913 = vmatprep.subr.mxu0 0.0
        %914 = vmatpush1.msra.mxu0 0.0
        %915 = vmatprep.subr.mxu0 0.0
        %916 = vmatpush1.msra.mxu0 0.0
        %917 = vmatprep.subr.mxu0 0.0
        %918 = vmatpush1.msra.mxu0 0.0
        %919 = vmatprep.subr.mxu0 0.0
        %920 = vmatpush1.msra.mxu0 0.0
        %921 = vmatprep.subr.mxu0 0.0
        %922 = vmatpush1.msra.mxu0 0.0
        %923 = vmatprep.subr.mxu0 0.0
        %924 = vmatpush1.msra.mxu0 0.0
        %925 = vmatprep.subr.mxu0 0.0
        %926 = vmatpush1.msra.mxu0 0.0
        %927 = vmatprep.subr.mxu0 0.0
        %928 = vmatpush1.msra.mxu0 0.0
        %929 = vmatprep.mubr.f32.mxu0 0.0
        %930 = vmatmul.mubr.f32.gmra.mrb[0].mxu0 %v721
        %v931 = vpop.f32.mrb[0].mxu0
        %v932 = vadd.f32 %v784, %v931
        %v933 = vpop.f32.mrb[0].mxu0
        %934 = vmatprep.mubr.f32.mxu0 0.0
        %935 = vmatmul.mubr.f32.gmra.mrb[0].mxu0 %v722
        %v936 = vpop.f32.mrb[0].mxu0
        %v937 = vadd.f32 %v784, %v936
        %v938 = vpop.f32.mrb[0].mxu0
        %939 = vdwg.mxu0
        %v940 = vmul.f32 %v855, 0.17677669
        %vm941 = vcmask 261120
        %v943 = vsel %vm941, %v940, 0
        %v946 = vsel %vm941, %v857, 0
        %948 = vmatprep.subr.mxu0 0.0
        %949 = vmatpush1.xpose.msra.mxu0 %v946
        %950 = vmatprep.subr.mxu0 0.0
        %951 = vmatpush1.xpose.msra.mxu0 0.0
        %952 = vmatprep.subr.mxu0 0.0
        %953 = vmatpush1.xpose.msra.mxu0 0.0
        %954 = vmatprep.subr.mxu0 0.0
        %955 = vmatpush1.xpose.msra.mxu0 0.0
        %956 = vmatprep.subr.mxu0 0.0
        %957 = vmatpush1.xpose.msra.mxu0 0.0
        %958 = vmatprep.subr.mxu0 0.0
        %959 = vmatpush1.xpose.msra.mxu0 0.0
        %960 = vmatprep.subr.mxu0 0.0
        %961 = vmatpush1.xpose.msra.mxu0 0.0
        %962 = vmatprep.subr.mxu0 0.0
        %963 = vmatpush1.xpose.msra.mxu0 0.0
        %964 = vmatprep.subr.mxu0 0.0
        %965 = vmatpush1.xpose.msra.mxu0 0.0
        %966 = vmatprep.subr.mxu0 0.0
        %967 = vmatpush1.xpose.msra.mxu0 0.0
        %968 = vmatprep.subr.mxu0 0.0
        %969 = vmatpush1.xpose.msra.mxu0 0.0
        %970 = vmatprep.subr.mxu0 0.0
        %971 = vmatpush1.xpose.msra.mxu0 0.0
        %972 = vmatprep.subr.mxu0 0.0
        %973 = vmatpush1.xpose.msra.mxu0 0.0
        %974 = vmatprep.subr.mxu0 0.0
        %975 = vmatpush1.xpose.msra.mxu0 0.0
        %976 = vmatprep.subr.mxu0 0.0
        %977 = vmatpush1.xpose.msra.mxu0 0.0
        %978 = vmatprep.subr.mxu0 0.0
        %979 = vmatpush1.xpose.msra.mxu0 0.0
        %980 = vmatprep.subr.mxu0 0.0
        %981 = vmatpush1.xpose.msra.mxu0 0.0
        %982 = vmatprep.subr.mxu0 0.0
        %983 = vmatpush1.xpose.msra.mxu0 0.0
        %984 = vmatprep.subr.mxu0 0.0
        %985 = vmatpush1.xpose.msra.mxu0 0.0
        %986 = vmatprep.subr.mxu0 0.0
        %987 = vmatpush1.xpose.msra.mxu0 0.0
        %988 = vmatprep.subr.mxu0 0.0
        %989 = vmatpush1.xpose.msra.mxu0 0.0
        %990 = vmatprep.subr.mxu0 0.0
        %991 = vmatpush1.xpose.msra.mxu0 0.0
        %992 = vmatprep.subr.mxu0 0.0
        %993 = vmatpush1.xpose.msra.mxu0 0.0
        %994 = vmatprep.subr.mxu0 0.0
        %995 = vmatpush1.xpose.msra.mxu0 0.0
        %996 = vmatprep.subr.mxu0 0.0
        %997 = vmatpush1.xpose.msra.mxu0 0.0
        %998 = vmatprep.subr.mxu0 0.0
        %999 = vmatpush1.xpose.msra.mxu0 0.0
        %1000 = vmatprep.subr.mxu0 0.0
        %1001 = vmatpush1.xpose.msra.mxu0 0.0
        %1002 = vmatprep.subr.mxu0 0.0
        %1003 = vmatpush1.xpose.msra.mxu0 0.0
        %1004 = vmatprep.subr.mxu0 0.0
        %1005 = vmatpush1.xpose.msra.mxu0 0.0
        %1006 = vmatprep.subr.mxu0 0.0
        %1007 = vmatpush1.xpose.msra.mxu0 0.0
        %1008 = vmatprep.subr.mxu0 0.0
        %1009 = vmatpush1.xpose.msra.mxu0 0.0
        %1010 = vmatprep.subr.mxu0 0.0
        %1011 = vmatpush1.xpose.msra.mxu0 0.0
        %1012 = vmatprep.mubr.f32.mxu0 0.0
        %1013 = vmatmul.mubr.f32.gmra.mrb[0].mxu0 %v943
        %v1014 = vpop.f32.mrb[0].mxu0
        %v1015 = vadd.f32 0.0, %v1014
        %v1016 = vpop.f32.mrb[0].mxu0
        %1017 = vdwg.mxu0
        %vm1018 = vcmask 64512
        %v1019 = vsel %vm1018, %v1015, -inf
        %1020 = vmax.xlane.f32.xlu0 %v1019
        %v1021 = vpop.xlane.xlu0 %1020
        %v1022 = vsub.f32 %v1015, %v1021
        %v1023 = vmul.f32 %v1022, 1.442695
        %v1024 = vpow.pop %v1023
        %v1025 = vsel %vm1018, %v1024, 0.0
        %1026 = vadd.xlane.f32.xlu0 %v1025
        %v1027 = vpop.xlane.xlu0 %1026
        %v1028 = vrcp.pop %v1027
        %v1029 = vmul.f32 %v1024, %v1028
        %v1031 = vsel %vm1018, %v1029, 0
        %1033 = vmatprep.subr.mxu0 0.0
        %1034 = vmatpush1.msra.mxu0 %v932
        %1035 = vmatprep.subr.mxu0 0.0
        %1036 = vmatpush1.msra.mxu0 0.0
        %1037 = vmatprep.subr.mxu0 0.0
        %1038 = vmatpush1.msra.mxu0 0.0
        %1039 = vmatprep.subr.mxu0 0.0
        %1040 = vmatpush1.msra.mxu0 0.0
        %1041 = vmatprep.subr.mxu0 0.0
        %1042 = vmatpush1.msra.mxu0 0.0
        %1043 = vmatprep.subr.mxu0 0.0
        %1044 = vmatpush1.msra.mxu0 0.0
        %1045 = vmatprep.subr.mxu0 0.0
        %1046 = vmatpush1.msra.mxu0 0.0
        %1047 = vmatprep.subr.mxu0 0.0
        %1048 = vmatpush1.msra.mxu0 0.0
        %1049 = vmatprep.subr.mxu0 0.0
        %1050 = vmatpush1.msra.mxu0 0.0
        %1051 = vmatprep.subr.mxu0 0.0
        %1052 = vmatpush1.msra.mxu0 0.0
        %1053 = vmatprep.subr.mxu0 0.0
        %1054 = vmatpush1.msra.mxu0 0.0
        %1055 = vmatprep.subr.mxu0 0.0
        %1056 = vmatpush1.msra.mxu0 0.0
        %1057 = vmatprep.subr.mxu0 0.0
        %1058 = vmatpush1.msra.mxu0 0.0
        %1059 = vmatprep.subr.mxu0 0.0
        %1060 = vmatpush1.msra.mxu0 0.0
        %1061 = vmatprep.subr.mxu0 0.0
        %1062 = vmatpush1.msra.mxu0 0.0
        %1063 = vmatprep.subr.mxu0 0.0
        %1064 = vmatpush1.msra.mxu0 0.0
        %1065 = vmatprep.subr.mxu0 0.0
        %1066 = vmatpush1.msra.mxu0 0.0
        %1067 = vmatprep.subr.mxu0 0.0
        %1068 = vmatpush1.msra.mxu0 0.0
        %1069 = vmatprep.subr.mxu0 0.0
        %1070 = vmatpush1.msra.mxu0 0.0
        %1071 = vmatprep.subr.mxu0 0.0
        %1072 = vmatpush1.msra.mxu0 0.0
        %1073 = vmatprep.subr.mxu0 0.0
        %1074 = vmatpush1.msra.mxu0 0.0
        %1075 = vmatprep.subr.mxu0 0.0
        %1076 = vmatpush1.msra.mxu0 0.0
        %1077 = vmatprep.subr.mxu0 0.0
        %1078 = vmatpush1.msra.mxu0 0.0
        %1079 = vmatprep.subr.mxu0 0.0
        %1080 = vmatpush1.msra.mxu0 0.0
        %1081 = vmatprep.subr.mxu0 0.0
        %1082 = vmatpush1.msra.mxu0 0.0
        %1083 = vmatprep.subr.mxu0 0.0
        %1084 = vmatpush1.msra.mxu0 0.0
        %1085 = vmatprep.subr.mxu0 0.0
        %1086 = vmatpush1.msra.mxu0 0.0
        %1087 = vmatprep.subr.mxu0 0.0
        %1088 = vmatpush1.msra.mxu0 0.0
        %1089 = vmatprep.subr.mxu0 0.0
        %1090 = vmatpush1.msra.mxu0 0.0
        %1091 = vmatprep.subr.mxu0 0.0
        %1092 = vmatpush1.msra.mxu0 0.0
        %1093 = vmatprep.subr.mxu0 0.0
        %1094 = vmatpush1.msra.mxu0 0.0
        %1095 = vmatprep.subr.mxu0 0.0
        %1096 = vmatpush1.msra.mxu0 0.0
        %1097 = vmatprep.mubr.f32.mxu0 0.0
        %1098 = vmatmul.mubr.f32.gmra.mrb[0].mxu0 %v1031
        %v1099 = vpop.f32.mrb[0].mxu0
        %v1100 = vadd.f32 0.0, %v1099
        %v1101 = vpop.f32.mrb[0].mxu0
        %1102 = vdwg.mxu0
        %1103 = vrot.lane.b32.xlu0 %v940, 96
        %v1104 = vpop.permute.xlu0 %1103
        %1105 = vrot.lane.b32.xlu0 %v857, 96
        %v1106 = vpop.permute.xlu0 %1105
        %v1107 = vsel %vm941, %v1104, 0
        %v1109 = vsel %vm941, %v1106, 0
        %1111 = vmatprep.subr.mxu0 0.0
        %1112 = vmatpush1.xpose.msra.mxu0 %v1109
        %1113 = vmatprep.subr.mxu0 0.0
        %1114 = vmatpush1.xpose.msra.mxu0 0.0
        %1115 = vmatprep.subr.mxu0 0.0
        %1116 = vmatpush1.xpose.msra.mxu0 0.0
        %1117 = vmatprep.subr.mxu0 0.0
        %1118 = vmatpush1.xpose.msra.mxu0 0.0
        %1119 = vmatprep.subr.mxu0 0.0
        %1120 = vmatpush1.xpose.msra.mxu0 0.0
        %1121 = vmatprep.subr.mxu0 0.0
        %1122 = vmatpush1.xpose.msra.mxu0 0.0
        %1123 = vmatprep.subr.mxu0 0.0
        %1124 = vmatpush1.xpose.msra.mxu0 0.0
        %1125 = vmatprep.subr.mxu0 0.0
        %1126 = vmatpush1.xpose.msra.mxu0 0.0
        %1127 = vmatprep.subr.mxu0 0.0
        %1128 = vmatpush1.xpose.msra.mxu0 0.0
        %1129 = vmatprep.subr.mxu0 0.0
        %1130 = vmatpush1.xpose.msra.mxu0 0.0
        %1131 = vmatprep.subr.mxu0 0.0
        %1132 = vmatpush1.xpose.msra.mxu0 0.0
        %1133 = vmatprep.subr.mxu0 0.0
        %1134 = vmatpush1.xpose.msra.mxu0 0.0
        %1135 = vmatprep.subr.mxu0 0.0
        %1136 = vmatpush1.xpose.msra.mxu0 0.0
        %1137 = vmatprep.subr.mxu0 0.0
        %1138 = vmatpush1.xpose.msra.mxu0 0.0
        %1139 = vmatprep.subr.mxu0 0.0
        %1140 = vmatpush1.xpose.msra.mxu0 0.0
        %1141 = vmatprep.subr.mxu0 0.0
        %1142 = vmatpush1.xpose.msra.mxu0 0.0
        %1143 = vmatprep.subr.mxu0 0.0
        %1144 = vmatpush1.xpose.msra.mxu0 0.0
        %1145 = vmatprep.subr.mxu0 0.0
        %1146 = vmatpush1.xpose.msra.mxu0 0.0
        %1147 = vmatprep.subr.mxu0 0.0
        %1148 = vmatpush1.xpose.msra.mxu0 0.0
        %1149 = vmatprep.subr.mxu0 0.0
        %1150 = vmatpush1.xpose.msra.mxu0 0.0
        %1151 = vmatprep.subr.mxu0 0.0
        %1152 = vmatpush1.xpose.msra.mxu0 0.0
        %1153 = vmatprep.subr.mxu0 0.0
        %1154 = vmatpush1.xpose.msra.mxu0 0.0
        %1155 = vmatprep.subr.mxu0 0.0
        %1156 = vmatpush1.xpose.msra.mxu0 0.0
        %1157 = vmatprep.subr.mxu0 0.0
        %1158 = vmatpush1.xpose.msra.mxu0 0.0
        %1159 = vmatprep.subr.mxu0 0.0
        %1160 = vmatpush1.xpose.msra.mxu0 0.0
        %1161 = vmatprep.subr.mxu0 0.0
        %1162 = vmatpush1.xpose.msra.mxu0 0.0
        %1163 = vmatprep.subr.mxu0 0.0
        %1164 = vmatpush1.xpose.msra.mxu0 0.0
        %1165 = vmatprep.subr.mxu0 0.0
        %1166 = vmatpush1.xpose.msra.mxu0 0.0
        %1167 = vmatprep.subr.mxu0 0.0
        %1168 = vmatpush1.xpose.msra.mxu0 0.0
        %1169 = vmatprep.subr.mxu0 0.0
        %1170 = vmatpush1.xpose.msra.mxu0 0.0
        %1171 = vmatprep.subr.mxu0 0.0
        %1172 = vmatpush1.xpose.msra.mxu0 0.0
        %1173 = vmatprep.subr.mxu0 0.0
        %1174 = vmatpush1.xpose.msra.mxu0 0.0
        %1175 = vmatprep.mubr.f32.mxu0 0.0
        %1176 = vmatmul.mubr.f32.gmra.mrb[0].mxu0 %v1107
        %v1177 = vpop.f32.mrb[0].mxu0
        %v1178 = vadd.f32 0.0, %v1177
        %v1179 = vpop.f32.mrb[0].mxu0
        %1180 = vdwg.mxu0
        %v1181 = vsel %vm1018, %v1178, -inf
        %1182 = vmax.xlane.f32.xlu0 %v1181
        %v1183 = vpop.xlane.xlu0 %1182
        %v1184 = vsub.f32 %v1178, %v1183
        %v1185 = vmul.f32 %v1184, 1.442695
        %v1186 = vpow.pop %v1185
        %v1187 = vsel %vm1018, %v1186, 0.0
        %1188 = vadd.xlane.f32.xlu0 %v1187
        %v1189 = vpop.xlane.xlu0 %1188
        %v1190 = vrcp.pop %v1189
        %v1191 = vmul.f32 %v1186, %v1190
        %1193 = vrot.lane.b32.xlu0 %v932, 96
        %v1194 = vpop.permute.xlu0 %1193
        %v1197 = vsel %vm1018, %v1191, 0
        %1199 = vmatprep.subr.mxu0 0.0
        %1200 = vmatpush1.msra.mxu0 %v1194
        %1201 = vmatprep.subr.mxu0 0.0
        %1202 = vmatpush1.msra.mxu0 0.0
        %1203 = vmatprep.subr.mxu0 0.0
        %1204 = vmatpush1.msra.mxu0 0.0
        %1205 = vmatprep.subr.mxu0 0.0
        %1206 = vmatpush1.msra.mxu0 0.0
        %1207 = vmatprep.subr.mxu0 0.0
        %1208 = vmatpush1.msra.mxu0 0.0
        %1209 = vmatprep.subr.mxu0 0.0
        %1210 = vmatpush1.msra.mxu0 0.0
        %1211 = vmatprep.subr.mxu0 0.0
        %1212 = vmatpush1.msra.mxu0 0.0
        %1213 = vmatprep.subr.mxu0 0.0
        %1214 = vmatpush1.msra.mxu0 0.0
        %1215 = vmatprep.subr.mxu0 0.0
        %1216 = vmatpush1.msra.mxu0 0.0
        %1217 = vmatprep.subr.mxu0 0.0
        %1218 = vmatpush1.msra.mxu0 0.0
        %1219 = vmatprep.subr.mxu0 0.0
        %1220 = vmatpush1.msra.mxu0 0.0
        %1221 = vmatprep.subr.mxu0 0.0
        %1222 = vmatpush1.msra.mxu0 0.0
        %1223 = vmatprep.subr.mxu0 0.0
        %1224 = vmatpush1.msra.mxu0 0.0
        %1225 = vmatprep.subr.mxu0 0.0
        %1226 = vmatpush1.msra.mxu0 0.0
        %1227 = vmatprep.subr.mxu0 0.0
        %1228 = vmatpush1.msra.mxu0 0.0
        %1229 = vmatprep.subr.mxu0 0.0
        %1230 = vmatpush1.msra.mxu0 0.0
        %1231 = vmatprep.subr.mxu0 0.0
        %1232 = vmatpush1.msra.mxu0 0.0
        %1233 = vmatprep.subr.mxu0 0.0
        %1234 = vmatpush1.msra.mxu0 0.0
        %1235 = vmatprep.subr.mxu0 0.0
        %1236 = vmatpush1.msra.mxu0 0.0
        %1237 = vmatprep.subr.mxu0 0.0
        %1238 = vmatpush1.msra.mxu0 0.0
        %1239 = vmatprep.subr.mxu0 0.0
        %1240 = vmatpush1.msra.mxu0 0.0
        %1241 = vmatprep.subr.mxu0 0.0
        %1242 = vmatpush1.msra.mxu0 0.0
        %1243 = vmatprep.subr.mxu0 0.0
        %1244 = vmatpush1.msra.mxu0 0.0
        %1245 = vmatprep.subr.mxu0 0.0
        %1246 = vmatpush1.msra.mxu0 0.0
        %1247 = vmatprep.subr.mxu0 0.0
        %1248 = vmatpush1.msra.mxu0 0.0
        %1249 = vmatprep.subr.mxu0 0.0
        %1250 = vmatpush1.msra.mxu0 0.0
        %1251 = vmatprep.subr.mxu0 0.0
        %1252 = vmatpush1.msra.mxu0 0.0
        %1253 = vmatprep.subr.mxu0 0.0
        %1254 = vmatpush1.msra.mxu0 0.0
        %1255 = vmatprep.subr.mxu0 0.0
        %1256 = vmatpush1.msra.mxu0 0.0
        %1257 = vmatprep.subr.mxu0 0.0
        %1258 = vmatpush1.msra.mxu0 0.0
        %1259 = vmatprep.subr.mxu0 0.0
        %1260 = vmatpush1.msra.mxu0 0.0
        %1261 = vmatprep.subr.mxu0 0.0
        %1262 = vmatpush1.msra.mxu0 0.0
        %1263 = vmatprep.mubr.f32.mxu0 0.0
        %1264 = vmatmul.mubr.f32.gmra.mrb[0].mxu0 %v1197
        %v1265 = vpop.f32.mrb[0].mxu0
        %v1266 = vadd.f32 0.0, %v1265
        %v1267 = vpop.f32.mrb[0].mxu0
        %1268 = vdwg.mxu0
        %1269 = vrot.lane.b32.xlu0 %v940, 64
        %v1270 = vpop.permute.xlu0 %1269
        %1271 = vrot.lane.b32.xlu0 %v857, 64
        %v1272 = vpop.permute.xlu0 %1271
        %v1273 = vsel %vm941, %v1270, 0
        %v1275 = vsel %vm941, %v1272, 0
        %1277 = vmatprep.subr.mxu0 0.0
        %1278 = vmatpush1.xpose.msra.mxu0 %v1275
        %1279 = vmatprep.subr.mxu0 0.0
        %1280 = vmatpush1.xpose.msra.mxu0 0.0
        %1281 = vmatprep.subr.mxu0 0.0
        %1282 = vmatpush1.xpose.msra.mxu0 0.0
        %1283 = vmatprep.subr.mxu0 0.0
        %1284 = vmatpush1.xpose.msra.mxu0 0.0
        %1285 = vmatprep.subr.mxu0 0.0
        %1286 = vmatpush1.xpose.msra.mxu0 0.0
        %1287 = vmatprep.subr.mxu0 0.0
        %1288 = vmatpush1.xpose.msra.mxu0 0.0
        %1289 = vmatprep.subr.mxu0 0.0
        %1290 = vmatpush1.xpose.msra.mxu0 0.0
        %1291 = vmatprep.subr.mxu0 0.0
        %1292 = vmatpush1.xpose.msra.mxu0 0.0
        %1293 = vmatprep.subr.mxu0 0.0
        %1294 = vmatpush1.xpose.msra.mxu0 0.0
        %1295 = vmatprep.subr.mxu0 0.0
        %1296 = vmatpush1.xpose.msra.mxu0 0.0
        %1297 = vmatprep.subr.mxu0 0.0
        %1298 = vmatpush1.xpose.msra.mxu0 0.0
        %1299 = vmatprep.subr.mxu0 0.0
        %1300 = vmatpush1.xpose.msra.mxu0 0.0
        %1301 = vmatprep.subr.mxu0 0.0
        %1302 = vmatpush1.xpose.msra.mxu0 0.0
        %1303 = vmatprep.subr.mxu0 0.0
        %1304 = vmatpush1.xpose.msra.mxu0 0.0
        %1305 = vmatprep.subr.mxu0 0.0
        %1306 = vmatpush1.xpose.msra.mxu0 0.0
        %1307 = vmatprep.subr.mxu0 0.0
        %1308 = vmatpush1.xpose.msra.mxu0 0.0
        %1309 = vmatprep.subr.mxu0 0.0
        %1310 = vmatpush1.xpose.msra.mxu0 0.0
        %1311 = vmatprep.subr.mxu0 0.0
        %1312 = vmatpush1.xpose.msra.mxu0 0.0
        %1313 = vmatprep.subr.mxu0 0.0
        %1314 = vmatpush1.xpose.msra.mxu0 0.0
        %1315 = vmatprep.subr.mxu0 0.0
        %1316 = vmatpush1.xpose.msra.mxu0 0.0
        %1317 = vmatprep.subr.mxu0 0.0
        %1318 = vmatpush1.xpose.msra.mxu0 0.0
        %1319 = vmatprep.subr.mxu0 0.0
        %1320 = vmatpush1.xpose.msra.mxu0 0.0
        %1321 = vmatprep.subr.mxu0 0.0
        %1322 = vmatpush1.xpose.msra.mxu0 0.0
        %1323 = vmatprep.subr.mxu0 0.0
        %1324 = vmatpush1.xpose.msra.mxu0 0.0
        %1325 = vmatprep.subr.mxu0 0.0
        %1326 = vmatpush1.xpose.msra.mxu0 0.0
        %1327 = vmatprep.subr.mxu0 0.0
        %1328 = vmatpush1.xpose.msra.mxu0 0.0
        %1329 = vmatprep.subr.mxu0 0.0
        %1330 = vmatpush1.xpose.msra.mxu0 0.0
        %1331 = vmatprep.subr.mxu0 0.0
        %1332 = vmatpush1.xpose.msra.mxu0 0.0
        %1333 = vmatprep.subr.mxu0 0.0
        %1334 = vmatpush1.xpose.msra.mxu0 0.0
        %1335 = vmatprep.subr.mxu0 0.0
        %1336 = vmatpush1.xpose.msra.mxu0 0.0
        %1337 = vmatprep.subr.mxu0 0.0
        %1338 = vmatpush1.xpose.msra.mxu0 0.0
        %1339 = vmatprep.subr.mxu0 0.0
        %1340 = vmatpush1.xpose.msra.mxu0 0.0
        %1341 = vmatprep.mubr.f32.mxu0 0.0
        %1342 = vmatmul.mubr.f32.gmra.mrb[0].mxu0 %v1273
        %v1343 = vpop.f32.mrb[0].mxu0
        %v1344 = vadd.f32 0.0, %v1343
        %v1345 = vpop.f32.mrb[0].mxu0
        %1346 = vdwg.mxu0
        %v1347 = vsel %vm1018, %v1344, -inf
        %1348 = vmax.xlane.f32.xlu0 %v1347
        %v1349 = vpop.xlane.xlu0 %1348
        %v1350 = vsub.f32 %v1344, %v1349
        %v1351 = vmul.f32 %v1350, 1.442695
        %v1352 = vpow.pop %v1351
        %v1353 = vsel %vm1018, %v1352, 0.0
        %1354 = vadd.xlane.f32.xlu0 %v1353
        %v1355 = vpop.xlane.xlu0 %1354
        %v1356 = vrcp.pop %v1355
        %v1357 = vmul.f32 %v1352, %v1356
        %1358 = vrot.lane.b32.xlu0 %v932, 64
        %v1359 = vpop.permute.xlu0 %1358
        %v1362 = vsel %vm1018, %v1357, 0
        %1364 = vmatprep.subr.mxu0 0.0
        %1365 = vmatpush1.msra.mxu0 %v1359
        %1366 = vmatprep.subr.mxu0 0.0
        %1367 = vmatpush1.msra.mxu0 0.0
        %1368 = vmatprep.subr.mxu0 0.0
        %1369 = vmatpush1.msra.mxu0 0.0
        %1370 = vmatprep.subr.mxu0 0.0
        %1371 = vmatpush1.msra.mxu0 0.0
        %1372 = vmatprep.subr.mxu0 0.0
        %1373 = vmatpush1.msra.mxu0 0.0
        %1374 = vmatprep.subr.mxu0 0.0
        %1375 = vmatpush1.msra.mxu0 0.0
        %1376 = vmatprep.subr.mxu0 0.0
        %1377 = vmatpush1.msra.mxu0 0.0
        %1378 = vmatprep.subr.mxu0 0.0
        %1379 = vmatpush1.msra.mxu0 0.0
        %1380 = vmatprep.subr.mxu0 0.0
        %1381 = vmatpush1.msra.mxu0 0.0
        %1382 = vmatprep.subr.mxu0 0.0
        %1383 = vmatpush1.msra.mxu0 0.0
        %1384 = vmatprep.subr.mxu0 0.0
        %1385 = vmatpush1.msra.mxu0 0.0
        %1386 = vmatprep.subr.mxu0 0.0
        %1387 = vmatpush1.msra.mxu0 0.0
        %1388 = vmatprep.subr.mxu0 0.0
        %1389 = vmatpush1.msra.mxu0 0.0
        %1390 = vmatprep.subr.mxu0 0.0
        %1391 = vmatpush1.msra.mxu0 0.0
        %1392 = vmatprep.subr.mxu0 0.0
        %1393 = vmatpush1.msra.mxu0 0.0
        %1394 = vmatprep.subr.mxu0 0.0
        %1395 = vmatpush1.msra.mxu0 0.0
        %1396 = vmatprep.subr.mxu0 0.0
        %1397 = vmatpush1.msra.mxu0 0.0
        %1398 = vmatprep.subr.mxu0 0.0
        %1399 = vmatpush1.msra.mxu0 0.0
        %1400 = vmatprep.subr.mxu0 0.0
        %1401 = vmatpush1.msra.mxu0 0.0
        %1402 = vmatprep.subr.mxu0 0.0
        %1403 = vmatpush1.msra.mxu0 0.0
        %1404 = vmatprep.subr.mxu0 0.0
        %1405 = vmatpush1.msra.mxu0 0.0
        %1406 = vmatprep.subr.mxu0 0.0
        %1407 = vmatpush1.msra.mxu0 0.0
        %1408 = vmatprep.subr.mxu0 0.0
        %1409 = vmatpush1.msra.mxu0 0.0
        %1410 = vmatprep.subr.mxu0 0.0
        %1411 = vmatpush1.msra.mxu0 0.0
        %1412 = vmatprep.subr.mxu0 0.0
        %1413 = vmatpush1.msra.mxu0 0.0
        %1414 = vmatprep.subr.mxu0 0.0
        %1415 = vmatpush1.msra.mxu0 0.0
        %1416 = vmatprep.subr.mxu0 0.0
        %1417 = vmatpush1.msra.mxu0 0.0
        %1418 = vmatprep.subr.mxu0 0.0
        %1419 = vmatpush1.msra.mxu0 0.0
        %1420 = vmatprep.subr.mxu0 0.0
        %1421 = vmatpush1.msra.mxu0 0.0
        %1422 = vmatprep.subr.mxu0 0.0
        %1423 = vmatpush1.msra.mxu0 0.0
        %1424 = vmatprep.subr.mxu0 0.0
        %1425 = vmatpush1.msra.mxu0 0.0
        %1426 = vmatprep.subr.mxu0 0.0
        %1427 = vmatpush1.msra.mxu0 0.0
        %1428 = vmatprep.mubr.f32.mxu0 0.0
        %1429 = vmatmul.mubr.f32.gmra.mrb[0].mxu0 %v1362
        %v1430 = vpop.f32.mrb[0].mxu0
        %v1431 = vadd.f32 0.0, %v1430
        %v1432 = vpop.f32.mrb[0].mxu0
        %1433 = vdwg.mxu0
        %1434 = vrot.lane.b32.xlu0 %v940, 32
        %v1435 = vpop.permute.xlu0 %1434
        %1436 = vrot.lane.b32.xlu0 %v857, 32
        %v1437 = vpop.permute.xlu0 %1436
        %v1438 = vsel %vm941, %v1435, 0
        %v1440 = vsel %vm941, %v1437, 0
        %1442 = vmatprep.subr.mxu0 0.0
        %1443 = vmatpush1.xpose.msra.mxu0 %v1440
        %1444 = vmatprep.subr.mxu0 0.0
        %1445 = vmatpush1.xpose.msra.mxu0 0.0
        %1446 = vmatprep.subr.mxu0 0.0
        %1447 = vmatpush1.xpose.msra.mxu0 0.0
        %1448 = vmatprep.subr.mxu0 0.0
        %1449 = vmatpush1.xpose.msra.mxu0 0.0
        %1450 = vmatprep.subr.mxu0 0.0
        %1451 = vmatpush1.xpose.msra.mxu0 0.0
        %1452 = vmatprep.subr.mxu0 0.0
        %1453 = vmatpush1.xpose.msra.mxu0 0.0
        %1454 = vmatprep.subr.mxu0 0.0
        %1455 = vmatpush1.xpose.msra.mxu0 0.0
        %1456 = vmatprep.subr.mxu0 0.0
        %1457 = vmatpush1.xpose.msra.mxu0 0.0
        %1458 = vmatprep.subr.mxu0 0.0
        %1459 = vmatpush1.xpose.msra.mxu0 0.0
        %1460 = vmatprep.subr.mxu0 0.0
        %1461 = vmatpush1.xpose.msra.mxu0 0.0
        %1462 = vmatprep.subr.mxu0 0.0
        %1463 = vmatpush1.xpose.msra.mxu0 0.0
        %1464 = vmatprep.subr.mxu0 0.0
        %1465 = vmatpush1.xpose.msra.mxu0 0.0
        %1466 = vmatprep.subr.mxu0 0.0
        %1467 = vmatpush1.xpose.msra.mxu0 0.0
        %1468 = vmatprep.subr.mxu0 0.0
        %1469 = vmatpush1.xpose.msra.mxu0 0.0
        %1470 = vmatprep.subr.mxu0 0.0
        %1471 = vmatpush1.xpose.msra.mxu0 0.0
        %1472 = vmatprep.subr.mxu0 0.0
        %1473 = vmatpush1.xpose.msra.mxu0 0.0
        %1474 = vmatprep.subr.mxu0 0.0
        %1475 = vmatpush1.xpose.msra.mxu0 0.0
        %1476 = vmatprep.subr.mxu0 0.0
        %1477 = vmatpush1.xpose.msra.mxu0 0.0
        %1478 = vmatprep.subr.mxu0 0.0
        %1479 = vmatpush1.xpose.msra.mxu0 0.0
        %1480 = vmatprep.subr.mxu0 0.0
        %1481 = vmatpush1.xpose.msra.mxu0 0.0
        %1482 = vmatprep.subr.mxu0 0.0
        %1483 = vmatpush1.xpose.msra.mxu0 0.0
        %1484 = vmatprep.subr.mxu0 0.0
        %1485 = vmatpush1.xpose.msra.mxu0 0.0
        %1486 = vmatprep.subr.mxu0 0.0
        %1487 = vmatpush1.xpose.msra.mxu0 0.0
        %1488 = vmatprep.subr.mxu0 0.0
        %1489 = vmatpush1.xpose.msra.mxu0 0.0
        %1490 = vmatprep.subr.mxu0 0.0
        %1491 = vmatpush1.xpose.msra.mxu0 0.0
        %1492 = vmatprep.subr.mxu0 0.0
        %1493 = vmatpush1.xpose.msra.mxu0 0.0
        %1494 = vmatprep.subr.mxu0 0.0
        %1495 = vmatpush1.xpose.msra.mxu0 0.0
        %1496 = vmatprep.subr.mxu0 0.0
        %1497 = vmatpush1.xpose.msra.mxu0 0.0
        %1498 = vmatprep.subr.mxu0 0.0
        %1499 = vmatpush1.xpose.msra.mxu0 0.0
        %1500 = vmatprep.subr.mxu0 0.0
        %1501 = vmatpush1.xpose.msra.mxu0 0.0
        %1502 = vmatprep.subr.mxu0 0.0
        %1503 = vmatpush1.xpose.msra.mxu0 0.0
        %1504 = vmatprep.subr.mxu0 0.0
        %1505 = vmatpush1.xpose.msra.mxu0 0.0
        %1506 = vmatprep.mubr.f32.mxu0 0.0
        %1507 = vmatmul.mubr.f32.gmra.mrb[0].mxu0 %v1438
        %v1508 = vpop.f32.mrb[0].mxu0
        %v1509 = vadd.f32 0.0, %v1508
        %v1510 = vpop.f32.mrb[0].mxu0
        %1511 = vdwg.mxu0
        %v1512 = vsel %vm1018, %v1509, -inf
        %1513 = vmax.xlane.f32.xlu0 %v1512
        %v1514 = vpop.xlane.xlu0 %1513
        %v1515 = vsub.f32 %v1509, %v1514
        %v1516 = vmul.f32 %v1515, 1.442695
        %v1517 = vpow.pop %v1516
        %v1518 = vsel %vm1018, %v1517, 0.0
        %1519 = vadd.xlane.f32.xlu0 %v1518
        %v1520 = vpop.xlane.xlu0 %1519
        %v1521 = vrcp.pop %v1520
        %v1522 = vmul.f32 %v1517, %v1521
        %1523 = vrot.lane.b32.xlu0 %v932, 32
        %v1524 = vpop.permute.xlu0 %1523
        %v1527 = vsel %vm1018, %v1522, 0
        %1529 = vmatprep.subr.mxu0 0.0
        %1530 = vmatpush1.msra.mxu0 %v1524
        %1531 = vmatprep.subr.mxu0 0.0
        %1532 = vmatpush1.msra.mxu0 0.0
        %1533 = vmatprep.subr.mxu0 0.0
        %1534 = vmatpush1.msra.mxu0 0.0
        %1535 = vmatprep.subr.mxu0 0.0
        %1536 = vmatpush1.msra.mxu0 0.0
        %1537 = vmatprep.subr.mxu0 0.0
        %1538 = vmatpush1.msra.mxu0 0.0
        %1539 = vmatprep.subr.mxu0 0.0
        %1540 = vmatpush1.msra.mxu0 0.0
        %1541 = vmatprep.subr.mxu0 0.0
        %1542 = vmatpush1.msra.mxu0 0.0
        %1543 = vmatprep.subr.mxu0 0.0
        %1544 = vmatpush1.msra.mxu0 0.0
        %1545 = vmatprep.subr.mxu0 0.0
        %1546 = vmatpush1.msra.mxu0 0.0
        %1547 = vmatprep.subr.mxu0 0.0
        %1548 = vmatpush1.msra.mxu0 0.0
        %1549 = vmatprep.subr.mxu0 0.0
        %1550 = vmatpush1.msra.mxu0 0.0
        %1551 = vmatprep.subr.mxu0 0.0
        %1552 = vmatpush1.msra.mxu0 0.0
        %1553 = vmatprep.subr.mxu0 0.0
        %1554 = vmatpush1.msra.mxu0 0.0
        %1555 = vmatprep.subr.mxu0 0.0
        %1556 = vmatpush1.msra.mxu0 0.0
        %1557 = vmatprep.subr.mxu0 0.0
        %1558 = vmatpush1.msra.mxu0 0.0
        %1559 = vmatprep.subr.mxu0 0.0
        %1560 = vmatpush1.msra.mxu0 0.0
        %1561 = vmatprep.subr.mxu0 0.0
        %1562 = vmatpush1.msra.mxu0 0.0
        %1563 = vmatprep.subr.mxu0 0.0
        %1564 = vmatpush1.msra.mxu0 0.0
        %1565 = vmatprep.subr.mxu0 0.0
        %1566 = vmatpush1.msra.mxu0 0.0
        %1567 = vmatprep.subr.mxu0 0.0
        %1568 = vmatpush1.msra.mxu0 0.0
        %1569 = vmatprep.subr.mxu0 0.0
        %1570 = vmatpush1.msra.mxu0 0.0
        %1571 = vmatprep.subr.mxu0 0.0
        %1572 = vmatpush1.msra.mxu0 0.0
        %1573 = vmatprep.subr.mxu0 0.0
        %1574 = vmatpush1.msra.mxu0 0.0
        %1575 = vmatprep.subr.mxu0 0.0
        %1576 = vmatpush1.msra.mxu0 0.0
        %1577 = vmatprep.subr.mxu0 0.0
        %1578 = vmatpush1.msra.mxu0 0.0
        %1579 = vmatprep.subr.mxu0 0.0
        %1580 = vmatpush1.msra.mxu0 0.0
        %1581 = vmatprep.subr.mxu0 0.0
        %1582 = vmatpush1.msra.mxu0 0.0
        %1583 = vmatprep.subr.mxu0 0.0
        %1584 = vmatpush1.msra.mxu0 0.0
        %1585 = vmatprep.subr.mxu0 0.0
        %1586 = vmatpush1.msra.mxu0 0.0
        %1587 = vmatprep.subr.mxu0 0.0
        %1588 = vmatpush1.msra.mxu0 0.0
        %1589 = vmatprep.subr.mxu0 0.0
        %1590 = vmatpush1.msra.mxu0 0.0
        %1591 = vmatprep.subr.mxu0 0.0
        %1592 = vmatpush1.msra.mxu0 0.0
        %1593 = vmatprep.mubr.f32.mxu0 0.0
        %1594 = vmatmul.mubr.f32.gmra.mrb[0].mxu0 %v1527
        %v1595 = vpop.f32.mrb[0].mxu0
        %v1596 = vadd.f32 0.0, %v1595
        %v1597 = vpop.f32.mrb[0].mxu0
        %1598 = vdwg.mxu0
        %1600 = vrot.lane.b32.xlu0 %v1266, 32
        %v1601 = vpop.permute.xlu0 %1600
        %1604 = vrot.lane.b32.xlu0 %v1431, 64
        %v1605 = vpop.permute.xlu0 %1604
        %1608 = vrot.lane.b32.xlu0 %v1596, 96
        %v1609 = vpop.permute.xlu0 %1608
        %v1611 = vsel %vm941, %v1100, %v1601
        %vm1612 = vcmask 523264
        %v1613 = vsel %vm1612, %v1611, %v1605
        %vm1614 = vcmask 785408
        %v1615 = vsel %vm1614, %v1613, %v1609
        %v1616 = vmul.f32 %v861, 0.17677669
        %v1618 = vsel %vm941, %v1616, 0
        %v1621 = vsel %vm941, %v863, 0
        %1623 = vmatprep.subr.mxu0 0.0
        %1624 = vmatpush1.xpose.msra.mxu0 %v1621
        %1625 = vmatprep.subr.mxu0 0.0
        %1626 = vmatpush1.xpose.msra.mxu0 0.0
        %1627 = vmatprep.subr.mxu0 0.0
        %1628 = vmatpush1.xpose.msra.mxu0 0.0
        %1629 = vmatprep.subr.mxu0 0.0
        %1630 = vmatpush1.xpose.msra.mxu0 0.0
        %1631 = vmatprep.subr.mxu0 0.0
        %1632 = vmatpush1.xpose.msra.mxu0 0.0
        %1633 = vmatprep.subr.mxu0 0.0
        %1634 = vmatpush1.xpose.msra.mxu0 0.0
        %1635 = vmatprep.subr.mxu0 0.0
        %1636 = vmatpush1.xpose.msra.mxu0 0.0
        %1637 = vmatprep.subr.mxu0 0.0
        %1638 = vmatpush1.xpose.msra.mxu0 0.0
        %1639 = vmatprep.subr.mxu0 0.0
        %1640 = vmatpush1.xpose.msra.mxu0 0.0
        %1641 = vmatprep.subr.mxu0 0.0
        %1642 = vmatpush1.xpose.msra.mxu0 0.0
        %1643 = vmatprep.subr.mxu0 0.0
        %1644 = vmatpush1.xpose.msra.mxu0 0.0
        %1645 = vmatprep.subr.mxu0 0.0
        %1646 = vmatpush1.xpose.msra.mxu0 0.0
        %1647 = vmatprep.subr.mxu0 0.0
        %1648 = vmatpush1.xpose.msra.mxu0 0.0
        %1649 = vmatprep.subr.mxu0 0.0
        %1650 = vmatpush1.xpose.msra.mxu0 0.0
        %1651 = vmatprep.subr.mxu0 0.0
        %1652 = vmatpush1.xpose.msra.mxu0 0.0
        %1653 = vmatprep.subr.mxu0 0.0
        %1654 = vmatpush1.xpose.msra.mxu0 0.0
        %1655 = vmatprep.subr.mxu0 0.0
        %1656 = vmatpush1.xpose.msra.mxu0 0.0
        %1657 = vmatprep.subr.mxu0 0.0
        %1658 = vmatpush1.xpose.msra.mxu0 0.0
        %1659 = vmatprep.subr.mxu0 0.0
        %1660 = vmatpush1.xpose.msra.mxu0 0.0
        %1661 = vmatprep.subr.mxu0 0.0
        %1662 = vmatpush1.xpose.msra.mxu0 0.0
        %1663 = vmatprep.subr.mxu0 0.0
        %1664 = vmatpush1.xpose.msra.mxu0 0.0
        %1665 = vmatprep.subr.mxu0 0.0
        %1666 = vmatpush1.xpose.msra.mxu0 0.0
        %1667 = vmatprep.subr.mxu0 0.0
        %1668 = vmatpush1.xpose.msra.mxu0 0.0
        %1669 = vmatprep.subr.mxu0 0.0
        %1670 = vmatpush1.xpose.msra.mxu0 0.0
        %1671 = vmatprep.subr.mxu0 0.0
        %1672 = vmatpush1.xpose.msra.mxu0 0.0
        %1673 = vmatprep.subr.mxu0 0.0
        %1674 = vmatpush1.xpose.msra.mxu0 0.0
        %1675 = vmatprep.subr.mxu0 0.0
        %1676 = vmatpush1.xpose.msra.mxu0 0.0
        %1677 = vmatprep.subr.mxu0 0.0
        %1678 = vmatpush1.xpose.msra.mxu0 0.0
        %1679 = vmatprep.subr.mxu0 0.0
        %1680 = vmatpush1.xpose.msra.mxu0 0.0
        %1681 = vmatprep.subr.mxu0 0.0
        %1682 = vmatpush1.xpose.msra.mxu0 0.0
        %1683 = vmatprep.subr.mxu0 0.0
        %1684 = vmatpush1.xpose.msra.mxu0 0.0
        %1685 = vmatprep.subr.mxu0 0.0
        %1686 = vmatpush1.xpose.msra.mxu0 0.0
        %1687 = vmatprep.mubr.f32.mxu0 0.0
        %1688 = vmatmul.mubr.f32.gmra.mrb[0].mxu0 %v1618
        %v1689 = vpop.f32.mrb[0].mxu0
        %v1690 = vadd.f32 0.0, %v1689
        %v1691 = vpop.f32.mrb[0].mxu0
        %1692 = vdwg.mxu0
        %v1693 = vsel %vm1018, %v1690, -inf
        %1694 = vmax.xlane.f32.xlu0 %v1693
        %v1695 = vpop.xlane.xlu0 %1694
        %v1696 = vsub.f32 %v1690, %v1695
        %v1697 = vmul.f32 %v1696, 1.442695
        %v1698 = vpow.pop %v1697
        %v1699 = vsel %vm1018, %v1698, 0.0
        %1700 = vadd.xlane.f32.xlu0 %v1699
        %v1701 = vpop.xlane.xlu0 %1700
        %v1702 = vrcp.pop %v1701
        %v1703 = vmul.f32 %v1698, %v1702
        %v1705 = vsel %vm1018, %v1703, 0
        %1707 = vmatprep.subr.mxu0 0.0
        %1708 = vmatpush1.msra.mxu0 %v937
        %1709 = vmatprep.subr.mxu0 0.0
        %1710 = vmatpush1.msra.mxu0 0.0
        %1711 = vmatprep.subr.mxu0 0.0
        %1712 = vmatpush1.msra.mxu0 0.0
        %1713 = vmatprep.subr.mxu0 0.0
        %1714 = vmatpush1.msra.mxu0 0.0
        %1715 = vmatprep.subr.mxu0 0.0
        %1716 = vmatpush1.msra.mxu0 0.0
        %1717 = vmatprep.subr.mxu0 0.0
        %1718 = vmatpush1.msra.mxu0 0.0
        %1719 = vmatprep.subr.mxu0 0.0
        %1720 = vmatpush1.msra.mxu0 0.0
        %1721 = vmatprep.subr.mxu0 0.0
        %1722 = vmatpush1.msra.mxu0 0.0
        %1723 = vmatprep.subr.mxu0 0.0
        %1724 = vmatpush1.msra.mxu0 0.0
        %1725 = vmatprep.subr.mxu0 0.0
        %1726 = vmatpush1.msra.mxu0 0.0
        %1727 = vmatprep.subr.mxu0 0.0
        %1728 = vmatpush1.msra.mxu0 0.0
        %1729 = vmatprep.subr.mxu0 0.0
        %1730 = vmatpush1.msra.mxu0 0.0
        %1731 = vmatprep.subr.mxu0 0.0
        %1732 = vmatpush1.msra.mxu0 0.0
        %1733 = vmatprep.subr.mxu0 0.0
        %1734 = vmatpush1.msra.mxu0 0.0
        %1735 = vmatprep.subr.mxu0 0.0
        %1736 = vmatpush1.msra.mxu0 0.0
        %1737 = vmatprep.subr.mxu0 0.0
        %1738 = vmatpush1.msra.mxu0 0.0
        %1739 = vmatprep.subr.mxu0 0.0
        %1740 = vmatpush1.msra.mxu0 0.0
        %1741 = vmatprep.subr.mxu0 0.0
        %1742 = vmatpush1.msra.mxu0 0.0
        %1743 = vmatprep.subr.mxu0 0.0
        %1744 = vmatpush1.msra.mxu0 0.0
        %1745 = vmatprep.subr.mxu0 0.0
        %1746 = vmatpush1.msra.mxu0 0.0
        %1747 = vmatprep.subr.mxu0 0.0
        %1748 = vmatpush1.msra.mxu0 0.0
        %1749 = vmatprep.subr.mxu0 0.0
        %1750 = vmatpush1.msra.mxu0 0.0
        %1751 = vmatprep.subr.mxu0 0.0
        %1752 = vmatpush1.msra.mxu0 0.0
        %1753 = vmatprep.subr.mxu0 0.0
        %1754 = vmatpush1.msra.mxu0 0.0
        %1755 = vmatprep.subr.mxu0 0.0
        %1756 = vmatpush1.msra.mxu0 0.0
        %1757 = vmatprep.subr.mxu0 0.0
        %1758 = vmatpush1.msra.mxu0 0.0
        %1759 = vmatprep.subr.mxu0 0.0
        %1760 = vmatpush1.msra.mxu0 0.0
        %1761 = vmatprep.subr.mxu0 0.0
        %1762 = vmatpush1.msra.mxu0 0.0
        %1763 = vmatprep.subr.mxu0 0.0
        %1764 = vmatpush1.msra.mxu0 0.0
        %1765 = vmatprep.subr.mxu0 0.0
        %1766 = vmatpush1.msra.mxu0 0.0
        %1767 = vmatprep.subr.mxu0 0.0
        %1768 = vmatpush1.msra.mxu0 0.0
        %1769 = vmatprep.subr.mxu0 0.0
        %1770 = vmatpush1.msra.mxu0 0.0
        %1771 = vmatprep.mubr.f32.mxu0 0.0
        %1772 = vmatmul.mubr.f32.gmra.mrb[0].mxu0 %v1705
        %v1773 = vpop.f32.mrb[0].mxu0
        %v1774 = vadd.f32 0.0, %v1773
        %v1775 = vpop.f32.mrb[0].mxu0
        %1776 = vdwg.mxu0
        %1777 = vrot.lane.b32.xlu0 %v1616, 96
        %v1778 = vpop.permute.xlu0 %1777
        %1779 = vrot.lane.b32.xlu0 %v863, 96
        %v1780 = vpop.permute.xlu0 %1779
        %v1781 = vsel %vm941, %v1778, 0
        %v1783 = vsel %vm941, %v1780, 0
        %1785 = vmatprep.subr.mxu0 0.0
        %1786 = vmatpush1.xpose.msra.mxu0 %v1783
        %1787 = vmatprep.subr.mxu0 0.0
        %1788 = vmatpush1.xpose.msra.mxu0 0.0
        %1789 = vmatprep.subr.mxu0 0.0
        %1790 = vmatpush1.xpose.msra.mxu0 0.0
        %1791 = vmatprep.subr.mxu0 0.0
        %1792 = vmatpush1.xpose.msra.mxu0 0.0
        %1793 = vmatprep.subr.mxu0 0.0
        %1794 = vmatpush1.xpose.msra.mxu0 0.0
        %1795 = vmatprep.subr.mxu0 0.0
        %1796 = vmatpush1.xpose.msra.mxu0 0.0
        %1797 = vmatprep.subr.mxu0 0.0
        %1798 = vmatpush1.xpose.msra.mxu0 0.0
        %1799 = vmatprep.subr.mxu0 0.0
        %1800 = vmatpush1.xpose.msra.mxu0 0.0
        %1801 = vmatprep.subr.mxu0 0.0
        %1802 = vmatpush1.xpose.msra.mxu0 0.0
        %1803 = vmatprep.subr.mxu0 0.0
        %1804 = vmatpush1.xpose.msra.mxu0 0.0
        %1805 = vmatprep.subr.mxu0 0.0
        %1806 = vmatpush1.xpose.msra.mxu0 0.0
        %1807 = vmatprep.subr.mxu0 0.0
        %1808 = vmatpush1.xpose.msra.mxu0 0.0
        %1809 = vmatprep.subr.mxu0 0.0
        %1810 = vmatpush1.xpose.msra.mxu0 0.0
        %1811 = vmatprep.subr.mxu0 0.0
        %1812 = vmatpush1.xpose.msra.mxu0 0.0
        %1813 = vmatprep.subr.mxu0 0.0
        %1814 = vmatpush1.xpose.msra.mxu0 0.0
        %1815 = vmatprep.subr.mxu0 0.0
        %1816 = vmatpush1.xpose.msra.mxu0 0.0
        %1817 = vmatprep.subr.mxu0 0.0
        %1818 = vmatpush1.xpose.msra.mxu0 0.0
        %1819 = vmatprep.subr.mxu0 0.0
        %1820 = vmatpush1.xpose.msra.mxu0 0.0
        %1821 = vmatprep.subr.mxu0 0.0
        %1822 = vmatpush1.xpose.msra.mxu0 0.0
        %1823 = vmatprep.subr.mxu0 0.0
        %1824 = vmatpush1.xpose.msra.mxu0 0.0
        %1825 = vmatprep.subr.mxu0 0.0
        %1826 = vmatpush1.xpose.msra.mxu0 0.0
        %1827 = vmatprep.subr.mxu0 0.0
        %1828 = vmatpush1.xpose.msra.mxu0 0.0
        %1829 = vmatprep.subr.mxu0 0.0
        %1830 = vmatpush1.xpose.msra.mxu0 0.0
        %1831 = vmatprep.subr.mxu0 0.0
        %1832 = vmatpush1.xpose.msra.mxu0 0.0
        %1833 = vmatprep.subr.mxu0 0.0
        %1834 = vmatpush1.xpose.msra.mxu0 0.0
        %1835 = vmatprep.subr.mxu0 0.0
        %1836 = vmatpush1.xpose.msra.mxu0 0.0
        %1837 = vmatprep.subr.mxu0 0.0
        %1838 = vmatpush1.xpose.msra.mxu0 0.0
        %1839 = vmatprep.subr.mxu0 0.0
        %1840 = vmatpush1.xpose.msra.mxu0 0.0
        %1841 = vmatprep.subr.mxu0 0.0
        %1842 = vmatpush1.xpose.msra.mxu0 0.0
        %1843 = vmatprep.subr.mxu0 0.0
        %1844 = vmatpush1.xpose.msra.mxu0 0.0
        %1845 = vmatprep.subr.mxu0 0.0
        %1846 = vmatpush1.xpose.msra.mxu0 0.0
        %1847 = vmatprep.subr.mxu0 0.0
        %1848 = vmatpush1.xpose.msra.mxu0 0.0
        %1849 = vmatprep.mubr.f32.mxu0 0.0
        %1850 = vmatmul.mubr.f32.gmra.mrb[0].mxu0 %v1781
        %v1851 = vpop.f32.mrb[0].mxu0
        %v1852 = vadd.f32 0.0, %v1851
        %v1853 = vpop.f32.mrb[0].mxu0
        %1854 = vdwg.mxu0
        %v1855 = vsel %vm1018, %v1852, -inf
        %1856 = vmax.xlane.f32.xlu0 %v1855
        %v1857 = vpop.xlane.xlu0 %1856
        %v1858 = vsub.f32 %v1852, %v1857
        %v1859 = vmul.f32 %v1858, 1.442695
        %v1860 = vpow.pop %v1859
        %v1861 = vsel %vm1018, %v1860, 0.0
        %1862 = vadd.xlane.f32.xlu0 %v1861
        %v1863 = vpop.xlane.xlu0 %1862
        %v1864 = vrcp.pop %v1863
        %v1865 = vmul.f32 %v1860, %v1864
        %1867 = vrot.lane.b32.xlu0 %v937, 96
        %v1868 = vpop.permute.xlu0 %1867
        %v1871 = vsel %vm1018, %v1865, 0
        %1873 = vmatprep.subr.mxu0 0.0
        %1874 = vmatpush1.msra.mxu0 %v1868
        %1875 = vmatprep.subr.mxu0 0.0
        %1876 = vmatpush1.msra.mxu0 0.0
        %1877 = vmatprep.subr.mxu0 0.0
        %1878 = vmatpush1.msra.mxu0 0.0
        %1879 = vmatprep.subr.mxu0 0.0
        %1880 = vmatpush1.msra.mxu0 0.0
        %1881 = vmatprep.subr.mxu0 0.0
        %1882 = vmatpush1.msra.mxu0 0.0
        %1883 = vmatprep.subr.mxu0 0.0
        %1884 = vmatpush1.msra.mxu0 0.0
        %1885 = vmatprep.subr.mxu0 0.0
        %1886 = vmatpush1.msra.mxu0 0.0
        %1887 = vmatprep.subr.mxu0 0.0
        %1888 = vmatpush1.msra.mxu0 0.0
        %1889 = vmatprep.subr.mxu0 0.0
        %1890 = vmatpush1.msra.mxu0 0.0
        %1891 = vmatprep.subr.mxu0 0.0
        %1892 = vmatpush1.msra.mxu0 0.0
        %1893 = vmatprep.subr.mxu0 0.0
        %1894 = vmatpush1.msra.mxu0 0.0
        %1895 = vmatprep.subr.mxu0 0.0
        %1896 = vmatpush1.msra.mxu0 0.0
        %1897 = vmatprep.subr.mxu0 0.0
        %1898 = vmatpush1.msra.mxu0 0.0
        %1899 = vmatprep.subr.mxu0 0.0
        %1900 = vmatpush1.msra.mxu0 0.0
        %1901 = vmatprep.subr.mxu0 0.0
        %1902 = vmatpush1.msra.mxu0 0.0
        %1903 = vmatprep.subr.mxu0 0.0
        %1904 = vmatpush1.msra.mxu0 0.0
        %1905 = vmatprep.subr.mxu0 0.0
        %1906 = vmatpush1.msra.mxu0 0.0
        %1907 = vmatprep.subr.mxu0 0.0
        %1908 = vmatpush1.msra.mxu0 0.0
        %1909 = vmatprep.subr.mxu0 0.0
        %1910 = vmatpush1.msra.mxu0 0.0
        %1911 = vmatprep.subr.mxu0 0.0
        %1912 = vmatpush1.msra.mxu0 0.0
        %1913 = vmatprep.subr.mxu0 0.0
        %1914 = vmatpush1.msra.mxu0 0.0
        %1915 = vmatprep.subr.mxu0 0.0
        %1916 = vmatpush1.msra.mxu0 0.0
        %1917 = vmatprep.subr.mxu0 0.0
        %1918 = vmatpush1.msra.mxu0 0.0
        %1919 = vmatprep.subr.mxu0 0.0
        %1920 = vmatpush1.msra.mxu0 0.0
        %1921 = vmatprep.subr.mxu0 0.0
        %1922 = vmatpush1.msra.mxu0 0.0
        %1923 = vmatprep.subr.mxu0 0.0
        %1924 = vmatpush1.msra.mxu0 0.0
        %1925 = vmatprep.subr.mxu0 0.0
        %1926 = vmatpush1.msra.mxu0 0.0
        %1927 = vmatprep.subr.mxu0 0.0
        %1928 = vmatpush1.msra.mxu0 0.0
        %1929 = vmatprep.subr.mxu0 0.0
        %1930 = vmatpush1.msra.mxu0 0.0
        %1931 = vmatprep.subr.mxu0 0.0
        %1932 = vmatpush1.msra.mxu0 0.0
        %1933 = vmatprep.subr.mxu0 0.0
        %1934 = vmatpush1.msra.mxu0 0.0
        %1935 = vmatprep.subr.mxu0 0.0
        %1936 = vmatpush1.msra.mxu0 0.0
        %1937 = vmatprep.mubr.f32.mxu0 0.0
        %1938 = vmatmul.mubr.f32.gmra.mrb[0].mxu0 %v1871
        %v1939 = vpop.f32.mrb[0].mxu0
        %v1940 = vadd.f32 0.0, %v1939
        %v1941 = vpop.f32.mrb[0].mxu0
        %1942 = vdwg.mxu0
        %1943 = vrot.lane.b32.xlu0 %v1616, 64
        %v1944 = vpop.permute.xlu0 %1943
        %1945 = vrot.lane.b32.xlu0 %v863, 64
        %v1946 = vpop.permute.xlu0 %1945
        %v1947 = vsel %vm941, %v1944, 0
        %v1949 = vsel %vm941, %v1946, 0
        %1951 = vmatprep.subr.mxu0 0.0
        %1952 = vmatpush1.xpose.msra.mxu0 %v1949
        %1953 = vmatprep.subr.mxu0 0.0
        %1954 = vmatpush1.xpose.msra.mxu0 0.0
        %1955 = vmatprep.subr.mxu0 0.0
        %1956 = vmatpush1.xpose.msra.mxu0 0.0
        %1957 = vmatprep.subr.mxu0 0.0
        %1958 = vmatpush1.xpose.msra.mxu0 0.0
        %1959 = vmatprep.subr.mxu0 0.0
        %1960 = vmatpush1.xpose.msra.mxu0 0.0
        %1961 = vmatprep.subr.mxu0 0.0
        %1962 = vmatpush1.xpose.msra.mxu0 0.0
        %1963 = vmatprep.subr.mxu0 0.0
        %1964 = vmatpush1.xpose.msra.mxu0 0.0
        %1965 = vmatprep.subr.mxu0 0.0
        %1966 = vmatpush1.xpose.msra.mxu0 0.0
        %1967 = vmatprep.subr.mxu0 0.0
        %1968 = vmatpush1.xpose.msra.mxu0 0.0
        %1969 = vmatprep.subr.mxu0 0.0
        %1970 = vmatpush1.xpose.msra.mxu0 0.0
        %1971 = vmatprep.subr.mxu0 0.0
        %1972 = vmatpush1.xpose.msra.mxu0 0.0
        %1973 = vmatprep.subr.mxu0 0.0
        %1974 = vmatpush1.xpose.msra.mxu0 0.0
        %1975 = vmatprep.subr.mxu0 0.0
        %1976 = vmatpush1.xpose.msra.mxu0 0.0
        %1977 = vmatprep.subr.mxu0 0.0
        %1978 = vmatpush1.xpose.msra.mxu0 0.0
        %1979 = vmatprep.subr.mxu0 0.0
        %1980 = vmatpush1.xpose.msra.mxu0 0.0
        %1981 = vmatprep.subr.mxu0 0.0
        %1982 = vmatpush1.xpose.msra.mxu0 0.0
        %1983 = vmatprep.subr.mxu0 0.0
        %1984 = vmatpush1.xpose.msra.mxu0 0.0
        %1985 = vmatprep.subr.mxu0 0.0
        %1986 = vmatpush1.xpose.msra.mxu0 0.0
        %1987 = vmatprep.subr.mxu0 0.0
        %1988 = vmatpush1.xpose.msra.mxu0 0.0
        %1989 = vmatprep.subr.mxu0 0.0
        %1990 = vmatpush1.xpose.msra.mxu0 0.0
        %1991 = vmatprep.subr.mxu0 0.0
        %1992 = vmatpush1.xpose.msra.mxu0 0.0
        %1993 = vmatprep.subr.mxu0 0.0
        %1994 = vmatpush1.xpose.msra.mxu0 0.0
        %1995 = vmatprep.subr.mxu0 0.0
        %1996 = vmatpush1.xpose.msra.mxu0 0.0
        %1997 = vmatprep.subr.mxu0 0.0
        %1998 = vmatpush1.xpose.msra.mxu0 0.0
        %1999 = vmatprep.subr.mxu0 0.0
        %2000 = vmatpush1.xpose.msra.mxu0 0.0
        %2001 = vmatprep.subr.mxu0 0.0
        %2002 = vmatpush1.xpose.msra.mxu0 0.0
        %2003 = vmatprep.subr.mxu0 0.0
        %2004 = vmatpush1.xpose.msra.mxu0 0.0
        %2005 = vmatprep.subr.mxu0 0.0
        %2006 = vmatpush1.xpose.msra.mxu0 0.0
        %2007 = vmatprep.subr.mxu0 0.0
        %2008 = vmatpush1.xpose.msra.mxu0 0.0
        %2009 = vmatprep.subr.mxu0 0.0
        %2010 = vmatpush1.xpose.msra.mxu0 0.0
        %2011 = vmatprep.subr.mxu0 0.0
        %2012 = vmatpush1.xpose.msra.mxu0 0.0
        %2013 = vmatprep.subr.mxu0 0.0
        %2014 = vmatpush1.xpose.msra.mxu0 0.0
        %2015 = vmatprep.mubr.f32.mxu0 0.0
        %2016 = vmatmul.mubr.f32.gmra.mrb[0].mxu0 %v1947
        %v2017 = vpop.f32.mrb[0].mxu0
        %v2018 = vadd.f32 0.0, %v2017
        %v2019 = vpop.f32.mrb[0].mxu0
        %2020 = vdwg.mxu0
        %v2021 = vsel %vm1018, %v2018, -inf
        %2022 = vmax.xlane.f32.xlu0 %v2021
        %v2023 = vpop.xlane.xlu0 %2022
        %v2024 = vsub.f32 %v2018, %v2023
        %v2025 = vmul.f32 %v2024, 1.442695
        %v2026 = vpow.pop %v2025
        %v2027 = vsel %vm1018, %v2026, 0.0
        %2028 = vadd.xlane.f32.xlu0 %v2027
        %v2029 = vpop.xlane.xlu0 %2028
        %v2030 = vrcp.pop %v2029
        %v2031 = vmul.f32 %v2026, %v2030
        %2032 = vrot.lane.b32.xlu0 %v937, 64
        %v2033 = vpop.permute.xlu0 %2032
        %v2036 = vsel %vm1018, %v2031, 0
        %2038 = vmatprep.subr.mxu0 0.0
        %2039 = vmatpush1.msra.mxu0 %v2033
        %2040 = vmatprep.subr.mxu0 0.0
        %2041 = vmatpush1.msra.mxu0 0.0
        %2042 = vmatprep.subr.mxu0 0.0
        %2043 = vmatpush1.msra.mxu0 0.0
        %2044 = vmatprep.subr.mxu0 0.0
        %2045 = vmatpush1.msra.mxu0 0.0
        %2046 = vmatprep.subr.mxu0 0.0
        %2047 = vmatpush1.msra.mxu0 0.0
        %2048 = vmatprep.subr.mxu0 0.0
        %2049 = vmatpush1.msra.mxu0 0.0
        %2050 = vmatprep.subr.mxu0 0.0
        %2051 = vmatpush1.msra.mxu0 0.0
        %2052 = vmatprep.subr.mxu0 0.0
        %2053 = vmatpush1.msra.mxu0 0.0
        %2054 = vmatprep.subr.mxu0 0.0
        %2055 = vmatpush1.msra.mxu0 0.0
        %2056 = vmatprep.subr.mxu0 0.0
        %2057 = vmatpush1.msra.mxu0 0.0
        %2058 = vmatprep.subr.mxu0 0.0
        %2059 = vmatpush1.msra.mxu0 0.0
        %2060 = vmatprep.subr.mxu0 0.0
        %2061 = vmatpush1.msra.mxu0 0.0
        %2062 = vmatprep.subr.mxu0 0.0
        %2063 = vmatpush1.msra.mxu0 0.0
        %2064 = vmatprep.subr.mxu0 0.0
        %2065 = vmatpush1.msra.mxu0 0.0
        %2066 = vmatprep.subr.mxu0 0.0
        %2067 = vmatpush1.msra.mxu0 0.0
        %2068 = vmatprep.subr.mxu0 0.0
        %2069 = vmatpush1.msra.mxu0 0.0
        %2070 = vmatprep.subr.mxu0 0.0
        %2071 = vmatpush1.msra.mxu0 0.0
        %2072 = vmatprep.subr.mxu0 0.0
        %2073 = vmatpush1.msra.mxu0 0.0
        %2074 = vmatprep.subr.mxu0 0.0
        %2075 = vmatpush1.msra.mxu0 0.0
        %2076 = vmatprep.subr.mxu0 0.0
        %2077 = vmatpush1.msra.mxu0 0.0
        %2078 = vmatprep.subr.mxu0 0.0
        %2079 = vmatpush1.msra.mxu0 0.0
        %2080 = vmatprep.subr.mxu0 0.0
        %2081 = vmatpush1.msra.mxu0 0.0
        %2082 = vmatprep.subr.mxu0 0.0
        %2083 = vmatpush1.msra.mxu0 0.0
        %2084 = vmatprep.subr.mxu0 0.0
        %2085 = vmatpush1.msra.mxu0 0.0
        %2086 = vmatprep.subr.mxu0 0.0
        %2087 = vmatpush1.msra.mxu0 0.0
        %2088 = vmatprep.subr.mxu0 0.0
        %2089 = vmatpush1.msra.mxu0 0.0
        %2090 = vmatprep.subr.mxu0 0.0
        %2091 = vmatpush1.msra.mxu0 0.0
        %2092 = vmatprep.subr.mxu0 0.0
        %2093 = vmatpush1.msra.mxu0 0.0
        %2094 = vmatprep.subr.mxu0 0.0
        %2095 = vmatpush1.msra.mxu0 0.0
        %2096 = vmatprep.subr.mxu0 0.0
        %2097 = vmatpush1.msra.mxu0 0.0
        %2098 = vmatprep.subr.mxu0 0.0
        %2099 = vmatpush1.msra.mxu0 0.0
        %2100 = vmatprep.subr.mxu0 0.0
        %2101 = vmatpush1.msra.mxu0 0.0
        %2102 = vmatprep.mubr.f32.mxu0 0.0
        %2103 = vmatmul.mubr.f32.gmra.mrb[0].mxu0 %v2036
        %v2104 = vpop.f32.mrb[0].mxu0
        %v2105 = vadd.f32 0.0, %v2104
        %v2106 = vpop.f32.mrb[0].mxu0
        %2107 = vdwg.mxu0
        %2108 = vrot.lane.b32.xlu0 %v1616, 32
        %v2109 = vpop.permute.xlu0 %2108
        %2110 = vrot.lane.b32.xlu0 %v863, 32
        %v2111 = vpop.permute.xlu0 %2110
        %v2112 = vsel %vm941, %v2109, 0
        %v2114 = vsel %vm941, %v2111, 0
        %2116 = vmatprep.subr.mxu0 0.0
        %2117 = vmatpush1.xpose.msra.mxu0 %v2114
        %2118 = vmatprep.subr.mxu0 0.0
        %2119 = vmatpush1.xpose.msra.mxu0 0.0
        %2120 = vmatprep.subr.mxu0 0.0
        %2121 = vmatpush1.xpose.msra.mxu0 0.0
        %2122 = vmatprep.subr.mxu0 0.0
        %2123 = vmatpush1.xpose.msra.mxu0 0.0
        %2124 = vmatprep.subr.mxu0 0.0
        %2125 = vmatpush1.xpose.msra.mxu0 0.0
        %2126 = vmatprep.subr.mxu0 0.0
        %2127 = vmatpush1.xpose.msra.mxu0 0.0
        %2128 = vmatprep.subr.mxu0 0.0
        %2129 = vmatpush1.xpose.msra.mxu0 0.0
        %2130 = vmatprep.subr.mxu0 0.0
        %2131 = vmatpush1.xpose.msra.mxu0 0.0
        %2132 = vmatprep.subr.mxu0 0.0
        %2133 = vmatpush1.xpose.msra.mxu0 0.0
        %2134 = vmatprep.subr.mxu0 0.0
        %2135 = vmatpush1.xpose.msra.mxu0 0.0
        %2136 = vmatprep.subr.mxu0 0.0
        %2137 = vmatpush1.xpose.msra.mxu0 0.0
        %2138 = vmatprep.subr.mxu0 0.0
        %2139 = vmatpush1.xpose.msra.mxu0 0.0
        %2140 = vmatprep.subr.mxu0 0.0
        %2141 = vmatpush1.xpose.msra.mxu0 0.0
        %2142 = vmatprep.subr.mxu0 0.0
        %2143 = vmatpush1.xpose.msra.mxu0 0.0
        %2144 = vmatprep.subr.mxu0 0.0
        %2145 = vmatpush1.xpose.msra.mxu0 0.0
        %2146 = vmatprep.subr.mxu0 0.0
        %2147 = vmatpush1.xpose.msra.mxu0 0.0
        %2148 = vmatprep.subr.mxu0 0.0
        %2149 = vmatpush1.xpose.msra.mxu0 0.0
        %2150 = vmatprep.subr.mxu0 0.0
        %2151 = vmatpush1.xpose.msra.mxu0 0.0
        %2152 = vmatprep.subr.mxu0 0.0
        %2153 = vmatpush1.xpose.msra.mxu0 0.0
        %2154 = vmatprep.subr.mxu0 0.0
        %2155 = vmatpush1.xpose.msra.mxu0 0.0
        %2156 = vmatprep.subr.mxu0 0.0
        %2157 = vmatpush1.xpose.msra.mxu0 0.0
        %2158 = vmatprep.subr.mxu0 0.0
        %2159 = vmatpush1.xpose.msra.mxu0 0.0
        %2160 = vmatprep.subr.mxu0 0.0
        %2161 = vmatpush1.xpose.msra.mxu0 0.0
        %2162 = vmatprep.subr.mxu0 0.0
        %2163 = vmatpush1.xpose.msra.mxu0 0.0
        %2164 = vmatprep.subr.mxu0 0.0
        %2165 = vmatpush1.xpose.msra.mxu0 0.0
        %2166 = vmatprep.subr.mxu0 0.0
        %2167 = vmatpush1.xpose.msra.mxu0 0.0
        %2168 = vmatprep.subr.mxu0 0.0
        %2169 = vmatpush1.xpose.msra.mxu0 0.0
        %2170 = vmatprep.subr.mxu0 0.0
        %2171 = vmatpush1.xpose.msra.mxu0 0.0
        %2172 = vmatprep.subr.mxu0 0.0
        %2173 = vmatpush1.xpose.msra.mxu0 0.0
        %2174 = vmatprep.subr.mxu0 0.0
        %2175 = vmatpush1.xpose.msra.mxu0 0.0
        %2176 = vmatprep.subr.mxu0 0.0
        %2177 = vmatpush1.xpose.msra.mxu0 0.0
        %2178 = vmatprep.subr.mxu0 0.0
        %2179 = vmatpush1.xpose.msra.mxu0 0.0
        %2180 = vmatprep.mubr.f32.mxu0 0.0
        %2181 = vmatmul.mubr.f32.gmra.mrb[0].mxu0 %v2112
        %v2182 = vpop.f32.mrb[0].mxu0
        %v2183 = vadd.f32 0.0, %v2182
        %v2184 = vpop.f32.mrb[0].mxu0
        %2185 = vdwg.mxu0
        %v2186 = vsel %vm1018, %v2183, -inf
        %2187 = vmax.xlane.f32.xlu0 %v2186
        %v2188 = vpop.xlane.xlu0 %2187
        %v2189 = vsub.f32 %v2183, %v2188
        %v2190 = vmul.f32 %v2189, 1.442695
        %v2191 = vpow.pop %v2190
        %v2192 = vsel %vm1018, %v2191, 0.0
        %2193 = vadd.xlane.f32.xlu0 %v2192
        %v2194 = vpop.xlane.xlu0 %2193
        %v2195 = vrcp.pop %v2194
        %v2196 = vmul.f32 %v2191, %v2195
        %2197 = vrot.lane.b32.xlu0 %v937, 32
        %v2198 = vpop.permute.xlu0 %2197
        %v2201 = vsel %vm1018, %v2196, 0
        %2203 = vmatprep.subr.mxu0 0.0
        %2204 = vmatpush1.msra.mxu0 %v2198
        %2205 = vmatprep.subr.mxu0 0.0
        %2206 = vmatpush1.msra.mxu0 0.0
        %2207 = vmatprep.subr.mxu0 0.0
        %2208 = vmatpush1.msra.mxu0 0.0
        %2209 = vmatprep.subr.mxu0 0.0
        %2210 = vmatpush1.msra.mxu0 0.0
        %2211 = vmatprep.subr.mxu0 0.0
        %2212 = vmatpush1.msra.mxu0 0.0
        %2213 = vmatprep.subr.mxu0 0.0
        %2214 = vmatpush1.msra.mxu0 0.0
        %2215 = vmatprep.subr.mxu0 0.0
        %2216 = vmatpush1.msra.mxu0 0.0
        %2217 = vmatprep.subr.mxu0 0.0
        %2218 = vmatpush1.msra.mxu0 0.0
        %2219 = vmatprep.subr.mxu0 0.0
        %2220 = vmatpush1.msra.mxu0 0.0
        %2221 = vmatprep.subr.mxu0 0.0
        %2222 = vmatpush1.msra.mxu0 0.0
        %2223 = vmatprep.subr.mxu0 0.0
        %2224 = vmatpush1.msra.mxu0 0.0
        %2225 = vmatprep.subr.mxu0 0.0
        %2226 = vmatpush1.msra.mxu0 0.0
        %2227 = vmatprep.subr.mxu0 0.0
        %2228 = vmatpush1.msra.mxu0 0.0
        %2229 = vmatprep.subr.mxu0 0.0
        %2230 = vmatpush1.msra.mxu0 0.0
        %2231 = vmatprep.subr.mxu0 0.0
        %2232 = vmatpush1.msra.mxu0 0.0
        %2233 = vmatprep.subr.mxu0 0.0
        %2234 = vmatpush1.msra.mxu0 0.0
        %2235 = vmatprep.subr.mxu0 0.0
        %2236 = vmatpush1.msra.mxu0 0.0
        %2237 = vmatprep.subr.mxu0 0.0
        %2238 = vmatpush1.msra.mxu0 0.0
        %2239 = vmatprep.subr.mxu0 0.0
        %2240 = vmatpush1.msra.mxu0 0.0
        %2241 = vmatprep.subr.mxu0 0.0
        %2242 = vmatpush1.msra.mxu0 0.0
        %2243 = vmatprep.subr.mxu0 0.0
        %2244 = vmatpush1.msra.mxu0 0.0
        %2245 = vmatprep.subr.mxu0 0.0
        %2246 = vmatpush1.msra.mxu0 0.0
        %2247 = vmatprep.subr.mxu0 0.0
        %2248 = vmatpush1.msra.mxu0 0.0
        %2249 = vmatprep.subr.mxu0 0.0
        %2250 = vmatpush1.msra.mxu0 0.0
        %2251 = vmatprep.subr.mxu0 0.0
        %2252 = vmatpush1.msra.mxu0 0.0
        %2253 = vmatprep.subr.mxu0 0.0
        %2254 = vmatpush1.msra.mxu0 0.0
        %2255 = vmatprep.subr.mxu0 0.0
        %2256 = vmatpush1.msra.mxu0 0.0
        %2257 = vmatprep.subr.mxu0 0.0
        %2258 = vmatpush1.msra.mxu0 0.0
        %2259 = vmatprep.subr.mxu0 0.0
        %2260 = vmatpush1.msra.mxu0 0.0
        %2261 = vmatprep.subr.mxu0 0.0
        %2262 = vmatpush1.msra.mxu0 0.0
        %2263 = vmatprep.subr.mxu0 0.0
        %2264 = vmatpush1.msra.mxu0 0.0
        %2265 = vmatprep.subr.mxu0 0.0
        %2266 = vmatpush1.msra.mxu0 0.0
        %2267 = vmatprep.mubr.f32.mxu0 0.0
        %2268 = vmatmul.mubr.f32.gmra.mrb[0].mxu0 %v2201
        %v2269 = vpop.f32.mrb[0].mxu0
        %v2270 = vadd.f32 0.0, %v2269
        %v2271 = vpop.f32.mrb[0].mxu0
        %2272 = vdwg.mxu0
        %2274 = vrot.lane.b32.xlu0 %v1940, 32
        %v2275 = vpop.permute.xlu0 %2274
        %2278 = vrot.lane.b32.xlu0 %v2105, 64
        %v2279 = vpop.permute.xlu0 %2278
        %2282 = vrot.lane.b32.xlu0 %v2270, 96
        %v2283 = vpop.permute.xlu0 %2282
        %v2285 = vsel %vm941, %v1774, %v2275
        %v2286 = vsel %vm1612, %v2285, %v2279
        %v2287 = vsel %vm1614, %v2286, %v2283
        %v2288 = vld [vmem:[%s583] sm:$0xff]
        %v2289 = vld [vmem:[%s583 + $0x8] sm:$0xff]
        %v2290 = vld [vmem:[%s583 + $0x10] sm:$0xff]
        %v2291 = vld [vmem:[%s583 + $0x18] sm:$0xff]
        %v2292 = vld [vmem:[%s583 + $0x20] sm:$0xff]
        %v2293 = vld [vmem:[%s583 + $0x28] sm:$0xff]
        %v2294 = vld [vmem:[%s583 + $0x30] sm:$0xff]
        %v2295 = vld [vmem:[%s583 + $0x38] sm:$0xff]
        %v2296 = vld [vmem:[%s583 + $0x40] sm:$0xff]
        %v2297 = vld [vmem:[%s583 + $0x48] sm:$0xff]
        %v2298 = vld [vmem:[%s583 + $0x50] sm:$0xff]
        %v2299 = vld [vmem:[%s583 + $0x58] sm:$0xff]
        %v2300 = vld [vmem:[%s583 + $0x60] sm:$0xff]
        %v2301 = vld [vmem:[%s583 + $0x68] sm:$0xff]
        %v2302 = vld [vmem:[%s583 + $0x70] sm:$0xff]
        %v2303 = vld [vmem:[%s583 + $0x78] sm:$0xff]
        %v2304 = vld [vmem:[%s688] sm:$0x1]
        %v2306 = vlaneseq
        %v2307 = vshrl.u32 %v2306, 7
        %v2308 = vsub.s32 0, %v2307
        %v2309 = vrot.slane %v2304, %v2308
        %2311 = vmatprep.subr.mxu0 0.0
        %2312 = vmatpush1.msra.mxu0 %v2288
        %2313 = vmatprep.subr.mxu0 0.0
        %2314 = vmatpush1.msra.mxu0 %v2289
        %2315 = vmatprep.subr.mxu0 0.0
        %2316 = vmatpush1.msra.mxu0 %v2290
        %2317 = vmatprep.subr.mxu0 0.0
        %2318 = vmatpush1.msra.mxu0 %v2291
        %2319 = vmatprep.subr.mxu0 0.0
        %2320 = vmatpush1.msra.mxu0 %v2292
        %2321 = vmatprep.subr.mxu0 0.0
        %2322 = vmatpush1.msra.mxu0 %v2293
        %2323 = vmatprep.subr.mxu0 0.0
        %2324 = vmatpush1.msra.mxu0 %v2294
        %2325 = vmatprep.subr.mxu0 0.0
        %2326 = vmatpush1.msra.mxu0 %v2295
        %2327 = vmatprep.subr.mxu0 0.0
        %2328 = vmatpush1.msra.mxu0 %v2296
        %2329 = vmatprep.subr.mxu0 0.0
        %2330 = vmatpush1.msra.mxu0 %v2297
        %2331 = vmatprep.subr.mxu0 0.0
        %2332 = vmatpush1.msra.mxu0 %v2298
        %2333 = vmatprep.subr.mxu0 0.0
        %2334 = vmatpush1.msra.mxu0 %v2299
        %2335 = vmatprep.subr.mxu0 0.0
        %2336 = vmatpush1.msra.mxu0 %v2300
        %2337 = vmatprep.subr.mxu0 0.0
        %2338 = vmatpush1.msra.mxu0 %v2301
        %2339 = vmatprep.subr.mxu0 0.0
        %2340 = vmatpush1.msra.mxu0 %v2302
        %2341 = vmatprep.subr.mxu0 0.0
        %2342 = vmatpush1.msra.mxu0 %v2303
        %2343 = vmatprep.subr.mxu0 0.0
        %2344 = vmatpush1.msra.mxu0 0.0
        %2345 = vmatprep.subr.mxu0 0.0
        %2346 = vmatpush1.msra.mxu0 0.0
        %2347 = vmatprep.subr.mxu0 0.0
        %2348 = vmatpush1.msra.mxu0 0.0
        %2349 = vmatprep.subr.mxu0 0.0
        %2350 = vmatpush1.msra.mxu0 0.0
        %2351 = vmatprep.subr.mxu0 0.0
        %2352 = vmatpush1.msra.mxu0 0.0
        %2353 = vmatprep.subr.mxu0 0.0
        %2354 = vmatpush1.msra.mxu0 0.0
        %2355 = vmatprep.subr.mxu0 0.0
        %2356 = vmatpush1.msra.mxu0 0.0
        %2357 = vmatprep.subr.mxu0 0.0
        %2358 = vmatpush1.msra.mxu0 0.0
        %2359 = vmatprep.subr.mxu0 0.0
        %2360 = vmatpush1.msra.mxu0 0.0
        %2361 = vmatprep.subr.mxu0 0.0
        %2362 = vmatpush1.msra.mxu0 0.0
        %2363 = vmatprep.subr.mxu0 0.0
        %2364 = vmatpush1.msra.mxu0 0.0
        %2365 = vmatprep.subr.mxu0 0.0
        %2366 = vmatpush1.msra.mxu0 0.0
        %2367 = vmatprep.subr.mxu0 0.0
        %2368 = vmatpush1.msra.mxu0 0.0
        %2369 = vmatprep.subr.mxu0 0.0
        %2370 = vmatpush1.msra.mxu0 0.0
        %2371 = vmatprep.subr.mxu0 0.0
        %2372 = vmatpush1.msra.mxu0 0.0
        %2373 = vmatprep.subr.mxu0 0.0
        %2374 = vmatpush1.msra.mxu0 0.0
        %2375 = vmatprep.mubr.f32.mxu0 0.0
        %2376 = vmatmul.mubr.f32.gmra.mrb[0].mxu0 %v1615
        %v2377 = vpop.f32.mrb[0].mxu0
        %v2378 = vadd.f32 %v2309, %v2377
        %v2379 = vpop.f32.mrb[0].mxu0
        %2380 = vmatprep.mubr.f32.mxu0 0.0
        %2381 = vmatmul.mubr.f32.gmra.mrb[0].mxu0 %v2287
        %v2382 = vpop.f32.mrb[0].mxu0
        %v2383 = vadd.f32 %v2309, %v2382
        %v2384 = vpop.f32.mrb[0].mxu0
        %2385 = vdwg.mxu0
        %v2386 = vadd.f32 %v721, %v2378
        %v2387 = vadd.f32 %v722, %v2383
        %v2388 = vld [vmem:[%s691] sm:$0x1]
        %v2389 = vld [vmem:[%s694] sm:$0x1]
        %2390 = vadd.xlane.f32.xlu0 %v2386
        %v2391 = vpop.xlane.xlu0 %2390
        %2392 = vadd.xlane.f32.xlu0 %v2387
        %v2393 = vpop.xlane.xlu0 %2392
        %v2394 = vrcp.pop 128.0
        %v2395 = vmul.f32 %v2391, %v2394
        %v2396 = vmul.f32 %v2393, %v2394
        %v2397 = vsub.f32 %v2386, %v2395
        %v2398 = vsub.f32 %v2387, %v2396
        %v2399 = vmul.f32 %v2397, %v2397
        %v2400 = vmul.f32 %v2398, %v2398
        %2401 = vadd.xlane.f32.xlu0 %v2399
        %v2402 = vpop.xlane.xlu0 %2401
        %2403 = vadd.xlane.f32.xlu0 %v2400
        %v2404 = vpop.xlane.xlu0 %2403
        %v2405 = vmul.f32 %v2402, %v2394
        %v2406 = vmul.f32 %v2404, %v2394
        %v2407 = vadd.f32 %v2405, 1e-05
        %v2408 = vadd.f32 %v2406, 1e-05
        %v2409 = vrsqrt.pop %v2407
        %v2410 = vrsqrt.pop %v2408
        %v2411 = vmul.f32 %v2397, %v2409
        %v2412 = vmul.f32 %v2398, %v2410
        %v2414 = vlaneseq
        %v2415 = vshrl.u32 %v2414, 7
        %v2416 = vsub.s32 0, %v2415
        %v2417 = vrot.slane %v2388, %v2416
        %v2419 = vmul.f32 %v2411, %v2417
        %v2420 = vmul.f32 %v2412, %v2417
        %v2422 = vlaneseq
        %v2423 = vshrl.u32 %v2422, 7
        %v2424 = vsub.s32 0, %v2423
        %v2425 = vrot.slane %v2389, %v2424
        %v2427 = vadd.f32 %v2419, %v2425
        %v2428 = vadd.f32 %v2420, %v2425
        %v2429 = vld [vmem:[%s592] sm:$0xff]
        %v2430 = vld [vmem:[%s592 + $0x8] sm:$0xff]
        %v2431 = vld [vmem:[%s592 + $0x10] sm:$0xff]
        %v2432 = vld [vmem:[%s592 + $0x18] sm:$0xff]
        %v2433 = vld [vmem:[%s592 + $0x20] sm:$0xff]
        %v2434 = vld [vmem:[%s592 + $0x28] sm:$0xff]
        %v2435 = vld [vmem:[%s592 + $0x30] sm:$0xff]
        %v2436 = vld [vmem:[%s592 + $0x38] sm:$0xff]
        %v2437 = vld [vmem:[%s592 + $0x40] sm:$0xff]
        %v2438 = vld [vmem:[%s592 + $0x48] sm:$0xff]
        %v2439 = vld [vmem:[%s592 + $0x50] sm:$0xff]
        %v2440 = vld [vmem:[%s592 + $0x58] sm:$0xff]
        %v2441 = vld [vmem:[%s592 + $0x60] sm:$0xff]
        %v2442 = vld [vmem:[%s592 + $0x68] sm:$0xff]
        %v2443 = vld [vmem:[%s592 + $0x70] sm:$0xff]
        %v2444 = vld [vmem:[%s592 + $0x78] sm:$0xff]
        %v2445 = vld [vmem:[%s592 + $0x80] sm:$0xff]
        %v2446 = vld [vmem:[%s592 + $0x88] sm:$0xff]
        %v2447 = vld [vmem:[%s592 + $0x90] sm:$0xff]
        %v2448 = vld [vmem:[%s592 + $0x98] sm:$0xff]
        %v2449 = vld [vmem:[%s592 + $0xa0] sm:$0xff]
        %v2450 = vld [vmem:[%s592 + $0xa8] sm:$0xff]
        %v2451 = vld [vmem:[%s592 + $0xb0] sm:$0xff]
        %v2452 = vld [vmem:[%s592 + $0xb8] sm:$0xff]
        %v2453 = vld [vmem:[%s592 + $0xc0] sm:$0xff]
        %v2454 = vld [vmem:[%s592 + $0xc8] sm:$0xff]
        %v2455 = vld [vmem:[%s592 + $0xd0] sm:$0xff]
        %v2456 = vld [vmem:[%s592 + $0xd8] sm:$0xff]
        %v2457 = vld [vmem:[%s592 + $0xe0] sm:$0xff]
        %v2458 = vld [vmem:[%s592 + $0xe8] sm:$0xff]
        %v2459 = vld [vmem:[%s592 + $0xf0] sm:$0xff]
        %v2460 = vld [vmem:[%s592 + $0xf8] sm:$0xff]
        %v2461 = vld [vmem:[%s698] sm:$0x3]
        %v2463 = vlaneseq
        %v2464 = vshrl.u32 %v2463, 7
        %v2465 = vsub.s32 0, %v2464
        %v2466 = vrot.slane %v2461, %v2465
        %v2467 = vlaneseq
        %v2468 = vshrl.u32 %v2467, 7
        %v2469 = vsub.s32 1, %v2468
        %v2470 = vrot.slane %v2461, %v2469
        %2473 = vmatprep.subr.mxu0 %v2430
        %2474 = vmatpush1.msra.mxu0 %v2429
        %2475 = vmatprep.subr.mxu0 %v2432
        %2476 = vmatpush1.msra.mxu0 %v2431
        %2477 = vmatprep.subr.mxu0 %v2434
        %2478 = vmatpush1.msra.mxu0 %v2433
        %2479 = vmatprep.subr.mxu0 %v2436
        %2480 = vmatpush1.msra.mxu0 %v2435
        %2481 = vmatprep.subr.mxu0 %v2438
        %2482 = vmatpush1.msra.mxu0 %v2437
        %2483 = vmatprep.subr.mxu0 %v2440
        %2484 = vmatpush1.msra.mxu0 %v2439
        %2485 = vmatprep.subr.mxu0 %v2442
        %2486 = vmatpush1.msra.mxu0 %v2441
        %2487 = vmatprep.subr.mxu0 %v2444
        %2488 = vmatpush1.msra.mxu0 %v2443
        %2489 = vmatprep.subr.mxu0 %v2446
        %2490 = vmatpush1.msra.mxu0 %v2445
        %2491 = vmatprep.subr.mxu0 %v2448
        %2492 = vmatpush1.msra.mxu0 %v2447
        %2493 = vmatprep.subr.mxu0 %v2450
        %2494 = vmatpush1.msra.mxu0 %v2449
        %2495 = vmatprep.subr.mxu0 %v2452
        %2496 = vmatpush1.msra.mxu0 %v2451
        %2497 = vmatprep.subr.mxu0 %v2454
        %2498 = vmatpush1.msra.mxu0 %v2453
        %2499 = vmatprep.subr.mxu0 %v2456
        %2500 = vmatpush1.msra.mxu0 %v2455
        %2501 = vmatprep.subr.mxu0 %v2458
        %2502 = vmatpush1.msra.mxu0 %v2457
        %2503 = vmatprep.subr.mxu0 %v2460
        %2504 = vmatpush1.msra.mxu0 %v2459
        %2505 = vmatprep.subr.mxu0 0.0
        %2506 = vmatpush1.msra.mxu0 0.0
        %2507 = vmatprep.subr.mxu0 0.0
        %2508 = vmatpush1.msra.mxu0 0.0
        %2509 = vmatprep.subr.mxu0 0.0
        %2510 = vmatpush1.msra.mxu0 0.0
        %2511 = vmatprep.subr.mxu0 0.0
        %2512 = vmatpush1.msra.mxu0 0.0
        %2513 = vmatprep.subr.mxu0 0.0
        %2514 = vmatpush1.msra.mxu0 0.0
        %2515 = vmatprep.subr.mxu0 0.0
        %2516 = vmatpush1.msra.mxu0 0.0
        %2517 = vmatprep.subr.mxu0 0.0
        %2518 = vmatpush1.msra.mxu0 0.0
        %2519 = vmatprep.subr.mxu0 0.0
        %2520 = vmatpush1.msra.mxu0 0.0
        %2521 = vmatprep.subr.mxu0 0.0
        %2522 = vmatpush1.msra.mxu0 0.0
        %2523 = vmatprep.subr.mxu0 0.0
        %2524 = vmatpush1.msra.mxu0 0.0
        %2525 = vmatprep.subr.mxu0 0.0
        %2526 = vmatpush1.msra.mxu0 0.0
        %2527 = vmatprep.subr.mxu0 0.0
        %2528 = vmatpush1.msra.mxu0 0.0
        %2529 = vmatprep.subr.mxu0 0.0
        %2530 = vmatpush1.msra.mxu0 0.0
        %2531 = vmatprep.subr.mxu0 0.0
        %2532 = vmatpush1.msra.mxu0 0.0
        %2533 = vmatprep.subr.mxu0 0.0
        %2534 = vmatpush1.msra.mxu0 0.0
        %2535 = vmatprep.subr.mxu0 0.0
        %2536 = vmatpush1.msra.mxu0 0.0
        %2537 = vmatprep.mubr.f32.mxu0 0.0
        %2538 = vmatmul.mubr.f32.gmra.mrb[0].mxu0 %v2427
        %v2539 = vpop.f32.mrb[0].mxu0
        %v2540 = vadd.f32 %v2466, %v2539
        %v2541 = vpop.f32.mrb[0].mxu0
        %v2542 = vadd.f32 %v2470, %v2541
        %2543 = vmatprep.mubr.f32.mxu0 0.0
        %2544 = vmatmul.mubr.f32.gmra.mrb[0].mxu0 %v2428
        %v2545 = vpop.f32.mrb[0].mxu0
        %v2546 = vadd.f32 %v2466, %v2545
        %v2547 = vpop.f32.mrb[0].mxu0
        %v2548 = vadd.f32 %v2470, %v2547
        %2549 = vdwg.mxu0
        %v2550 = vmax.f32 %v2540, 0.0
        %v2551 = vmax.f32 %v2542, 0.0
        %v2552 = vmax.f32 %v2546, 0.0
        %v2553 = vmax.f32 %v2548, 0.0
        %v2554 = vld [vmem:[%s601] sm:$0xff]
        %v2555 = vld [vmem:[%s601 + $0x8] sm:$0xff]
        %v2556 = vld [vmem:[%s601 + $0x10] sm:$0xff]
        %v2557 = vld [vmem:[%s601 + $0x18] sm:$0xff]
        %v2558 = vld [vmem:[%s601 + $0x20] sm:$0xff]
        %v2559 = vld [vmem:[%s601 + $0x28] sm:$0xff]
        %v2560 = vld [vmem:[%s601 + $0x30] sm:$0xff]
        %v2561 = vld [vmem:[%s601 + $0x38] sm:$0xff]
        %v2562 = vld [vmem:[%s601 + $0x40] sm:$0xff]
        %v2563 = vld [vmem:[%s601 + $0x48] sm:$0xff]
        %v2564 = vld [vmem:[%s601 + $0x50] sm:$0xff]
        %v2565 = vld [vmem:[%s601 + $0x58] sm:$0xff]
        %v2566 = vld [vmem:[%s601 + $0x60] sm:$0xff]
        %v2567 = vld [vmem:[%s601 + $0x68] sm:$0xff]
        %v2568 = vld [vmem:[%s601 + $0x70] sm:$0xff]
        %v2569 = vld [vmem:[%s601 + $0x78] sm:$0xff]
        %v2570 = vld [vmem:[%s601 + $0x80] sm:$0xff]
        %v2571 = vld [vmem:[%s601 + $0x88] sm:$0xff]
        %v2572 = vld [vmem:[%s601 + $0x90] sm:$0xff]
        %v2573 = vld [vmem:[%s601 + $0x98] sm:$0xff]
        %v2574 = vld [vmem:[%s601 + $0xa0] sm:$0xff]
        %v2575 = vld [vmem:[%s601 + $0xa8] sm:$0xff]
        %v2576 = vld [vmem:[%s601 + $0xb0] sm:$0xff]
        %v2577 = vld [vmem:[%s601 + $0xb8] sm:$0xff]
        %v2578 = vld [vmem:[%s601 + $0xc0] sm:$0xff]
        %v2579 = vld [vmem:[%s601 + $0xc8] sm:$0xff]
        %v2580 = vld [vmem:[%s601 + $0xd0] sm:$0xff]
        %v2581 = vld [vmem:[%s601 + $0xd8] sm:$0xff]
        %v2582 = vld [vmem:[%s601 + $0xe0] sm:$0xff]
        %v2583 = vld [vmem:[%s601 + $0xe8] sm:$0xff]
        %v2584 = vld [vmem:[%s601 + $0xf0] sm:$0xff]
        %v2585 = vld [vmem:[%s601 + $0xf8] sm:$0xff]
        %v2586 = vld [vmem:[%s701] sm:$0x1]
        %v2588 = vlaneseq
        %v2589 = vshrl.u32 %v2588, 7
        %v2590 = vsub.s32 0, %v2589
        %v2591 = vrot.slane %v2586, %v2590
        %2593 = vmatprep.subr.mxu0 0.0
        %2594 = vmatpush1.msra.mxu0 %v2554
        %2595 = vmatprep.subr.mxu0 0.0
        %2596 = vmatpush1.msra.mxu0 %v2555
        %2597 = vmatprep.subr.mxu0 0.0
        %2598 = vmatpush1.msra.mxu0 %v2556
        %2599 = vmatprep.subr.mxu0 0.0
        %2600 = vmatpush1.msra.mxu0 %v2557
        %2601 = vmatprep.subr.mxu0 0.0
        %2602 = vmatpush1.msra.mxu0 %v2558
        %2603 = vmatprep.subr.mxu0 0.0
        %2604 = vmatpush1.msra.mxu0 %v2559
        %2605 = vmatprep.subr.mxu0 0.0
        %2606 = vmatpush1.msra.mxu0 %v2560
        %2607 = vmatprep.subr.mxu0 0.0
        %2608 = vmatpush1.msra.mxu0 %v2561
        %2609 = vmatprep.subr.mxu0 0.0
        %2610 = vmatpush1.msra.mxu0 %v2562
        %2611 = vmatprep.subr.mxu0 0.0
        %2612 = vmatpush1.msra.mxu0 %v2563
        %2613 = vmatprep.subr.mxu0 0.0
        %2614 = vmatpush1.msra.mxu0 %v2564
        %2615 = vmatprep.subr.mxu0 0.0
        %2616 = vmatpush1.msra.mxu0 %v2565
        %2617 = vmatprep.subr.mxu0 0.0
        %2618 = vmatpush1.msra.mxu0 %v2566
        %2619 = vmatprep.subr.mxu0 0.0
        %2620 = vmatpush1.msra.mxu0 %v2567
        %2621 = vmatprep.subr.mxu0 0.0
        %2622 = vmatpush1.msra.mxu0 %v2568
        %2623 = vmatprep.subr.mxu0 0.0
        %2624 = vmatpush1.msra.mxu0 %v2569
        %2625 = vmatprep.subr.mxu0 0.0
        %2626 = vmatpush1.msra.mxu0 %v2570
        %2627 = vmatprep.subr.mxu0 0.0
        %2628 = vmatpush1.msra.mxu0 %v2571
        %2629 = vmatprep.subr.mxu0 0.0
        %2630 = vmatpush1.msra.mxu0 %v2572
        %2631 = vmatprep.subr.mxu0 0.0
        %2632 = vmatpush1.msra.mxu0 %v2573
        %2633 = vmatprep.subr.mxu0 0.0
        %2634 = vmatpush1.msra.mxu0 %v2574
        %2635 = vmatprep.subr.mxu0 0.0
        %2636 = vmatpush1.msra.mxu0 %v2575
        %2637 = vmatprep.subr.mxu0 0.0
        %2638 = vmatpush1.msra.mxu0 %v2576
        %2639 = vmatprep.subr.mxu0 0.0
        %2640 = vmatpush1.msra.mxu0 %v2577
        %2641 = vmatprep.subr.mxu0 0.0
        %2642 = vmatpush1.msra.mxu0 %v2578
        %2643 = vmatprep.subr.mxu0 0.0
        %2644 = vmatpush1.msra.mxu0 %v2579
        %2645 = vmatprep.subr.mxu0 0.0
        %2646 = vmatpush1.msra.mxu0 %v2580
        %2647 = vmatprep.subr.mxu0 0.0
        %2648 = vmatpush1.msra.mxu0 %v2581
        %2649 = vmatprep.subr.mxu0 0.0
        %2650 = vmatpush1.msra.mxu0 %v2582
        %2651 = vmatprep.subr.mxu0 0.0
        %2652 = vmatpush1.msra.mxu0 %v2583
        %2653 = vmatprep.subr.mxu0 0.0
        %2654 = vmatpush1.msra.mxu0 %v2584
        %2655 = vmatprep.subr.mxu0 0.0
        %2656 = vmatpush1.msra.mxu0 %v2585
        %2657 = vmatprep.mubr.f32.mxu0 %v2551
        %2658 = vmatmul.mubr.f32.gmra.mrb[0].mxu0 %v2550
        %v2659 = vpop.f32.mrb[0].mxu0
        %v2660 = vadd.f32 %v2591, %v2659
        %v2661 = vpop.f32.mrb[0].mxu0
        %2662 = vmatprep.mubr.f32.mxu0 %v2553
        %2663 = vmatmul.mubr.f32.gmra.mrb[0].mxu0 %v2552
        %v2664 = vpop.f32.mrb[0].mxu0
        %v2665 = vadd.f32 %v2591, %v2664
        %v2666 = vpop.f32.mrb[0].mxu0
        %2667 = vdwg.mxu0
        %v2668 = vadd.f32 %v2427, %v2660
        %v2669 = vadd.f32 %v2428, %v2665
        %v2670 = vld [vmem:[%s704] sm:$0x1]
        %v2671 = vld [vmem:[%s707] sm:$0x1]
        %2672 = vadd.xlane.f32.xlu0 %v2668
        %v2673 = vpop.xlane.xlu0 %2672
        %2674 = vadd.xlane.f32.xlu0 %v2669
        %v2675 = vpop.xlane.xlu0 %2674
        %v2676 = vmul.f32 %v2673, %v2394
        %v2677 = vmul.f32 %v2675, %v2394
        %v2678 = vsub.f32 %v2668, %v2676
        %v2679 = vsub.f32 %v2669, %v2677
        %v2680 = vmul.f32 %v2678, %v2678
        %v2681 = vmul.f32 %v2679, %v2679
        %2682 = vadd.xlane.f32.xlu0 %v2680
        %v2683 = vpop.xlane.xlu0 %2682
        %2684 = vadd.xlane.f32.xlu0 %v2681
        %v2685 = vpop.xlane.xlu0 %2684
        %v2686 = vmul.f32 %v2683, %v2394
        %v2687 = vmul.f32 %v2685, %v2394
        %v2688 = vadd.f32 %v2686, 1e-05
        %v2689 = vadd.f32 %v2687, 1e-05
        %v2690 = vrsqrt.pop %v2688
        %v2691 = vrsqrt.pop %v2689
        %v2692 = vmul.f32 %v2678, %v2690
        %v2693 = vmul.f32 %v2679, %v2691
        %v2695 = vlaneseq
        %v2696 = vshrl.u32 %v2695, 7
        %v2697 = vsub.s32 0, %v2696
        %v2698 = vrot.slane %v2670, %v2697
        %v2700 = vmul.f32 %v2692, %v2698
        %v2701 = vmul.f32 %v2693, %v2698
        %v2703 = vlaneseq
        %v2704 = vshrl.u32 %v2703, 7
        %v2705 = vsub.s32 0, %v2704
        %v2706 = vrot.slane %v2671, %v2705
        %v2708 = vadd.f32 %v2700, %v2706
        %v2709 = vadd.f32 %v2701, %v2706
        %2710 = vst [vmem:[%s14] sm:$0xff] %v2708
        %2711 = vst [vmem:[%s14 + $0x8] sm:$0xff] %v2709
        // Predicated region
        $region97: #{trans_encoder_forward.1} parent=75 // pred_check
          %p2712 = pneg %p401
        $region98: #{trans_encoder_forward.1} parent=75 // pred_check_branch
          %2714 = sbr.rel (%p2712) target = $region100
        $region99: #{trans_encoder_forward.1} parent=75 // pred_region
          _
        $region100: #{trans_encoder_forward.1} parent=75 // pred_fallthru
          _
        // Predicated region
        $region101: #{trans_encoder_forward.1} parent=75 // pred_check
          %p2715 = pneg %p401
        $region102: #{trans_encoder_forward.1} parent=75 // pred_check_branch
          %2717 = sbr.rel (%p2715) target = $region104
        $region103: #{trans_encoder_forward.1} parent=75 // pred_region
          _
        $region104: #{trans_encoder_forward.1} parent=75 // pred_fallthru
          _
      $region76: #{trans_encoder_forward.1} parent=5 // pred_fallthru
        _
      %p2718 = scmp.le.s32.totalorder 2, %s29
      // Predicated region
      $region105: #{trans_encoder_forward.1} parent=5 // pred_check
        %p2719 = pneg %p2718
      $region106: #{trans_encoder_forward.1} parent=5 // pred_check_branch
        %2721 = sbr.rel (%p2719) target = $region108
      $region107: #{trans_encoder_forward.1} parent=5 // pred_region
        %s2722 = ssub.s32 %s29, 2
      $region108: #{trans_encoder_forward.1} parent=5 // pred_fallthru
        _
    $region6: #{trans_encoder_forward.1} parent=1 // loop_footer
      %s33 = sadd.s32 1, %s29
    $region7: #{trans_encoder_forward.1} parent=1 // loop_footer_branch
      %28 = sbr.rel target = $region3
    $region8: #{trans_encoder_forward.1} parent=1 // loop_exit
      _
    %2723 = vsyncpa [#allocation3], 1
    %s2724 = scalar_lea.sflag [#allocation3], 1
    %2725 = vsyncpa %s2724, 1
    %2726 = vsyncpa [#allocation5], 1
    %s2727 = scalar_lea.sflag [#allocation5], 1
    %2728 = vsyncpa %s2727, 1
    %2729 = vsyncpa [#allocation8], 1
    %s2730 = scalar_lea.sflag [#allocation8], 1
    %2731 = vsyncpa %s2730, 1

</llo_original>
